<compile_context>
chip_gen: v7x
topology: tpu7x:2x2x1
jax: 0.10.0
libtpu: 0.0.40
codegen_flags: <defaults>
</compile_context>

<pallas_src>
import functools

import numpy as np
import jax
import jax.numpy as jnp
from jax.experimental import pallas as pl
from jax.experimental.pallas import tpu as pltpu

LATENT_ACT = jnp.tanh  # get_act(args.latent_act); assumed 'tanh'


def _layer_shapes(latent_dim, num_hidden, num_layers):
    # (out_dim, in_dim) per Linear, in application order (PyTorch param order).
    return ([(num_hidden, latent_dim)]
            + [(num_hidden, num_hidden)] * (num_layers - 1)
            + [(latent_dim, num_hidden)])


def _param_count(shapes):
    return sum(o * i + o for (o, i) in shapes)


def _round_up(x, m):
    return (x + m - 1) // m * m


def build_param_permutation(latent_dim, num_hidden, num_layers):
    """perm[k] = PyTorch flat-param index that feeds kernel-layout row k.

    Kernel layout per layer: I column-chunks of the TRANSPOSED weight
    (chunk i = W[:, i], length O -> contiguous, 16-aligned sublane slice),
    followed by the bias (length O).
    """
    shapes = _layer_shapes(latent_dim, num_hidden, num_layers)
    perm = []
    pt_off = 0
    for (o, i) in shapes:
        for col in range(i):
            perm.extend(pt_off + row * i + col for row in range(o))
        perm.extend(pt_off + o * i + row for row in range(o))
        pt_off += o * i + o
    return np.asarray(perm, dtype=np.int32)


def _ode_mlp_kernel(shapes, z_ref, p_ref, o_ref):
    """One batch tile; batch on the lane axis.

    z_ref : [L, TB]      f32        activations, batch on lanes
    p_ref : [P_pad, TB]  bf16/f32   kernel-layout flat params, batch on lanes
    o_ref : [L, TB]      f32
    """
    h = z_ref[...].astype(jnp.float32)                                 # [L, TB]
    off = 0
    n = len(shapes)
    for idx, (o_dim, i_dim) in enumerate(shapes):
        w_off = off
        b_off = off + i_dim * o_dim
        # Start from the bias; chunked upcast (no whole-slice f32 copy).
        acc = p_ref[b_off:b_off + o_dim, :].astype(jnp.float32)        # [O, TB]
        for i in range(i_dim):
            # Contiguous, aligned [O, TB] slice = transposed-weight column i.
            w_col = p_ref[w_off + i * o_dim:w_off + (i + 1) * o_dim, :]
            # h_new[o,b] += W[o,i,b] * h[i,b]: lane-dense VPU mul+add; the
            # sublane broadcast of row i goes to the XLU (separate slot).
            acc = acc + w_col.astype(jnp.float32) * h[i:i + 1, :]
        off = b_off + o_dim
        h = LATENT_ACT(acc) if idx < n - 1 else acc                    # EUP tanh
    o_ref[...] = h.astype(o_ref.dtype)


def ode_plan(batch, latent_dim, num_hidden, num_layers, *,
             block_batch=2048, param_dtype=jnp.bfloat16):
    """Generation-aware sizing: tile width, padded dims, param dtype."""
    assert latent_dim % 8 == 0 and num_hidden % 8 == 0, \
        "latent_dim / num_hidden must be multiples of 8 for this kernel"
    # bf16 packs 16 rows per vreg; use f32 param storage if dims are only %8
    # so every static param slice stays repack-free.
    if jnp.dtype(param_dtype).itemsize == 2 and (latent_dim % 16 or num_hidden % 16):
        param_dtype = jnp.float32
    itemsize = jnp.dtype(param_dtype).itemsize
    align = 16 if itemsize == 2 else 8

    shapes = tuple(_layer_shapes(latent_dim, num_hidden, num_layers))
    P = _param_count(shapes)
    P_pad = _round_up(P, align)

    try:
        vmem_cap = int(pltpu.get_tpu_info().vmem_capacity_bytes)
    except Exception:                       # conservative default (v7x per-TC)
        vmem_cap = 64 << 20

    b_pad_full = _round_up(batch, 128)
    # Double-buffered param slab capped at ~1/3 of this generation's VMEM.
    cap = (vmem_cap // 3) // (2 * P_pad * itemsize)
    cap = max(128, cap // 128 * 128)
    tb = min(block_batch, cap, b_pad_full)
    if tb >= b_pad_full:
        # Prefer >=2 grid steps (v7x megacore sharding), but keep tiles
        # >= 256 lanes so the ~0.35us per-step overhead stays amortized.
        two_way = _round_up(pl.cdiv(batch, 2), 128)
        if two_way >= 256:
            tb = min(tb, two_way)
    tb = max(tb, 128)
    b_pad = _round_up(batch, tb)

    blocks = 2 * (tb * P_pad * itemsize + 2 * tb * max(latent_dim, 8) * 4)
    vmem_limit = int(min(max(blocks + (16 << 20), 32 << 20), int(vmem_cap * 0.9)))

    return dict(shapes=shapes, P=P, P_pad=P_pad, TB=tb, B=batch, B_pad=b_pad,
                L=latent_dim, param_dtype=jnp.dtype(param_dtype),
                vmem_limit=vmem_limit)


def prepare_hypernet(hyper_w, hyper_b, perm, plan):
    """Permute + zero-pad the (tiny) hypernet weights once, offline."""
    P, P_pad = plan["P"], plan["P_pad"]
    w_k = jnp.zeros((P_pad, hyper_w.shape[1]), hyper_w.dtype).at[:P].set(hyper_w[perm])
    b_k = jnp.zeros((P_pad,), hyper_b.dtype).at[:P].set(hyper_b[perm])
    return w_k, b_k


def hypernet_params_bm(w_k, b_k, embeddings, plan):
    """self.params, emitted directly in kernel layout [P_pad, B_pad]
    (batch-minor) by the hypernet matmul -- no extra transpose pass over the
    large per-sample parameter array."""
    B, B_pad = plan["B"], plan["B_pad"]
    emb_pad = jnp.pad(embeddings, ((0, B_pad - B), (0, 0)))            # [B_pad, C]
    params_bm = w_k @ emb_pad.T + b_k[:, None]                         # [P_pad, B_pad]
    return params_bm.astype(plan["param_dtype"])


def ode_forward(params_bm, z, plan):
    """Pallas equivalent of functorch.vmap(dynamics_network)(params, z).

    params_bm : [P_pad, B_pad] kernel-layout flat params, batch-minor,
                already in plan['param_dtype'].
    z         : [B, L] f32.   Returns [B, L] f32.
    """
    L, TB, B, B_pad, P_pad = (plan[k] for k in ("L", "TB", "B", "B_pad", "P_pad"))
    assert params_bm.shape == (P_pad, B_pad)
    assert params_bm.dtype == plan["param_dtype"]
    assert z.shape == (B, L)

    # z is tiny ([B, L]); transposing/padding it here is negligible plumbing.
    z_t = jnp.pad(z.astype(jnp.float32).T, ((0, 0), (0, B_pad - B)))   # [L, B_pad]

    kernel = functools.partial(_ode_mlp_kernel, plan["shapes"])
    out_t = pl.pallas_call(
        kernel,
        out_shape=jax.ShapeDtypeStruct((L, B_pad), jnp.float32),
        grid=(B_pad // TB,),
        in_specs=[
            pl.BlockSpec((L, TB), lambda i: (0, i)),        # z, batch on lanes
            pl.BlockSpec((P_pad, TB), lambda i: (0, i)),    # flat param slab
        ],
        out_specs=pl.BlockSpec((L, TB), lambda i: (0, i)),  # lane-dense stores
        compiler_params=pltpu.CompilerParams(
            dimension_semantics=("parallel",),
            vmem_limit_bytes=plan["vmem_limit"]),
    )(z_t, params_bm)

    return out_t[:, :B].T                                   # back to [B, L]


def ref_forward(flat_params, z, *, latent_dim, num_hidden, num_layers):
    """Pure-JAX reference matching PyTorch semantics (PyTorch param order)."""
    shapes = _layer_shapes(latent_dim, num_hidden, num_layers)

    def single(p, zi):
        off = 0
        h = zi
        for idx, (o_dim, i_dim) in enumerate(shapes):
            w = p[off:off + o_dim * i_dim].reshape(o_dim, i_dim)
            off += o_dim * i_dim
            b = p[off:off + o_dim]
            off += o_dim
            h = jnp.dot(h, w.T, precision="highest") + b
            if idx < len(shapes) - 1:
                h = LATENT_ACT(h)
        return h

    return jax.vmap(single)(flat_params, z)


if __name__ == "__main__":
    # Small shapes consistent with the module; batch large enough that the
    # plan picks >= 2 grid steps and exercises the padding path.
    batch_size = 384
    latent_dim = 16
    num_hidden = 32
    num_layers = 2   # -> Linear(L,H), act, Linear(H,H), act, Linear(H,L)
    code_dim = 8

    plan = ode_plan(batch_size, latent_dim, num_hidden, num_layers)
    P = plan["P"]
    perm = jnp.asarray(build_param_permutation(latent_dim, num_hidden, num_layers))

    key = jax.random.PRNGKey(0)
    k_emb, k_hw, k_z = jax.random.split(key, 3)

    # Glue: hypernet nn.Linear(code_dim, P), weight ~ N(0, 0.01), bias = 0.
    embeddings = jax.random.normal(k_emb, (batch_size, code_dim), jnp.float32)
    hyper_w = 0.01 * jax.random.normal(k_hw, (P, code_dim), jnp.float32)
    hyper_b = jnp.zeros((P,), jnp.float32)

    # Permute the hypernet rows offline (zero runtime cost) and emit
    # self.params already batch-minor in the kernel layout.
    w_k, b_k = prepare_hypernet(hyper_w, hyper_b, perm, plan)
    params_bm = hypernet_params_bm(w_k, b_k, embeddings, plan)   # [P_pad, B_pad]

    z = jax.random.normal(k_z, (batch_size, latent_dim), jnp.float32)
    t = jnp.float32(0.0)   # unused by forward(); kept for signature parity

    out = ode_forward(params_bm, z, plan)
    out = jax.block_until_ready(out)

    # Reference: the exact same (bf16-rounded) params, un-permuted back to
    # PyTorch flat order, run through a faithful per-sample MLP.
    params_k = params_bm.astype(jnp.float32)[:P, :batch_size].T          # [B, P] kernel order
    params_pt = jnp.zeros_like(params_k).at[:, perm].set(params_k)       # [B, P] PyTorch order
    ref = ref_forward(params_pt, z, latent_dim=latent_dim,
                      num_hidden=num_hidden, num_layers=num_layers)

    assert out.shape == (batch_size, latent_dim)
    assert jnp.allclose(out, ref, atol=1e-5, rtol=1e-4), "mismatch vs reference"
    print("KERNEL_OK")
</pallas_src>

<mosaic_0001>
module attributes {stable_mosaic.version = 11 : i64} {
  func.func @_ode_mlp_kernel(%arg0: i32, %arg1: memref<16x256xf32, #tpu.memory_space<vmem>>, %arg2: memref<2128x256xbf16, #tpu.memory_space<vmem>>, %arg3: memref<16x256xf32, #tpu.memory_space<vmem>>) attributes {dimension_semantics = [#tpu.dimension_semantics<parallel>], iteration_bounds = array<i64: 2>, scalar_prefetch = 0 : i64, scratch_operands = 0 : i64, tpu.core_type = #tpu.core_type<tc>, window_params = [{transform_indices = @transform_0, window_bounds = array<i64: 16, 256>}, {transform_indices = @transform_1, window_bounds = array<i64: 2128, 256>}, {transform_indices = @transform_2, window_bounds = array<i64: 16, 256>}]} {
    %c0 = arith.constant 0 : index
    %c0_0 = arith.constant 0 : index
    %0 = vector.load %arg1[%c0, %c0_0] : memref<16x256xf32, #tpu.memory_space<vmem>>, vector<16x256xf32>
    %c512 = arith.constant 512 : index
    %c0_1 = arith.constant 0 : index
    %1 = vector.load %arg2[%c512, %c0_1] : memref<2128x256xbf16, #tpu.memory_space<vmem>>, vector<32x256xbf16>
    %2 = arith.extf %1 : vector<32x256xbf16> to vector<32x256xf32>
    %c0_2 = arith.constant 0 : index
    %c0_3 = arith.constant 0 : index
    %3 = vector.load %arg2[%c0_2, %c0_3] : memref<2128x256xbf16, #tpu.memory_space<vmem>>, vector<32x256xbf16>
    %4 = arith.extf %3 : vector<32x256xbf16> to vector<32x256xf32>
    %5 = vector.extract_strided_slice %0 {offsets = [0, 0], sizes = [1, 256], strides = [1, 1]} : vector<16x256xf32> to vector<1x256xf32>
    %6 = vector.broadcast %5 : vector<1x256xf32> to vector<32x256xf32>
    %7 = arith.mulf %4, %6 : vector<32x256xf32>
    %8 = arith.addf %2, %7 : vector<32x256xf32>
    %c32 = arith.constant 32 : index
    %c0_4 = arith.constant 0 : index
    %9 = vector.load %arg2[%c32, %c0_4] : memref<2128x256xbf16, #tpu.memory_space<vmem>>, vector<32x256xbf16>
    %10 = arith.extf %9 : vector<32x256xbf16> to vector<32x256xf32>
    %11 = vector.extract_strided_slice %0 {offsets = [1, 0], sizes = [1, 256], strides = [1, 1]} : vector<16x256xf32> to vector<1x256xf32>
    %12 = vector.broadcast %11 : vector<1x256xf32> to vector<32x256xf32>
    %13 = arith.mulf %10, %12 : vector<32x256xf32>
    %14 = arith.addf %8, %13 : vector<32x256xf32>
    %c64 = arith.constant 64 : index
    %c0_5 = arith.constant 0 : index
    %15 = vector.load %arg2[%c64, %c0_5] : memref<2128x256xbf16, #tpu.memory_space<vmem>>, vector<32x256xbf16>
    %16 = arith.extf %15 : vector<32x256xbf16> to vector<32x256xf32>
    %17 = vector.extract_strided_slice %0 {offsets = [2, 0], sizes = [1, 256], strides = [1, 1]} : vector<16x256xf32> to vector<1x256xf32>
    %18 = vector.broadcast %17 : vector<1x256xf32> to vector<32x256xf32>
    %19 = arith.mulf %16, %18 : vector<32x256xf32>
    %20 = arith.addf %14, %19 : vector<32x256xf32>
    %c96 = arith.constant 96 : index
    %c0_6 = arith.constant 0 : index
    %21 = vector.load %arg2[%c96, %c0_6] : memref<2128x256xbf16, #tpu.memory_space<vmem>>, vector<32x256xbf16>
    %22 = arith.extf %21 : vector<32x256xbf16> to vector<32x256xf32>
    %23 = vector.extract_strided_slice %0 {offsets = [3, 0], sizes = [1, 256], strides = [1, 1]} : vector<16x256xf32> to vector<1x256xf32>
    %24 = vector.broadcast %23 : vector<1x256xf32> to vector<32x256xf32>
    %25 = arith.mulf %22, %24 : vector<32x256xf32>
    %26 = arith.addf %20, %25 : vector<32x256xf32>
    %c128 = arith.constant 128 : index
    %c0_7 = arith.constant 0 : index
    %27 = vector.load %arg2[%c128, %c0_7] : memref<2128x256xbf16, #tpu.memory_space<vmem>>, vector<32x256xbf16>
    %28 = arith.extf %27 : vector<32x256xbf16> to vector<32x256xf32>
    %29 = vector.extract_strided_slice %0 {offsets = [4, 0], sizes = [1, 256], strides = [1, 1]} : vector<16x256xf32> to vector<1x256xf32>
    %30 = vector.broadcast %29 : vector<1x256xf32> to vector<32x256xf32>
    %31 = arith.mulf %28, %30 : vector<32x256xf32>
    %32 = arith.addf %26, %31 : vector<32x256xf32>
    %c160 = arith.constant 160 : index
    %c0_8 = arith.constant 0 : index
    %33 = vector.load %arg2[%c160, %c0_8] : memref<2128x256xbf16, #tpu.memory_space<vmem>>, vector<32x256xbf16>
    %34 = arith.extf %33 : vector<32x256xbf16> to vector<32x256xf32>
    %35 = vector.extract_strided_slice %0 {offsets = [5, 0], sizes = [1, 256], strides = [1, 1]} : vector<16x256xf32> to vector<1x256xf32>
    %36 = vector.broadcast %35 : vector<1x256xf32> to vector<32x256xf32>
    %37 = arith.mulf %34, %36 : vector<32x256xf32>
    %38 = arith.addf %32, %37 : vector<32x256xf32>
    %c192 = arith.constant 192 : index
    %c0_9 = arith.constant 0 : index
    %39 = vector.load %arg2[%c192, %c0_9] : memref<2128x256xbf16, #tpu.memory_space<vmem>>, vector<32x256xbf16>
    %40 = arith.extf %39 : vector<32x256xbf16> to vector<32x256xf32>
    %41 = vector.extract_strided_slice %0 {offsets = [6, 0], sizes = [1, 256], strides = [1, 1]} : vector<16x256xf32> to vector<1x256xf32>
    %42 = vector.broadcast %41 : vector<1x256xf32> to vector<32x256xf32>
    %43 = arith.mulf %40, %42 : vector<32x256xf32>
    %44 = arith.addf %38, %43 : vector<32x256xf32>
    %c224 = arith.constant 224 : index
    %c0_10 = arith.constant 0 : index
    %45 = vector.load %arg2[%c224, %c0_10] : memref<2128x256xbf16, #tpu.memory_space<vmem>>, vector<32x256xbf16>
    %46 = arith.extf %45 : vector<32x256xbf16> to vector<32x256xf32>
    %47 = vector.extract_strided_slice %0 {offsets = [7, 0], sizes = [1, 256], strides = [1, 1]} : vector<16x256xf32> to vector<1x256xf32>
    %48 = vector.broadcast %47 : vector<1x256xf32> to vector<32x256xf32>
    %49 = arith.mulf %46, %48 : vector<32x256xf32>
    %50 = arith.addf %44, %49 : vector<32x256xf32>
    %c256 = arith.constant 256 : index
    %c0_11 = arith.constant 0 : index
    %51 = vector.load %arg2[%c256, %c0_11] : memref<2128x256xbf16, #tpu.memory_space<vmem>>, vector<32x256xbf16>
    %52 = arith.extf %51 : vector<32x256xbf16> to vector<32x256xf32>
    %53 = vector.extract_strided_slice %0 {offsets = [8, 0], sizes = [1, 256], strides = [1, 1]} : vector<16x256xf32> to vector<1x256xf32>
    %54 = vector.broadcast %53 : vector<1x256xf32> to vector<32x256xf32>
    %55 = arith.mulf %52, %54 : vector<32x256xf32>
    %56 = arith.addf %50, %55 : vector<32x256xf32>
    %c288 = arith.constant 288 : index
    %c0_12 = arith.constant 0 : index
    %57 = vector.load %arg2[%c288, %c0_12] : memref<2128x256xbf16, #tpu.memory_space<vmem>>, vector<32x256xbf16>
    %58 = arith.extf %57 : vector<32x256xbf16> to vector<32x256xf32>
    %59 = vector.extract_strided_slice %0 {offsets = [9, 0], sizes = [1, 256], strides = [1, 1]} : vector<16x256xf32> to vector<1x256xf32>
    %60 = vector.broadcast %59 : vector<1x256xf32> to vector<32x256xf32>
    %61 = arith.mulf %58, %60 : vector<32x256xf32>
    %62 = arith.addf %56, %61 : vector<32x256xf32>
    %c320 = arith.constant 320 : index
    %c0_13 = arith.constant 0 : index
    %63 = vector.load %arg2[%c320, %c0_13] : memref<2128x256xbf16, #tpu.memory_space<vmem>>, vector<32x256xbf16>
    %64 = arith.extf %63 : vector<32x256xbf16> to vector<32x256xf32>
    %65 = vector.extract_strided_slice %0 {offsets = [10, 0], sizes = [1, 256], strides = [1, 1]} : vector<16x256xf32> to vector<1x256xf32>
    %66 = vector.broadcast %65 : vector<1x256xf32> to vector<32x256xf32>
    %67 = arith.mulf %64, %66 : vector<32x256xf32>
    %68 = arith.addf %62, %67 : vector<32x256xf32>
    %c352 = arith.constant 352 : index
    %c0_14 = arith.constant 0 : index
    %69 = vector.load %arg2[%c352, %c0_14] : memref<2128x256xbf16, #tpu.memory_space<vmem>>, vector<32x256xbf16>
    %70 = arith.extf %69 : vector<32x256xbf16> to vector<32x256xf32>
    %71 = vector.extract_strided_slice %0 {offsets = [11, 0], sizes = [1, 256], strides = [1, 1]} : vector<16x256xf32> to vector<1x256xf32>
    %72 = vector.broadcast %71 : vector<1x256xf32> to vector<32x256xf32>
    %73 = arith.mulf %70, %72 : vector<32x256xf32>
    %74 = arith.addf %68, %73 : vector<32x256xf32>
    %c384 = arith.constant 384 : index
    %c0_15 = arith.constant 0 : index
    %75 = vector.load %arg2[%c384, %c0_15] : memref<2128x256xbf16, #tpu.memory_space<vmem>>, vector<32x256xbf16>
    %76 = arith.extf %75 : vector<32x256xbf16> to vector<32x256xf32>
    %77 = vector.extract_strided_slice %0 {offsets = [12, 0], sizes = [1, 256], strides = [1, 1]} : vector<16x256xf32> to vector<1x256xf32>
    %78 = vector.broadcast %77 : vector<1x256xf32> to vector<32x256xf32>
    %79 = arith.mulf %76, %78 : vector<32x256xf32>
    %80 = arith.addf %74, %79 : vector<32x256xf32>
    %c416 = arith.constant 416 : index
    %c0_16 = arith.constant 0 : index
    %81 = vector.load %arg2[%c416, %c0_16] : memref<2128x256xbf16, #tpu.memory_space<vmem>>, vector<32x256xbf16>
    %82 = arith.extf %81 : vector<32x256xbf16> to vector<32x256xf32>
    %83 = vector.extract_strided_slice %0 {offsets = [13, 0], sizes = [1, 256], strides = [1, 1]} : vector<16x256xf32> to vector<1x256xf32>
    %84 = vector.broadcast %83 : vector<1x256xf32> to vector<32x256xf32>
    %85 = arith.mulf %82, %84 : vector<32x256xf32>
    %86 = arith.addf %80, %85 : vector<32x256xf32>
    %c448 = arith.constant 448 : index
    %c0_17 = arith.constant 0 : index
    %87 = vector.load %arg2[%c448, %c0_17] : memref<2128x256xbf16, #tpu.memory_space<vmem>>, vector<32x256xbf16>
    %88 = arith.extf %87 : vector<32x256xbf16> to vector<32x256xf32>
    %89 = vector.extract_strided_slice %0 {offsets = [14, 0], sizes = [1, 256], strides = [1, 1]} : vector<16x256xf32> to vector<1x256xf32>
    %90 = vector.broadcast %89 : vector<1x256xf32> to vector<32x256xf32>
    %91 = arith.mulf %88, %90 : vector<32x256xf32>
    %92 = arith.addf %86, %91 : vector<32x256xf32>
    %c480 = arith.constant 480 : index
    %c0_18 = arith.constant 0 : index
    %93 = vector.load %arg2[%c480, %c0_18] : memref<2128x256xbf16, #tpu.memory_space<vmem>>, vector<32x256xbf16>
    %94 = arith.extf %93 : vector<32x256xbf16> to vector<32x256xf32>
    %95 = vector.extract_strided_slice %0 {offsets = [15, 0], sizes = [1, 256], strides = [1, 1]} : vector<16x256xf32> to vector<1x256xf32>
    %96 = vector.broadcast %95 : vector<1x256xf32> to vector<32x256xf32>
    %97 = arith.mulf %94, %96 : vector<32x256xf32>
    %98 = arith.addf %92, %97 : vector<32x256xf32>
    %99 = math.tanh %98 : vector<32x256xf32>
    %c1568 = arith.constant 1568 : index
    %c0_19 = arith.constant 0 : index
    %100 = vector.load %arg2[%c1568, %c0_19] : memref<2128x256xbf16, #tpu.memory_space<vmem>>, vector<32x256xbf16>
    %101 = arith.extf %100 : vector<32x256xbf16> to vector<32x256xf32>
    %c544 = arith.constant 544 : index
    %c0_20 = arith.constant 0 : index
    %102 = vector.load %arg2[%c544, %c0_20] : memref<2128x256xbf16, #tpu.memory_space<vmem>>, vector<32x256xbf16>
    %103 = arith.extf %102 : vector<32x256xbf16> to vector<32x256xf32>
    %104 = vector.extract_strided_slice %99 {offsets = [0, 0], sizes = [1, 256], strides = [1, 1]} : vector<32x256xf32> to vector<1x256xf32>
    %105 = vector.broadcast %104 : vector<1x256xf32> to vector<32x256xf32>
    %106 = arith.mulf %103, %105 : vector<32x256xf32>
    %107 = arith.addf %101, %106 : vector<32x256xf32>
    %c576 = arith.constant 576 : index
    %c0_21 = arith.constant 0 : index
    %108 = vector.load %arg2[%c576, %c0_21] : memref<2128x256xbf16, #tpu.memory_space<vmem>>, vector<32x256xbf16>
    %109 = arith.extf %108 : vector<32x256xbf16> to vector<32x256xf32>
    %110 = vector.extract_strided_slice %99 {offsets = [1, 0], sizes = [1, 256], strides = [1, 1]} : vector<32x256xf32> to vector<1x256xf32>
    %111 = vector.broadcast %110 : vector<1x256xf32> to vector<32x256xf32>
    %112 = arith.mulf %109, %111 : vector<32x256xf32>
    %113 = arith.addf %107, %112 : vector<32x256xf32>
    %c608 = arith.constant 608 : index
    %c0_22 = arith.constant 0 : index
    %114 = vector.load %arg2[%c608, %c0_22] : memref<2128x256xbf16, #tpu.memory_space<vmem>>, vector<32x256xbf16>
    %115 = arith.extf %114 : vector<32x256xbf16> to vector<32x256xf32>
    %116 = vector.extract_strided_slice %99 {offsets = [2, 0], sizes = [1, 256], strides = [1, 1]} : vector<32x256xf32> to vector<1x256xf32>
    %117 = vector.broadcast %116 : vector<1x256xf32> to vector<32x256xf32>
    %118 = arith.mulf %115, %117 : vector<32x256xf32>
    %119 = arith.addf %113, %118 : vector<32x256xf32>
    %c640 = arith.constant 640 : index
    %c0_23 = arith.constant 0 : index
    %120 = vector.load %arg2[%c640, %c0_23] : memref<2128x256xbf16, #tpu.memory_space<vmem>>, vector<32x256xbf16>
    %121 = arith.extf %120 : vector<32x256xbf16> to vector<32x256xf32>
    %122 = vector.extract_strided_slice %99 {offsets = [3, 0], sizes = [1, 256], strides = [1, 1]} : vector<32x256xf32> to vector<1x256xf32>
    %123 = vector.broadcast %122 : vector<1x256xf32> to vector<32x256xf32>
    %124 = arith.mulf %121, %123 : vector<32x256xf32>
    %125 = arith.addf %119, %124 : vector<32x256xf32>
    %c672 = arith.constant 672 : index
    %c0_24 = arith.constant 0 : index
    %126 = vector.load %arg2[%c672, %c0_24] : memref<2128x256xbf16, #tpu.memory_space<vmem>>, vector<32x256xbf16>
    %127 = arith.extf %126 : vector<32x256xbf16> to vector<32x256xf32>
    %128 = vector.extract_strided_slice %99 {offsets = [4, 0], sizes = [1, 256], strides = [1, 1]} : vector<32x256xf32> to vector<1x256xf32>
    %129 = vector.broadcast %128 : vector<1x256xf32> to vector<32x256xf32>
    %130 = arith.mulf %127, %129 : vector<32x256xf32>
    %131 = arith.addf %125, %130 : vector<32x256xf32>
    %c704 = arith.constant 704 : index
    %c0_25 = arith.constant 0 : index
    %132 = vector.load %arg2[%c704, %c0_25] : memref<2128x256xbf16, #tpu.memory_space<vmem>>, vector<32x256xbf16>
    %133 = arith.extf %132 : vector<32x256xbf16> to vector<32x256xf32>
    %134 = vector.extract_strided_slice %99 {offsets = [5, 0], sizes = [1, 256], strides = [1, 1]} : vector<32x256xf32> to vector<1x256xf32>
    %135 = vector.broadcast %134 : vector<1x256xf32> to vector<32x256xf32>
    %136 = arith.mulf %133, %135 : vector<32x256xf32>
    %137 = arith.addf %131, %136 : vector<32x256xf32>
    %c736 = arith.constant 736 : index
    %c0_26 = arith.constant 0 : index
    %138 = vector.load %arg2[%c736, %c0_26] : memref<2128x256xbf16, #tpu.memory_space<vmem>>, vector<32x256xbf16>
    %139 = arith.extf %138 : vector<32x256xbf16> to vector<32x256xf32>
    %140 = vector.extract_strided_slice %99 {offsets = [6, 0], sizes = [1, 256], strides = [1, 1]} : vector<32x256xf32> to vector<1x256xf32>
    %141 = vector.broadcast %140 : vector<1x256xf32> to vector<32x256xf32>
    %142 = arith.mulf %139, %141 : vector<32x256xf32>
    %143 = arith.addf %137, %142 : vector<32x256xf32>
    %c768 = arith.constant 768 : index
    %c0_27 = arith.constant 0 : index
    %144 = vector.load %arg2[%c768, %c0_27] : memref<2128x256xbf16, #tpu.memory_space<vmem>>, vector<32x256xbf16>
    %145 = arith.extf %144 : vector<32x256xbf16> to vector<32x256xf32>
    %146 = vector.extract_strided_slice %99 {offsets = [7, 0], sizes = [1, 256], strides = [1, 1]} : vector<32x256xf32> to vector<1x256xf32>
    %147 = vector.broadcast %146 : vector<1x256xf32> to vector<32x256xf32>
    %148 = arith.mulf %145, %147 : vector<32x256xf32>
    %149 = arith.addf %143, %148 : vector<32x256xf32>
    %c800 = arith.constant 800 : index
    %c0_28 = arith.constant 0 : index
    %150 = vector.load %arg2[%c800, %c0_28] : memref<2128x256xbf16, #tpu.memory_space<vmem>>, vector<32x256xbf16>
    %151 = arith.extf %150 : vector<32x256xbf16> to vector<32x256xf32>
    %152 = vector.extract_strided_slice %99 {offsets = [8, 0], sizes = [1, 256], strides = [1, 1]} : vector<32x256xf32> to vector<1x256xf32>
    %153 = vector.broadcast %152 : vector<1x256xf32> to vector<32x256xf32>
    %154 = arith.mulf %151, %153 : vector<32x256xf32>
    %155 = arith.addf %149, %154 : vector<32x256xf32>
    %c832 = arith.constant 832 : index
    %c0_29 = arith.constant 0 : index
    %156 = vector.load %arg2[%c832, %c0_29] : memref<2128x256xbf16, #tpu.memory_space<vmem>>, vector<32x256xbf16>
    %157 = arith.extf %156 : vector<32x256xbf16> to vector<32x256xf32>
    %158 = vector.extract_strided_slice %99 {offsets = [9, 0], sizes = [1, 256], strides = [1, 1]} : vector<32x256xf32> to vector<1x256xf32>
    %159 = vector.broadcast %158 : vector<1x256xf32> to vector<32x256xf32>
    %160 = arith.mulf %157, %159 : vector<32x256xf32>
    %161 = arith.addf %155, %160 : vector<32x256xf32>
    %c864 = arith.constant 864 : index
    %c0_30 = arith.constant 0 : index
    %162 = vector.load %arg2[%c864, %c0_30] : memref<2128x256xbf16, #tpu.memory_space<vmem>>, vector<32x256xbf16>
    %163 = arith.extf %162 : vector<32x256xbf16> to vector<32x256xf32>
    %164 = vector.extract_strided_slice %99 {offsets = [10, 0], sizes = [1, 256], strides = [1, 1]} : vector<32x256xf32> to vector<1x256xf32>
    %165 = vector.broadcast %164 : vector<1x256xf32> to vector<32x256xf32>
    %166 = arith.mulf %163, %165 : vector<32x256xf32>
    %167 = arith.addf %161, %166 : vector<32x256xf32>
    %c896 = arith.constant 896 : index
    %c0_31 = arith.constant 0 : index
    %168 = vector.load %arg2[%c896, %c0_31] : memref<2128x256xbf16, #tpu.memory_space<vmem>>, vector<32x256xbf16>
    %169 = arith.extf %168 : vector<32x256xbf16> to vector<32x256xf32>
    %170 = vector.extract_strided_slice %99 {offsets = [11, 0], sizes = [1, 256], strides = [1, 1]} : vector<32x256xf32> to vector<1x256xf32>
    %171 = vector.broadcast %170 : vector<1x256xf32> to vector<32x256xf32>
    %172 = arith.mulf %169, %171 : vector<32x256xf32>
    %173 = arith.addf %167, %172 : vector<32x256xf32>
    %c928 = arith.constant 928 : index
    %c0_32 = arith.constant 0 : index
    %174 = vector.load %arg2[%c928, %c0_32] : memref<2128x256xbf16, #tpu.memory_space<vmem>>, vector<32x256xbf16>
    %175 = arith.extf %174 : vector<32x256xbf16> to vector<32x256xf32>
    %176 = vector.extract_strided_slice %99 {offsets = [12, 0], sizes = [1, 256], strides = [1, 1]} : vector<32x256xf32> to vector<1x256xf32>
    %177 = vector.broadcast %176 : vector<1x256xf32> to vector<32x256xf32>
    %178 = arith.mulf %175, %177 : vector<32x256xf32>
    %179 = arith.addf %173, %178 : vector<32x256xf32>
    %c960 = arith.constant 960 : index
    %c0_33 = arith.constant 0 : index
    %180 = vector.load %arg2[%c960, %c0_33] : memref<2128x256xbf16, #tpu.memory_space<vmem>>, vector<32x256xbf16>
    %181 = arith.extf %180 : vector<32x256xbf16> to vector<32x256xf32>
    %182 = vector.extract_strided_slice %99 {offsets = [13, 0], sizes = [1, 256], strides = [1, 1]} : vector<32x256xf32> to vector<1x256xf32>
    %183 = vector.broadcast %182 : vector<1x256xf32> to vector<32x256xf32>
    %184 = arith.mulf %181, %183 : vector<32x256xf32>
    %185 = arith.addf %179, %184 : vector<32x256xf32>
    %c992 = arith.constant 992 : index
    %c0_34 = arith.constant 0 : index
    %186 = vector.load %arg2[%c992, %c0_34] : memref<2128x256xbf16, #tpu.memory_space<vmem>>, vector<32x256xbf16>
    %187 = arith.extf %186 : vector<32x256xbf16> to vector<32x256xf32>
    %188 = vector.extract_strided_slice %99 {offsets = [14, 0], sizes = [1, 256], strides = [1, 1]} : vector<32x256xf32> to vector<1x256xf32>
    %189 = vector.broadcast %188 : vector<1x256xf32> to vector<32x256xf32>
    %190 = arith.mulf %187, %189 : vector<32x256xf32>
    %191 = arith.addf %185, %190 : vector<32x256xf32>
    %c1024 = arith.constant 1024 : index
    %c0_35 = arith.constant 0 : index
    %192 = vector.load %arg2[%c1024, %c0_35] : memref<2128x256xbf16, #tpu.memory_space<vmem>>, vector<32x256xbf16>
    %193 = arith.extf %192 : vector<32x256xbf16> to vector<32x256xf32>
    %194 = vector.extract_strided_slice %99 {offsets = [15, 0], sizes = [1, 256], strides = [1, 1]} : vector<32x256xf32> to vector<1x256xf32>
    %195 = vector.broadcast %194 : vector<1x256xf32> to vector<32x256xf32>
    %196 = arith.mulf %193, %195 : vector<32x256xf32>
    %197 = arith.addf %191, %196 : vector<32x256xf32>
    %c1056 = arith.constant 1056 : index
    %c0_36 = arith.constant 0 : index
    %198 = vector.load %arg2[%c1056, %c0_36] : memref<2128x256xbf16, #tpu.memory_space<vmem>>, vector<32x256xbf16>
    %199 = arith.extf %198 : vector<32x256xbf16> to vector<32x256xf32>
    %200 = vector.extract_strided_slice %99 {offsets = [16, 0], sizes = [1, 256], strides = [1, 1]} : vector<32x256xf32> to vector<1x256xf32>
    %201 = vector.broadcast %200 : vector<1x256xf32> to vector<32x256xf32>
    %202 = arith.mulf %199, %201 : vector<32x256xf32>
    %203 = arith.addf %197, %202 : vector<32x256xf32>
    %c1088 = arith.constant 1088 : index
    %c0_37 = arith.constant 0 : index
    %204 = vector.load %arg2[%c1088, %c0_37] : memref<2128x256xbf16, #tpu.memory_space<vmem>>, vector<32x256xbf16>
    %205 = arith.extf %204 : vector<32x256xbf16> to vector<32x256xf32>
    %206 = vector.extract_strided_slice %99 {offsets = [17, 0], sizes = [1, 256], strides = [1, 1]} : vector<32x256xf32> to vector<1x256xf32>
    %207 = vector.broadcast %206 : vector<1x256xf32> to vector<32x256xf32>
    %208 = arith.mulf %205, %207 : vector<32x256xf32>
    %209 = arith.addf %203, %208 : vector<32x256xf32>
    %c1120 = arith.constant 1120 : index
    %c0_38 = arith.constant 0 : index
    %210 = vector.load %arg2[%c1120, %c0_38] : memref<2128x256xbf16, #tpu.memory_space<vmem>>, vector<32x256xbf16>
    %211 = arith.extf %210 : vector<32x256xbf16> to vector<32x256xf32>
    %212 = vector.extract_strided_slice %99 {offsets = [18, 0], sizes = [1, 256], strides = [1, 1]} : vector<32x256xf32> to vector<1x256xf32>
    %213 = vector.broadcast %212 : vector<1x256xf32> to vector<32x256xf32>
    %214 = arith.mulf %211, %213 : vector<32x256xf32>
    %215 = arith.addf %209, %214 : vector<32x256xf32>
    %c1152 = arith.constant 1152 : index
    %c0_39 = arith.constant 0 : index
    %216 = vector.load %arg2[%c1152, %c0_39] : memref<2128x256xbf16, #tpu.memory_space<vmem>>, vector<32x256xbf16>
    %217 = arith.extf %216 : vector<32x256xbf16> to vector<32x256xf32>
    %218 = vector.extract_strided_slice %99 {offsets = [19, 0], sizes = [1, 256], strides = [1, 1]} : vector<32x256xf32> to vector<1x256xf32>
    %219 = vector.broadcast %218 : vector<1x256xf32> to vector<32x256xf32>
    %220 = arith.mulf %217, %219 : vector<32x256xf32>
    %221 = arith.addf %215, %220 : vector<32x256xf32>
    %c1184 = arith.constant 1184 : index
    %c0_40 = arith.constant 0 : index
    %222 = vector.load %arg2[%c1184, %c0_40] : memref<2128x256xbf16, #tpu.memory_space<vmem>>, vector<32x256xbf16>
    %223 = arith.extf %222 : vector<32x256xbf16> to vector<32x256xf32>
    %224 = vector.extract_strided_slice %99 {offsets = [20, 0], sizes = [1, 256], strides = [1, 1]} : vector<32x256xf32> to vector<1x256xf32>
    %225 = vector.broadcast %224 : vector<1x256xf32> to vector<32x256xf32>
    %226 = arith.mulf %223, %225 : vector<32x256xf32>
    %227 = arith.addf %221, %226 : vector<32x256xf32>
    %c1216 = arith.constant 1216 : index
    %c0_41 = arith.constant 0 : index
    %228 = vector.load %arg2[%c1216, %c0_41] : memref<2128x256xbf16, #tpu.memory_space<vmem>>, vector<32x256xbf16>
    %229 = arith.extf %228 : vector<32x256xbf16> to vector<32x256xf32>
    %230 = vector.extract_strided_slice %99 {offsets = [21, 0], sizes = [1, 256], strides = [1, 1]} : vector<32x256xf32> to vector<1x256xf32>
    %231 = vector.broadcast %230 : vector<1x256xf32> to vector<32x256xf32>
    %232 = arith.mulf %229, %231 : vector<32x256xf32>
    %233 = arith.addf %227, %232 : vector<32x256xf32>
    %c1248 = arith.constant 1248 : index
    %c0_42 = arith.constant 0 : index
    %234 = vector.load %arg2[%c1248, %c0_42] : memref<2128x256xbf16, #tpu.memory_space<vmem>>, vector<32x256xbf16>
    %235 = arith.extf %234 : vector<32x256xbf16> to vector<32x256xf32>
    %236 = vector.extract_strided_slice %99 {offsets = [22, 0], sizes = [1, 256], strides = [1, 1]} : vector<32x256xf32> to vector<1x256xf32>
    %237 = vector.broadcast %236 : vector<1x256xf32> to vector<32x256xf32>
    %238 = arith.mulf %235, %237 : vector<32x256xf32>
    %239 = arith.addf %233, %238 : vector<32x256xf32>
    %c1280 = arith.constant 1280 : index
    %c0_43 = arith.constant 0 : index
    %240 = vector.load %arg2[%c1280, %c0_43] : memref<2128x256xbf16, #tpu.memory_space<vmem>>, vector<32x256xbf16>
    %241 = arith.extf %240 : vector<32x256xbf16> to vector<32x256xf32>
    %242 = vector.extract_strided_slice %99 {offsets = [23, 0], sizes = [1, 256], strides = [1, 1]} : vector<32x256xf32> to vector<1x256xf32>
    %243 = vector.broadcast %242 : vector<1x256xf32> to vector<32x256xf32>
    %244 = arith.mulf %241, %243 : vector<32x256xf32>
    %245 = arith.addf %239, %244 : vector<32x256xf32>
    %c1312 = arith.constant 1312 : index
    %c0_44 = arith.constant 0 : index
    %246 = vector.load %arg2[%c1312, %c0_44] : memref<2128x256xbf16, #tpu.memory_space<vmem>>, vector<32x256xbf16>
    %247 = arith.extf %246 : vector<32x256xbf16> to vector<32x256xf32>
    %248 = vector.extract_strided_slice %99 {offsets = [24, 0], sizes = [1, 256], strides = [1, 1]} : vector<32x256xf32> to vector<1x256xf32>
    %249 = vector.broadcast %248 : vector<1x256xf32> to vector<32x256xf32>
    %250 = arith.mulf %247, %249 : vector<32x256xf32>
    %251 = arith.addf %245, %250 : vector<32x256xf32>
    %c1344 = arith.constant 1344 : index
    %c0_45 = arith.constant 0 : index
    %252 = vector.load %arg2[%c1344, %c0_45] : memref<2128x256xbf16, #tpu.memory_space<vmem>>, vector<32x256xbf16>
    %253 = arith.extf %252 : vector<32x256xbf16> to vector<32x256xf32>
    %254 = vector.extract_strided_slice %99 {offsets = [25, 0], sizes = [1, 256], strides = [1, 1]} : vector<32x256xf32> to vector<1x256xf32>
    %255 = vector.broadcast %254 : vector<1x256xf32> to vector<32x256xf32>
    %256 = arith.mulf %253, %255 : vector<32x256xf32>
    %257 = arith.addf %251, %256 : vector<32x256xf32>
    %c1376 = arith.constant 1376 : index
    %c0_46 = arith.constant 0 : index
    %258 = vector.load %arg2[%c1376, %c0_46] : memref<2128x256xbf16, #tpu.memory_space<vmem>>, vector<32x256xbf16>
    %259 = arith.extf %258 : vector<32x256xbf16> to vector<32x256xf32>
    %260 = vector.extract_strided_slice %99 {offsets = [26, 0], sizes = [1, 256], strides = [1, 1]} : vector<32x256xf32> to vector<1x256xf32>
    %261 = vector.broadcast %260 : vector<1x256xf32> to vector<32x256xf32>
    %262 = arith.mulf %259, %261 : vector<32x256xf32>
    %263 = arith.addf %257, %262 : vector<32x256xf32>
    %c1408 = arith.constant 1408 : index
    %c0_47 = arith.constant 0 : index
    %264 = vector.load %arg2[%c1408, %c0_47] : memref<2128x256xbf16, #tpu.memory_space<vmem>>, vector<32x256xbf16>
    %265 = arith.extf %264 : vector<32x256xbf16> to vector<32x256xf32>
    %266 = vector.extract_strided_slice %99 {offsets = [27, 0], sizes = [1, 256], strides = [1, 1]} : vector<32x256xf32> to vector<1x256xf32>
    %267 = vector.broadcast %266 : vector<1x256xf32> to vector<32x256xf32>
    %268 = arith.mulf %265, %267 : vector<32x256xf32>
    %269 = arith.addf %263, %268 : vector<32x256xf32>
    %c1440 = arith.constant 1440 : index
    %c0_48 = arith.constant 0 : index
    %270 = vector.load %arg2[%c1440, %c0_48] : memref<2128x256xbf16, #tpu.memory_space<vmem>>, vector<32x256xbf16>
    %271 = arith.extf %270 : vector<32x256xbf16> to vector<32x256xf32>
    %272 = vector.extract_strided_slice %99 {offsets = [28, 0], sizes = [1, 256], strides = [1, 1]} : vector<32x256xf32> to vector<1x256xf32>
    %273 = vector.broadcast %272 : vector<1x256xf32> to vector<32x256xf32>
    %274 = arith.mulf %271, %273 : vector<32x256xf32>
    %275 = arith.addf %269, %274 : vector<32x256xf32>
    %c1472 = arith.constant 1472 : index
    %c0_49 = arith.constant 0 : index
    %276 = vector.load %arg2[%c1472, %c0_49] : memref<2128x256xbf16, #tpu.memory_space<vmem>>, vector<32x256xbf16>
    %277 = arith.extf %276 : vector<32x256xbf16> to vector<32x256xf32>
    %278 = vector.extract_strided_slice %99 {offsets = [29, 0], sizes = [1, 256], strides = [1, 1]} : vector<32x256xf32> to vector<1x256xf32>
    %279 = vector.broadcast %278 : vector<1x256xf32> to vector<32x256xf32>
    %280 = arith.mulf %277, %279 : vector<32x256xf32>
    %281 = arith.addf %275, %280 : vector<32x256xf32>
    %c1504 = arith.constant 1504 : index
    %c0_50 = arith.constant 0 : index
    %282 = vector.load %arg2[%c1504, %c0_50] : memref<2128x256xbf16, #tpu.memory_space<vmem>>, vector<32x256xbf16>
    %283 = arith.extf %282 : vector<32x256xbf16> to vector<32x256xf32>
    %284 = vector.extract_strided_slice %99 {offsets = [30, 0], sizes = [1, 256], strides = [1, 1]} : vector<32x256xf32> to vector<1x256xf32>
    %285 = vector.broadcast %284 : vector<1x256xf32> to vector<32x256xf32>
    %286 = arith.mulf %283, %285 : vector<32x256xf32>
    %287 = arith.addf %281, %286 : vector<32x256xf32>
    %c1536 = arith.constant 1536 : index
    %c0_51 = arith.constant 0 : index
    %288 = vector.load %arg2[%c1536, %c0_51] : memref<2128x256xbf16, #tpu.memory_space<vmem>>, vector<32x256xbf16>
    %289 = arith.extf %288 : vector<32x256xbf16> to vector<32x256xf32>
    %290 = vector.extract_strided_slice %99 {offsets = [31, 0], sizes = [1, 256], strides = [1, 1]} : vector<32x256xf32> to vector<1x256xf32>
    %291 = vector.broadcast %290 : vector<1x256xf32> to vector<32x256xf32>
    %292 = arith.mulf %289, %291 : vector<32x256xf32>
    %293 = arith.addf %287, %292 : vector<32x256xf32>
    %294 = math.tanh %293 : vector<32x256xf32>
    %c2112 = arith.constant 2112 : index
    %c0_52 = arith.constant 0 : index
    %295 = vector.load %arg2[%c2112, %c0_52] : memref<2128x256xbf16, #tpu.memory_space<vmem>>, vector<16x256xbf16>
    %296 = arith.extf %295 : vector<16x256xbf16> to vector<16x256xf32>
    %c1600 = arith.constant 1600 : index
    %c0_53 = arith.constant 0 : index
    %297 = vector.load %arg2[%c1600, %c0_53] : memref<2128x256xbf16, #tpu.memory_space<vmem>>, vector<16x256xbf16>
    %298 = arith.extf %297 : vector<16x256xbf16> to vector<16x256xf32>
    %299 = vector.extract_strided_slice %294 {offsets = [0, 0], sizes = [1, 256], strides = [1, 1]} : vector<32x256xf32> to vector<1x256xf32>
    %300 = vector.broadcast %299 : vector<1x256xf32> to vector<16x256xf32>
    %301 = arith.mulf %298, %300 : vector<16x256xf32>
    %302 = arith.addf %296, %301 : vector<16x256xf32>
    %c1616 = arith.constant 1616 : index
    %c0_54 = arith.constant 0 : index
    %303 = vector.load %arg2[%c1616, %c0_54] : memref<2128x256xbf16, #tpu.memory_space<vmem>>, vector<16x256xbf16>
    %304 = arith.extf %303 : vector<16x256xbf16> to vector<16x256xf32>
    %305 = vector.extract_strided_slice %294 {offsets = [1, 0], sizes = [1, 256], strides = [1, 1]} : vector<32x256xf32> to vector<1x256xf32>
    %306 = vector.broadcast %305 : vector<1x256xf32> to vector<16x256xf32>
    %307 = arith.mulf %304, %306 : vector<16x256xf32>
    %308 = arith.addf %302, %307 : vector<16x256xf32>
    %c1632 = arith.constant 1632 : index
    %c0_55 = arith.constant 0 : index
    %309 = vector.load %arg2[%c1632, %c0_55] : memref<2128x256xbf16, #tpu.memory_space<vmem>>, vector<16x256xbf16>
    %310 = arith.extf %309 : vector<16x256xbf16> to vector<16x256xf32>
    %311 = vector.extract_strided_slice %294 {offsets = [2, 0], sizes = [1, 256], strides = [1, 1]} : vector<32x256xf32> to vector<1x256xf32>
    %312 = vector.broadcast %311 : vector<1x256xf32> to vector<16x256xf32>
    %313 = arith.mulf %310, %312 : vector<16x256xf32>
    %314 = arith.addf %308, %313 : vector<16x256xf32>
    %c1648 = arith.constant 1648 : index
    %c0_56 = arith.constant 0 : index
    %315 = vector.load %arg2[%c1648, %c0_56] : memref<2128x256xbf16, #tpu.memory_space<vmem>>, vector<16x256xbf16>
    %316 = arith.extf %315 : vector<16x256xbf16> to vector<16x256xf32>
    %317 = vector.extract_strided_slice %294 {offsets = [3, 0], sizes = [1, 256], strides = [1, 1]} : vector<32x256xf32> to vector<1x256xf32>
    %318 = vector.broadcast %317 : vector<1x256xf32> to vector<16x256xf32>
    %319 = arith.mulf %316, %318 : vector<16x256xf32>
    %320 = arith.addf %314, %319 : vector<16x256xf32>
    %c1664 = arith.constant 1664 : index
    %c0_57 = arith.constant 0 : index
    %321 = vector.load %arg2[%c1664, %c0_57] : memref<2128x256xbf16, #tpu.memory_space<vmem>>, vector<16x256xbf16>
    %322 = arith.extf %321 : vector<16x256xbf16> to vector<16x256xf32>
    %323 = vector.extract_strided_slice %294 {offsets = [4, 0], sizes = [1, 256], strides = [1, 1]} : vector<32x256xf32> to vector<1x256xf32>
    %324 = vector.broadcast %323 : vector<1x256xf32> to vector<16x256xf32>
    %325 = arith.mulf %322, %324 : vector<16x256xf32>
    %326 = arith.addf %320, %325 : vector<16x256xf32>
    %c1680 = arith.constant 1680 : index
    %c0_58 = arith.constant 0 : index
    %327 = vector.load %arg2[%c1680, %c0_58] : memref<2128x256xbf16, #tpu.memory_space<vmem>>, vector<16x256xbf16>
    %328 = arith.extf %327 : vector<16x256xbf16> to vector<16x256xf32>
    %329 = vector.extract_strided_slice %294 {offsets = [5, 0], sizes = [1, 256], strides = [1, 1]} : vector<32x256xf32> to vector<1x256xf32>
    %330 = vector.broadcast %329 : vector<1x256xf32> to vector<16x256xf32>
    %331 = arith.mulf %328, %330 : vector<16x256xf32>
    %332 = arith.addf %326, %331 : vector<16x256xf32>
    %c1696 = arith.constant 1696 : index
    %c0_59 = arith.constant 0 : index
    %333 = vector.load %arg2[%c1696, %c0_59] : memref<2128x256xbf16, #tpu.memory_space<vmem>>, vector<16x256xbf16>
    %334 = arith.extf %333 : vector<16x256xbf16> to vector<16x256xf32>
    %335 = vector.extract_strided_slice %294 {offsets = [6, 0], sizes = [1, 256], strides = [1, 1]} : vector<32x256xf32> to vector<1x256xf32>
    %336 = vector.broadcast %335 : vector<1x256xf32> to vector<16x256xf32>
    %337 = arith.mulf %334, %336 : vector<16x256xf32>
    %338 = arith.addf %332, %337 : vector<16x256xf32>
    %c1712 = arith.constant 1712 : index
    %c0_60 = arith.constant 0 : index
    %339 = vector.load %arg2[%c1712, %c0_60] : memref<2128x256xbf16, #tpu.memory_space<vmem>>, vector<16x256xbf16>
    %340 = arith.extf %339 : vector<16x256xbf16> to vector<16x256xf32>
    %341 = vector.extract_strided_slice %294 {offsets = [7, 0], sizes = [1, 256], strides = [1, 1]} : vector<32x256xf32> to vector<1x256xf32>
    %342 = vector.broadcast %341 : vector<1x256xf32> to vector<16x256xf32>
    %343 = arith.mulf %340, %342 : vector<16x256xf32>
    %344 = arith.addf %338, %343 : vector<16x256xf32>
    %c1728 = arith.constant 1728 : index
    %c0_61 = arith.constant 0 : index
    %345 = vector.load %arg2[%c1728, %c0_61] : memref<2128x256xbf16, #tpu.memory_space<vmem>>, vector<16x256xbf16>
    %346 = arith.extf %345 : vector<16x256xbf16> to vector<16x256xf32>
    %347 = vector.extract_strided_slice %294 {offsets = [8, 0], sizes = [1, 256], strides = [1, 1]} : vector<32x256xf32> to vector<1x256xf32>
    %348 = vector.broadcast %347 : vector<1x256xf32> to vector<16x256xf32>
    %349 = arith.mulf %346, %348 : vector<16x256xf32>
    %350 = arith.addf %344, %349 : vector<16x256xf32>
    %c1744 = arith.constant 1744 : index
    %c0_62 = arith.constant 0 : index
    %351 = vector.load %arg2[%c1744, %c0_62] : memref<2128x256xbf16, #tpu.memory_space<vmem>>, vector<16x256xbf16>
    %352 = arith.extf %351 : vector<16x256xbf16> to vector<16x256xf32>
    %353 = vector.extract_strided_slice %294 {offsets = [9, 0], sizes = [1, 256], strides = [1, 1]} : vector<32x256xf32> to vector<1x256xf32>
    %354 = vector.broadcast %353 : vector<1x256xf32> to vector<16x256xf32>
    %355 = arith.mulf %352, %354 : vector<16x256xf32>
    %356 = arith.addf %350, %355 : vector<16x256xf32>
    %c1760 = arith.constant 1760 : index
    %c0_63 = arith.constant 0 : index
    %357 = vector.load %arg2[%c1760, %c0_63] : memref<2128x256xbf16, #tpu.memory_space<vmem>>, vector<16x256xbf16>
    %358 = arith.extf %357 : vector<16x256xbf16> to vector<16x256xf32>
    %359 = vector.extract_strided_slice %294 {offsets = [10, 0], sizes = [1, 256], strides = [1, 1]} : vector<32x256xf32> to vector<1x256xf32>
    %360 = vector.broadcast %359 : vector<1x256xf32> to vector<16x256xf32>
    %361 = arith.mulf %358, %360 : vector<16x256xf32>
    %362 = arith.addf %356, %361 : vector<16x256xf32>
    %c1776 = arith.constant 1776 : index
    %c0_64 = arith.constant 0 : index
    %363 = vector.load %arg2[%c1776, %c0_64] : memref<2128x256xbf16, #tpu.memory_space<vmem>>, vector<16x256xbf16>
    %364 = arith.extf %363 : vector<16x256xbf16> to vector<16x256xf32>
    %365 = vector.extract_strided_slice %294 {offsets = [11, 0], sizes = [1, 256], strides = [1, 1]} : vector<32x256xf32> to vector<1x256xf32>
    %366 = vector.broadcast %365 : vector<1x256xf32> to vector<16x256xf32>
    %367 = arith.mulf %364, %366 : vector<16x256xf32>
    %368 = arith.addf %362, %367 : vector<16x256xf32>
    %c1792 = arith.constant 1792 : index
    %c0_65 = arith.constant 0 : index
    %369 = vector.load %arg2[%c1792, %c0_65] : memref<2128x256xbf16, #tpu.memory_space<vmem>>, vector<16x256xbf16>
    %370 = arith.extf %369 : vector<16x256xbf16> to vector<16x256xf32>
    %371 = vector.extract_strided_slice %294 {offsets = [12, 0], sizes = [1, 256], strides = [1, 1]} : vector<32x256xf32> to vector<1x256xf32>
    %372 = vector.broadcast %371 : vector<1x256xf32> to vector<16x256xf32>
    %373 = arith.mulf %370, %372 : vector<16x256xf32>
    %374 = arith.addf %368, %373 : vector<16x256xf32>
    %c1808 = arith.constant 1808 : index
    %c0_66 = arith.constant 0 : index
    %375 = vector.load %arg2[%c1808, %c0_66] : memref<2128x256xbf16, #tpu.memory_space<vmem>>, vector<16x256xbf16>
    %376 = arith.extf %375 : vector<16x256xbf16> to vector<16x256xf32>
    %377 = vector.extract_strided_slice %294 {offsets = [13, 0], sizes = [1, 256], strides = [1, 1]} : vector<32x256xf32> to vector<1x256xf32>
    %378 = vector.broadcast %377 : vector<1x256xf32> to vector<16x256xf32>
    %379 = arith.mulf %376, %378 : vector<16x256xf32>
    %380 = arith.addf %374, %379 : vector<16x256xf32>
    %c1824 = arith.constant 1824 : index
    %c0_67 = arith.constant 0 : index
    %381 = vector.load %arg2[%c1824, %c0_67] : memref<2128x256xbf16, #tpu.memory_space<vmem>>, vector<16x256xbf16>
    %382 = arith.extf %381 : vector<16x256xbf16> to vector<16x256xf32>
    %383 = vector.extract_strided_slice %294 {offsets = [14, 0], sizes = [1, 256], strides = [1, 1]} : vector<32x256xf32> to vector<1x256xf32>
    %384 = vector.broadcast %383 : vector<1x256xf32> to vector<16x256xf32>
    %385 = arith.mulf %382, %384 : vector<16x256xf32>
    %386 = arith.addf %380, %385 : vector<16x256xf32>
    %c1840 = arith.constant 1840 : index
    %c0_68 = arith.constant 0 : index
    %387 = vector.load %arg2[%c1840, %c0_68] : memref<2128x256xbf16, #tpu.memory_space<vmem>>, vector<16x256xbf16>
    %388 = arith.extf %387 : vector<16x256xbf16> to vector<16x256xf32>
    %389 = vector.extract_strided_slice %294 {offsets = [15, 0], sizes = [1, 256], strides = [1, 1]} : vector<32x256xf32> to vector<1x256xf32>
    %390 = vector.broadcast %389 : vector<1x256xf32> to vector<16x256xf32>
    %391 = arith.mulf %388, %390 : vector<16x256xf32>
    %392 = arith.addf %386, %391 : vector<16x256xf32>
    %c1856 = arith.constant 1856 : index
    %c0_69 = arith.constant 0 : index
    %393 = vector.load %arg2[%c1856, %c0_69] : memref<2128x256xbf16, #tpu.memory_space<vmem>>, vector<16x256xbf16>
    %394 = arith.extf %393 : vector<16x256xbf16> to vector<16x256xf32>
    %395 = vector.extract_strided_slice %294 {offsets = [16, 0], sizes = [1, 256], strides = [1, 1]} : vector<32x256xf32> to vector<1x256xf32>
    %396 = vector.broadcast %395 : vector<1x256xf32> to vector<16x256xf32>
    %397 = arith.mulf %394, %396 : vector<16x256xf32>
    %398 = arith.addf %392, %397 : vector<16x256xf32>
    %c1872 = arith.constant 1872 : index
    %c0_70 = arith.constant 0 : index
    %399 = vector.load %arg2[%c1872, %c0_70] : memref<2128x256xbf16, #tpu.memory_space<vmem>>, vector<16x256xbf16>
    %400 = arith.extf %399 : vector<16x256xbf16> to vector<16x256xf32>
    %401 = vector.extract_strided_slice %294 {offsets = [17, 0], sizes = [1, 256], strides = [1, 1]} : vector<32x256xf32> to vector<1x256xf32>
    %402 = vector.broadcast %401 : vector<1x256xf32> to vector<16x256xf32>
    %403 = arith.mulf %400, %402 : vector<16x256xf32>
    %404 = arith.addf %398, %403 : vector<16x256xf32>
    %c1888 = arith.constant 1888 : index
    %c0_71 = arith.constant 0 : index
    %405 = vector.load %arg2[%c1888, %c0_71] : memref<2128x256xbf16, #tpu.memory_space<vmem>>, vector<16x256xbf16>
    %406 = arith.extf %405 : vector<16x256xbf16> to vector<16x256xf32>
    %407 = vector.extract_strided_slice %294 {offsets = [18, 0], sizes = [1, 256], strides = [1, 1]} : vector<32x256xf32> to vector<1x256xf32>
    %408 = vector.broadcast %407 : vector<1x256xf32> to vector<16x256xf32>
    %409 = arith.mulf %406, %408 : vector<16x256xf32>
    %410 = arith.addf %404, %409 : vector<16x256xf32>
    %c1904 = arith.constant 1904 : index
    %c0_72 = arith.constant 0 : index
    %411 = vector.load %arg2[%c1904, %c0_72] : memref<2128x256xbf16, #tpu.memory_space<vmem>>, vector<16x256xbf16>
    %412 = arith.extf %411 : vector<16x256xbf16> to vector<16x256xf32>
    %413 = vector.extract_strided_slice %294 {offsets = [19, 0], sizes = [1, 256], strides = [1, 1]} : vector<32x256xf32> to vector<1x256xf32>
    %414 = vector.broadcast %413 : vector<1x256xf32> to vector<16x256xf32>
    %415 = arith.mulf %412, %414 : vector<16x256xf32>
    %416 = arith.addf %410, %415 : vector<16x256xf32>
    %c1920 = arith.constant 1920 : index
    %c0_73 = arith.constant 0 : index
    %417 = vector.load %arg2[%c1920, %c0_73] : memref<2128x256xbf16, #tpu.memory_space<vmem>>, vector<16x256xbf16>
    %418 = arith.extf %417 : vector<16x256xbf16> to vector<16x256xf32>
    %419 = vector.extract_strided_slice %294 {offsets = [20, 0], sizes = [1, 256], strides = [1, 1]} : vector<32x256xf32> to vector<1x256xf32>
    %420 = vector.broadcast %419 : vector<1x256xf32> to vector<16x256xf32>
    %421 = arith.mulf %418, %420 : vector<16x256xf32>
    %422 = arith.addf %416, %421 : vector<16x256xf32>
    %c1936 = arith.constant 1936 : index
    %c0_74 = arith.constant 0 : index
    %423 = vector.load %arg2[%c1936, %c0_74] : memref<2128x256xbf16, #tpu.memory_space<vmem>>, vector<16x256xbf16>
    %424 = arith.extf %423 : vector<16x256xbf16> to vector<16x256xf32>
    %425 = vector.extract_strided_slice %294 {offsets = [21, 0], sizes = [1, 256], strides = [1, 1]} : vector<32x256xf32> to vector<1x256xf32>
    %426 = vector.broadcast %425 : vector<1x256xf32> to vector<16x256xf32>
    %427 = arith.mulf %424, %426 : vector<16x256xf32>
    %428 = arith.addf %422, %427 : vector<16x256xf32>
    %c1952 = arith.constant 1952 : index
    %c0_75 = arith.constant 0 : index
    %429 = vector.load %arg2[%c1952, %c0_75] : memref<2128x256xbf16, #tpu.memory_space<vmem>>, vector<16x256xbf16>
    %430 = arith.extf %429 : vector<16x256xbf16> to vector<16x256xf32>
    %431 = vector.extract_strided_slice %294 {offsets = [22, 0], sizes = [1, 256], strides = [1, 1]} : vector<32x256xf32> to vector<1x256xf32>
    %432 = vector.broadcast %431 : vector<1x256xf32> to vector<16x256xf32>
    %433 = arith.mulf %430, %432 : vector<16x256xf32>
    %434 = arith.addf %428, %433 : vector<16x256xf32>
    %c1968 = arith.constant 1968 : index
    %c0_76 = arith.constant 0 : index
    %435 = vector.load %arg2[%c1968, %c0_76] : memref<2128x256xbf16, #tpu.memory_space<vmem>>, vector<16x256xbf16>
    %436 = arith.extf %435 : vector<16x256xbf16> to vector<16x256xf32>
    %437 = vector.extract_strided_slice %294 {offsets = [23, 0], sizes = [1, 256], strides = [1, 1]} : vector<32x256xf32> to vector<1x256xf32>
    %438 = vector.broadcast %437 : vector<1x256xf32> to vector<16x256xf32>
    %439 = arith.mulf %436, %438 : vector<16x256xf32>
    %440 = arith.addf %434, %439 : vector<16x256xf32>
    %c1984 = arith.constant 1984 : index
    %c0_77 = arith.constant 0 : index
    %441 = vector.load %arg2[%c1984, %c0_77] : memref<2128x256xbf16, #tpu.memory_space<vmem>>, vector<16x256xbf16>
    %442 = arith.extf %441 : vector<16x256xbf16> to vector<16x256xf32>
    %443 = vector.extract_strided_slice %294 {offsets = [24, 0], sizes = [1, 256], strides = [1, 1]} : vector<32x256xf32> to vector<1x256xf32>
    %444 = vector.broadcast %443 : vector<1x256xf32> to vector<16x256xf32>
    %445 = arith.mulf %442, %444 : vector<16x256xf32>
    %446 = arith.addf %440, %445 : vector<16x256xf32>
    %c2000 = arith.constant 2000 : index
    %c0_78 = arith.constant 0 : index
    %447 = vector.load %arg2[%c2000, %c0_78] : memref<2128x256xbf16, #tpu.memory_space<vmem>>, vector<16x256xbf16>
    %448 = arith.extf %447 : vector<16x256xbf16> to vector<16x256xf32>
    %449 = vector.extract_strided_slice %294 {offsets = [25, 0], sizes = [1, 256], strides = [1, 1]} : vector<32x256xf32> to vector<1x256xf32>
    %450 = vector.broadcast %449 : vector<1x256xf32> to vector<16x256xf32>
    %451 = arith.mulf %448, %450 : vector<16x256xf32>
    %452 = arith.addf %446, %451 : vector<16x256xf32>
    %c2016 = arith.constant 2016 : index
    %c0_79 = arith.constant 0 : index
    %453 = vector.load %arg2[%c2016, %c0_79] : memref<2128x256xbf16, #tpu.memory_space<vmem>>, vector<16x256xbf16>
    %454 = arith.extf %453 : vector<16x256xbf16> to vector<16x256xf32>
    %455 = vector.extract_strided_slice %294 {offsets = [26, 0], sizes = [1, 256], strides = [1, 1]} : vector<32x256xf32> to vector<1x256xf32>
    %456 = vector.broadcast %455 : vector<1x256xf32> to vector<16x256xf32>
    %457 = arith.mulf %454, %456 : vector<16x256xf32>
    %458 = arith.addf %452, %457 : vector<16x256xf32>
    %c2032 = arith.constant 2032 : index
    %c0_80 = arith.constant 0 : index
    %459 = vector.load %arg2[%c2032, %c0_80] : memref<2128x256xbf16, #tpu.memory_space<vmem>>, vector<16x256xbf16>
    %460 = arith.extf %459 : vector<16x256xbf16> to vector<16x256xf32>
    %461 = vector.extract_strided_slice %294 {offsets = [27, 0], sizes = [1, 256], strides = [1, 1]} : vector<32x256xf32> to vector<1x256xf32>
    %462 = vector.broadcast %461 : vector<1x256xf32> to vector<16x256xf32>
    %463 = arith.mulf %460, %462 : vector<16x256xf32>
    %464 = arith.addf %458, %463 : vector<16x256xf32>
    %c2048 = arith.constant 2048 : index
    %c0_81 = arith.constant 0 : index
    %465 = vector.load %arg2[%c2048, %c0_81] : memref<2128x256xbf16, #tpu.memory_space<vmem>>, vector<16x256xbf16>
    %466 = arith.extf %465 : vector<16x256xbf16> to vector<16x256xf32>
    %467 = vector.extract_strided_slice %294 {offsets = [28, 0], sizes = [1, 256], strides = [1, 1]} : vector<32x256xf32> to vector<1x256xf32>
    %468 = vector.broadcast %467 : vector<1x256xf32> to vector<16x256xf32>
    %469 = arith.mulf %466, %468 : vector<16x256xf32>
    %470 = arith.addf %464, %469 : vector<16x256xf32>
    %c2064 = arith.constant 2064 : index
    %c0_82 = arith.constant 0 : index
    %471 = vector.load %arg2[%c2064, %c0_82] : memref<2128x256xbf16, #tpu.memory_space<vmem>>, vector<16x256xbf16>
    %472 = arith.extf %471 : vector<16x256xbf16> to vector<16x256xf32>
    %473 = vector.extract_strided_slice %294 {offsets = [29, 0], sizes = [1, 256], strides = [1, 1]} : vector<32x256xf32> to vector<1x256xf32>
    %474 = vector.broadcast %473 : vector<1x256xf32> to vector<16x256xf32>
    %475 = arith.mulf %472, %474 : vector<16x256xf32>
    %476 = arith.addf %470, %475 : vector<16x256xf32>
    %c2080 = arith.constant 2080 : index
    %c0_83 = arith.constant 0 : index
    %477 = vector.load %arg2[%c2080, %c0_83] : memref<2128x256xbf16, #tpu.memory_space<vmem>>, vector<16x256xbf16>
    %478 = arith.extf %477 : vector<16x256xbf16> to vector<16x256xf32>
    %479 = vector.extract_strided_slice %294 {offsets = [30, 0], sizes = [1, 256], strides = [1, 1]} : vector<32x256xf32> to vector<1x256xf32>
    %480 = vector.broadcast %479 : vector<1x256xf32> to vector<16x256xf32>
    %481 = arith.mulf %478, %480 : vector<16x256xf32>
    %482 = arith.addf %476, %481 : vector<16x256xf32>
    %c2096 = arith.constant 2096 : index
    %c0_84 = arith.constant 0 : index
    %483 = vector.load %arg2[%c2096, %c0_84] : memref<2128x256xbf16, #tpu.memory_space<vmem>>, vector<16x256xbf16>
    %484 = arith.extf %483 : vector<16x256xbf16> to vector<16x256xf32>
    %485 = vector.extract_strided_slice %294 {offsets = [31, 0], sizes = [1, 256], strides = [1, 1]} : vector<32x256xf32> to vector<1x256xf32>
    %486 = vector.broadcast %485 : vector<1x256xf32> to vector<16x256xf32>
    %487 = arith.mulf %484, %486 : vector<16x256xf32>
    %488 = arith.addf %482, %487 : vector<16x256xf32>
    %c0_85 = arith.constant 0 : index
    %c0_86 = arith.constant 0 : index
    %489 = vector.load %arg3[%c0_85, %c0_86] : memref<16x256xf32, #tpu.memory_space<vmem>>, vector<16x256xf32>
    tpu.vector_store %arg3[%c0_85, %c0_86], %488 {strides = array<i32>} : memref<16x256xf32, #tpu.memory_space<vmem>>, vector<16x256xf32>,
    return
  }
  func.func @transform_0(%arg0: i32) -> (i32, i32) {
    %c0_i32 = arith.constant 0 : i32
    %c0_i32_0 = arith.constant 0 : i32
    return %c0_i32, %arg0 : i32, i32
  }
  func.func @transform_1(%arg0: i32) -> (i32, i32) {
    %c0_i32 = arith.constant 0 : i32
    %c0_i32_0 = arith.constant 0 : i32
    return %c0_i32, %arg0 : i32, i32
  }
  func.func @transform_2(%arg0: i32) -> (i32, i32) {
    %c0_i32 = arith.constant 0 : i32
    %c0_i32_0 = arith.constant 0 : i32
    return %c0_i32, %arg0 : i32, i32
  }
}

</mosaic_0001>

<llo_original>
// kernel: tpu_custom_call.1
$region0: #{tpu_custom_call.1}
  #allocation0 [shape = 'u32[]', space=smem, size = 0x4, offset = 0x4, fixed_abs, tag = 'smem constant byte address 0x4 - core index']
  #allocation1 [shape = 'u32[144,128]{1,0:T(1,128)}', space=vmem, size = 0x12000, scoped, tag = 'internal scratch']
  %s0 = inlined_call_operand.hbm [shape: f32[16,512], index: 0, kind: input, shape index: {}]
  %s1 = inlined_call_operand.hbm [shape: bf16[2128,512], index: 1, kind: input, shape index: {}]
  %s2 = inlined_call_operand.hbm [shape: f32[16,512], index: 2, kind: output, shape index: {}]
  %s3 = sld [smem:[#allocation0]]
  $region49: #{tpu_custom_call.1} parent=0
    _
  %s5 = ssub.s32 1, %s3
  %s6 = scalar_select 0, %s5, %s3
  $region1: #{tpu_custom_call.1} parent=0
    #allocation2 [shape = 'u8[32768]{0}', space=vmem, size = 0x8000, scoped, tag = 'input window, operand 0']
    #allocation3 [shape = 's32[2]{0}', space=sflag, size = 0x8, scoped, tag = 'scoped memory for tpu_custom_call.1']
    #allocation4 [shape = 's32[2]{0}', space=sflag, size = 0x8, scoped, tag = 'scoped memory for tpu_custom_call.1']
    #allocation5 [shape = 'u8[2179072]{0}', space=vmem, size = 0x214000, scoped, tag = 'input window, operand 1']
    #allocation6 [shape = 's32[2]{0}', space=sflag, size = 0x8, scoped, tag = 'scoped memory for tpu_custom_call.1']
    #allocation7 [shape = 'u8[32768]{0}', space=vmem, size = 0x8000, scoped, tag = 'output window, operand 0']
    %7 = vsyncpa [#allocation3], 0
    %s8 = scalar_lea.sflag [#allocation3], 1
    %9 = vsyncpa %s8, 0
    %10 = vsyncpa [#allocation6], 0
    %s11 = scalar_lea.sflag [#allocation6], 1
    %12 = vsyncpa %s11, 0
    %13 = vsyncpa [#allocation4], 0
    %s14 = scalar_lea.sflag [#allocation4], 1
    %15 = vsyncpa %s14, 0
    loop: start=0, step=1, limit=4
    $region2: #{tpu_custom_call.1} parent=1 // loop_pre_header
      _
    $region3: #{tpu_custom_call.1} parent=1 // loop_header
      %s17 = sphi 0, %s21
      %p18 = scmp.ge.s32.totalorder %s17, 4
      %s27 = sphi 0, %s29
      %s30 = sphi 0, %s27
      %s31 = sphi 0, %s30
      %s47 = sphi 0, %s31
      %s53 = sphi 0, %s55
      %s56 = sphi 0, %s53
      %s57 = sphi 0, %s56
      %s73 = sphi 0, %s57
      %s79 = sphi 0, %s81
      %s82 = sphi 0, %s79
      %s83 = sphi 0, %s82
      %s99 = sphi 0, %s83
    $region4: #{tpu_custom_call.1} parent=1 // loop_header_branch
      %20 = sbr.rel (%p18) target = $region8
    $region5: #{tpu_custom_call.1} parent=1 // loop_body
      %s22 = ssub.s32 %s17, 1
      %s23 = ssub.s32 %s17, 2
      %s24 = sadd.s32 %s17, 1
      %s25 = ssub.s32 %s17, %s24
      %p26 = scmp.eq.s32.totalorder %s25, 0
      %s28 = sadd.s32 %s27, 1
      %s29 = scalar_select %p26, %s27, %s28
      %p32 = pneg %p26
      %p33 = scmp.eq.s32.totalorder %s17, 1
      %p34 = por %p32, %p33
      %p35 = scmp.ne.s32.totalorder %s27, %s30
      %p36 = scmp.eq.s32.totalorder %s17, 0
      %p37 = por %p35, %p36
      %p38 = scmp.ne.s32.totalorder %s27, %s30
      %p39 = scmp.eq.s32.totalorder %s22, 1
      %p40 = por %p38, %p39
      %p41 = scmp.ne.s32.totalorder %s30, %s31
      %p42 = scmp.eq.s32.totalorder %s22, 0
      %p43 = por %p41, %p42
      %p44 = scmp.ne.s32.totalorder %s30, %s31
      %p45 = scmp.eq.s32.totalorder %s23, 1
      %p46 = por %p44, %p45
      %p48 = scmp.ne.s32.totalorder %s31, %s47
      %p49 = scmp.eq.s32.totalorder %s23, 0
      %p50 = por %p48, %p49
      %s51 = ssub.s32 %s17, %s24
      %p52 = scmp.eq.s32.totalorder %s51, 0
      %s54 = sadd.s32 %s53, 1
      %s55 = scalar_select %p52, %s53, %s54
      %p58 = pneg %p52
      %p59 = scmp.eq.s32.totalorder %s17, 1
      %p60 = por %p58, %p59
      %p61 = scmp.ne.s32.totalorder %s53, %s56
      %p62 = scmp.eq.s32.totalorder %s17, 0
      %p63 = por %p61, %p62
      %p64 = scmp.ne.s32.totalorder %s53, %s56
      %p65 = scmp.eq.s32.totalorder %s22, 1
      %p66 = por %p64, %p65
      %p67 = scmp.ne.s32.totalorder %s56, %s57
      %p68 = scmp.eq.s32.totalorder %s22, 0
      %p69 = por %p67, %p68
      %p70 = scmp.ne.s32.totalorder %s56, %s57
      %p71 = scmp.eq.s32.totalorder %s23, 1
      %p72 = por %p70, %p71
      %p74 = scmp.ne.s32.totalorder %s57, %s73
      %p75 = scmp.eq.s32.totalorder %s23, 0
      %p76 = por %p74, %p75
      %s77 = ssub.s32 %s17, %s24
      %p78 = scmp.eq.s32.totalorder %s77, 0
      %s80 = sadd.s32 %s79, 1
      %s81 = scalar_select %p78, %s79, %s80
      %p84 = pneg %p78
      %p85 = scmp.eq.s32.totalorder %s17, 1
      %p86 = por %p84, %p85
      %p87 = scmp.ne.s32.totalorder %s79, %s82
      %p88 = scmp.eq.s32.totalorder %s17, 0
      %p89 = por %p87, %p88
      %p90 = scmp.ne.s32.totalorder %s79, %s82
      %p91 = scmp.eq.s32.totalorder %s22, 1
      %p92 = por %p90, %p91
      %p93 = scmp.ne.s32.totalorder %s82, %s83
      %p94 = scmp.eq.s32.totalorder %s22, 0
      %p95 = por %p93, %p94
      %p96 = scmp.ne.s32.totalorder %s82, %s83
      %p97 = scmp.eq.s32.totalorder %s23, 1
      %p98 = por %p96, %p97
      %p100 = scmp.ne.s32.totalorder %s83, %s99
      %p101 = scmp.eq.s32.totalorder %s23, 0
      %p102 = por %p100, %p101
      %p103 = scmp.le.s32.totalorder 1, %s17
      %p104 = scmp.lt.s32.totalorder %s17, 3
      %p105 = pnand %p103, %p104
      %p106 = pneg %p105
      // Predicated region
      $region9: #{tpu_custom_call.1} parent=5 // pred_check
        _
      $region10: #{tpu_custom_call.1} parent=5 // pred_check_branch
        %108 = sbr.rel (%p105) target = $region12
      $region11: #{tpu_custom_call.1} parent=5 // pred_region
        %s109 = ssub.s32 %s17, 1
      $region12: #{tpu_custom_call.1} parent=5 // pred_fallthru
        _
      %p110 = scmp.lt.s32.totalorder %s17, 2
      // Predicated region
      $region13: #{tpu_custom_call.1} parent=5 // pred_check
        %p111 = pneg %p110
      $region14: #{tpu_custom_call.1} parent=5 // pred_check_branch
        %113 = sbr.rel (%p111) target = $region16
      $region15: #{tpu_custom_call.1} parent=5 // pred_region
        // Predicated region
        $region17: #{tpu_custom_call.1} parent=15 // pred_check
          %p114 = pneg %p37
        $region18: #{tpu_custom_call.1} parent=15 // pred_check_branch
          %116 = sbr.rel (%p114) target = $region20
        $region19: #{tpu_custom_call.1} parent=15 // pred_region
          %s117 = sand.u32 %s27, 1
          %s118 = scalar_lea.sflag [#allocation3], %s117
          %s119 = sand.u32 %s27, 1
          %s120 = smul.addr %s119, 32
          %s121 = scalar_lea.vmem [#allocation2], %s120
          %s122 = smul.u32 2, %s17
          %s124 = ssub.s32 512, 512
          %125 = vsyncadd %s118, %s124
          %s126 = smul.addr %s122, 128
          %s127 = scalar_lea.hbm %s0, %s126
          %s128 = sshll.u32 %s121, 4
          %s129 = int_to_ptr.vmem [resolvable:$true] %s128
          %134 = dma.hbm_to_vmem [thread:$0]  %s127, 512, %s129, %s118, 512, 256, 16
        $region20: #{tpu_custom_call.1} parent=15 // pred_fallthru
          _
        // Predicated region
        $region21: #{tpu_custom_call.1} parent=15 // pred_check
          %p135 = pneg %p63
        $region22: #{tpu_custom_call.1} parent=15 // pred_check_branch
          %137 = sbr.rel (%p135) target = $region24
        $region23: #{tpu_custom_call.1} parent=15 // pred_region
          %s138 = sand.u32 %s53, 1
          %s139 = scalar_lea.sflag [#allocation6], %s138
          %s140 = sand.u32 %s53, 1
          %s141 = smul.addr %s140, 2128
          %s142 = scalar_lea.vmem [#allocation5], %s141
          %s143 = smul.u32 2, %s17
          %s145 = ssub.s32 34048, 34048
          %146 = vsyncadd %s139, %s145
          %s147 = smul.addr %s143, 64
          %s148 = scalar_lea.hbm %s1, %s147
          %s149 = sshll.u32 %s142, 4
          %s150 = int_to_ptr.vmem [resolvable:$true] %s149
          %155 = dma.hbm_to_vmem [thread:$0]  %s148, 34048, %s150, %s139, 256, 128, 8
        $region24: #{tpu_custom_call.1} parent=15 // pred_fallthru
          _
      $region16: #{tpu_custom_call.1} parent=5 // pred_fallthru
        _
      %p156 = scmp.le.s32.totalorder 1, %s17
      %p157 = scmp.lt.s32.totalorder %s17, 3
      %p158 = pnand %p156, %p157
      %p159 = pneg %p158
      // Predicated region
      $region25: #{tpu_custom_call.1} parent=5 // pred_check
        _
      $region26: #{tpu_custom_call.1} parent=5 // pred_check_branch
        %161 = sbr.rel (%p158) target = $region28
      $region27: #{tpu_custom_call.1} parent=5 // pred_region
        %s162 = ssub.s32 %s17, 1
        %s163 = sand.u32 %s30, 1
        %s164 = scalar_lea.sflag [#allocation3], %s163
        %s165 = sand.u32 %s30, 1
        %s166 = smul.addr %s165, 32
        %s167 = scalar_lea.vmem [#allocation2], %s166
        // Predicated region
        $region29: #{tpu_custom_call.1} parent=27 // pred_check
          %p168 = pneg %p43
        $region30: #{tpu_custom_call.1} parent=27 // pred_check_branch
          %170 = sbr.rel (%p168) target = $region32
        $region31: #{tpu_custom_call.1} parent=27 // pred_region
          %171 = dma.done %s164, 512
        $region32: #{tpu_custom_call.1} parent=27 // pred_fallthru
          _
        %s172 = sand.u32 %s56, 1
        %s173 = scalar_lea.sflag [#allocation6], %s172
        %s174 = sand.u32 %s56, 1
        %s175 = smul.addr %s174, 2128
        %s176 = scalar_lea.vmem [#allocation5], %s175
        // Predicated region
        $region33: #{tpu_custom_call.1} parent=27 // pred_check
          %p177 = pneg %p69
        $region34: #{tpu_custom_call.1} parent=27 // pred_check_branch
          %179 = sbr.rel (%p177) target = $region36
        $region35: #{tpu_custom_call.1} parent=27 // pred_region
          %180 = dma.done %s173, 34048
        $region36: #{tpu_custom_call.1} parent=27 // pred_fallthru
          _
        %s181 = sand.u32 %s30, 1
        %s182 = scalar_lea.sflag [#allocation3], %s181
        %s183 = sand.u32 %s30, 1
        %s184 = smul.addr %s183, 32
        %s185 = scalar_lea.vmem [#allocation2], %s184
        %p186 = pneg %p43
        %p187 = pneg %p40
        %s188 = sand.u32 %s56, 1
        %s189 = scalar_lea.sflag [#allocation6], %s188
        %s190 = sand.u32 %s56, 1
        %s191 = smul.addr %s190, 2128
        %s192 = scalar_lea.vmem [#allocation5], %s191
        %p193 = pneg %p69
        %p194 = pneg %p66
        %p195 = pneg %p95
        %p196 = pneg %p92
        %s197 = sand.u32 %s82, 1
        %s198 = scalar_lea.sflag [#allocation4], %s197
        %s199 = sand.u32 %s82, 1
        %s200 = smul.addr %s199, 32
        %s201 = scalar_lea.vmem [#allocation7], %s200
        %s202 = smul.u32 2, %s22
        %s203 = smul.u32 2, %s22
        %s204 = smul.u32 2, %s22
        %v205 = vld [vmem:[%s167] sm:$0xff]
        %v206 = vld [vmem:[%s167 + $0x8] sm:$0xff]
        %v207 = vld [vmem:[%s167 + $0x10] sm:$0xff]
        %v208 = vld [vmem:[%s167 + $0x18] sm:$0xff]
        %v209 = vld [vmem:[%s176 + $0x200] sm:$0xff]
        %v210 = vld [vmem:[%s176 + $0x208] sm:$0xff]
        %v211 = vld [vmem:[%s176 + $0x210] sm:$0xff]
        %v212 = vld [vmem:[%s176 + $0x218] sm:$0xff]
        %v213 = vunpack.c.l.bf16 %v209
        %v214 = vunpack.c.h.bf16 %v209
        %v215 = vunpack.c.l.bf16 %v210
        %v216 = vunpack.c.h.bf16 %v210
        %v217 = vunpack.c.l.bf16 %v211
        %v218 = vunpack.c.h.bf16 %v211
        %v219 = vunpack.c.l.bf16 %v212
        %v220 = vunpack.c.h.bf16 %v212
        %v221 = vld [vmem:[%s176] sm:$0xff]
        %v222 = vld [vmem:[%s176 + $0x8] sm:$0xff]
        %v223 = vld [vmem:[%s176 + $0x10] sm:$0xff]
        %v224 = vld [vmem:[%s176 + $0x18] sm:$0xff]
        %v225 = vunpack.c.l.bf16 %v221
        %v226 = vunpack.c.h.bf16 %v221
        %v227 = vunpack.c.l.bf16 %v222
        %v228 = vunpack.c.h.bf16 %v222
        %v229 = vunpack.c.l.bf16 %v223
        %v230 = vunpack.c.h.bf16 %v223
        %v231 = vunpack.c.l.bf16 %v224
        %v232 = vunpack.c.h.bf16 %v224
        %v233 = vlaneseq
        %v234 = vshrl.u32 %v233, 7
        %v235 = vsub.s32 0, %v234
        %v236 = vrot.slane %v205, %v235
        %v237 = vlaneseq
        %v238 = vshrl.u32 %v237, 7
        %v239 = vsub.s32 0, %v238
        %v240 = vrot.slane %v206, %v239
        %v241 = vmul.f32 %v225, %v236
        %v242 = vmul.f32 %v226, %v240
        %v243 = vmul.f32 %v227, %v236
        %v244 = vmul.f32 %v228, %v240
        %v245 = vmul.f32 %v229, %v236
        %v246 = vmul.f32 %v230, %v240
        %v247 = vmul.f32 %v231, %v236
        %v248 = vmul.f32 %v232, %v240
        %v249 = vadd.f32 %v213, %v241
        %v250 = vadd.f32 %v214, %v242
        %v251 = vadd.f32 %v215, %v243
        %v252 = vadd.f32 %v216, %v244
        %v253 = vadd.f32 %v217, %v245
        %v254 = vadd.f32 %v218, %v246
        %v255 = vadd.f32 %v219, %v247
        %v256 = vadd.f32 %v220, %v248
        %v257 = vld [vmem:[%s176 + $0x20] sm:$0xff]
        %v258 = vld [vmem:[%s176 + $0x28] sm:$0xff]
        %v259 = vld [vmem:[%s176 + $0x30] sm:$0xff]
        %v260 = vld [vmem:[%s176 + $0x38] sm:$0xff]
        %v261 = vunpack.c.l.bf16 %v257
        %v262 = vunpack.c.h.bf16 %v257
        %v263 = vunpack.c.l.bf16 %v258
        %v264 = vunpack.c.h.bf16 %v258
        %v265 = vunpack.c.l.bf16 %v259
        %v266 = vunpack.c.h.bf16 %v259
        %v267 = vunpack.c.l.bf16 %v260
        %v268 = vunpack.c.h.bf16 %v260
        %v269 = vlaneseq
        %v270 = vshrl.u32 %v269, 7
        %v271 = vsub.s32 1, %v270
        %v272 = vrot.slane %v205, %v271
        %v273 = vlaneseq
        %v274 = vshrl.u32 %v273, 7
        %v275 = vsub.s32 1, %v274
        %v276 = vrot.slane %v206, %v275
        %v277 = vmul.f32 %v261, %v272
        %v278 = vmul.f32 %v262, %v276
        %v279 = vmul.f32 %v263, %v272
        %v280 = vmul.f32 %v264, %v276
        %v281 = vmul.f32 %v265, %v272
        %v282 = vmul.f32 %v266, %v276
        %v283 = vmul.f32 %v267, %v272
        %v284 = vmul.f32 %v268, %v276
        %v285 = vadd.f32 %v249, %v277
        %v286 = vadd.f32 %v250, %v278
        %v287 = vadd.f32 %v251, %v279
        %v288 = vadd.f32 %v252, %v280
        %v289 = vadd.f32 %v253, %v281
        %v290 = vadd.f32 %v254, %v282
        %v291 = vadd.f32 %v255, %v283
        %v292 = vadd.f32 %v256, %v284
        %v293 = vld [vmem:[%s176 + $0x40] sm:$0xff]
        %v294 = vld [vmem:[%s176 + $0x48] sm:$0xff]
        %v295 = vld [vmem:[%s176 + $0x50] sm:$0xff]
        %v296 = vld [vmem:[%s176 + $0x58] sm:$0xff]
        %v297 = vunpack.c.l.bf16 %v293
        %v298 = vunpack.c.h.bf16 %v293
        %v299 = vunpack.c.l.bf16 %v294
        %v300 = vunpack.c.h.bf16 %v294
        %v301 = vunpack.c.l.bf16 %v295
        %v302 = vunpack.c.h.bf16 %v295
        %v303 = vunpack.c.l.bf16 %v296
        %v304 = vunpack.c.h.bf16 %v296
        %v305 = vlaneseq
        %v306 = vshrl.u32 %v305, 7
        %v307 = vsub.s32 2, %v306
        %v308 = vrot.slane %v205, %v307
        %v309 = vlaneseq
        %v310 = vshrl.u32 %v309, 7
        %v311 = vsub.s32 2, %v310
        %v312 = vrot.slane %v206, %v311
        %v313 = vmul.f32 %v297, %v308
        %v314 = vmul.f32 %v298, %v312
        %v315 = vmul.f32 %v299, %v308
        %v316 = vmul.f32 %v300, %v312
        %v317 = vmul.f32 %v301, %v308
        %v318 = vmul.f32 %v302, %v312
        %v319 = vmul.f32 %v303, %v308
        %v320 = vmul.f32 %v304, %v312
        %v321 = vadd.f32 %v285, %v313
        %v322 = vadd.f32 %v286, %v314
        %v323 = vadd.f32 %v287, %v315
        %v324 = vadd.f32 %v288, %v316
        %v325 = vadd.f32 %v289, %v317
        %v326 = vadd.f32 %v290, %v318
        %v327 = vadd.f32 %v291, %v319
        %v328 = vadd.f32 %v292, %v320
        %v329 = vld [vmem:[%s176 + $0x60] sm:$0xff]
        %v330 = vld [vmem:[%s176 + $0x68] sm:$0xff]
        %v331 = vld [vmem:[%s176 + $0x70] sm:$0xff]
        %v332 = vld [vmem:[%s176 + $0x78] sm:$0xff]
        %v333 = vunpack.c.l.bf16 %v329
        %v334 = vunpack.c.h.bf16 %v329
        %v335 = vunpack.c.l.bf16 %v330
        %v336 = vunpack.c.h.bf16 %v330
        %v337 = vunpack.c.l.bf16 %v331
        %v338 = vunpack.c.h.bf16 %v331
        %v339 = vunpack.c.l.bf16 %v332
        %v340 = vunpack.c.h.bf16 %v332
        %v341 = vlaneseq
        %v342 = vshrl.u32 %v341, 7
        %v343 = vsub.s32 3, %v342
        %v344 = vrot.slane %v205, %v343
        %v345 = vlaneseq
        %v346 = vshrl.u32 %v345, 7
        %v347 = vsub.s32 3, %v346
        %v348 = vrot.slane %v206, %v347
        %v349 = vmul.f32 %v333, %v344
        %v350 = vmul.f32 %v334, %v348
        %v351 = vmul.f32 %v335, %v344
        %v352 = vmul.f32 %v336, %v348
        %v353 = vmul.f32 %v337, %v344
        %v354 = vmul.f32 %v338, %v348
        %v355 = vmul.f32 %v339, %v344
        %v356 = vmul.f32 %v340, %v348
        %v357 = vadd.f32 %v321, %v349
        %v358 = vadd.f32 %v322, %v350
        %v359 = vadd.f32 %v323, %v351
        %v360 = vadd.f32 %v324, %v352
        %v361 = vadd.f32 %v325, %v353
        %v362 = vadd.f32 %v326, %v354
        %v363 = vadd.f32 %v327, %v355
        %v364 = vadd.f32 %v328, %v356
        %v365 = vld [vmem:[%s176 + $0x80] sm:$0xff]
        %v366 = vld [vmem:[%s176 + $0x88] sm:$0xff]
        %v367 = vld [vmem:[%s176 + $0x90] sm:$0xff]
        %v368 = vld [vmem:[%s176 + $0x98] sm:$0xff]
        %v369 = vunpack.c.l.bf16 %v365
        %v370 = vunpack.c.h.bf16 %v365
        %v371 = vunpack.c.l.bf16 %v366
        %v372 = vunpack.c.h.bf16 %v366
        %v373 = vunpack.c.l.bf16 %v367
        %v374 = vunpack.c.h.bf16 %v367
        %v375 = vunpack.c.l.bf16 %v368
        %v376 = vunpack.c.h.bf16 %v368
        %v377 = vlaneseq
        %v378 = vshrl.u32 %v377, 7
        %v379 = vsub.s32 4, %v378
        %v380 = vrot.slane %v205, %v379
        %v381 = vlaneseq
        %v382 = vshrl.u32 %v381, 7
        %v383 = vsub.s32 4, %v382
        %v384 = vrot.slane %v206, %v383
        %v385 = vmul.f32 %v369, %v380
        %v386 = vmul.f32 %v370, %v384
        %v387 = vmul.f32 %v371, %v380
        %v388 = vmul.f32 %v372, %v384
        %v389 = vmul.f32 %v373, %v380
        %v390 = vmul.f32 %v374, %v384
        %v391 = vmul.f32 %v375, %v380
        %v392 = vmul.f32 %v376, %v384
        %v393 = vadd.f32 %v357, %v385
        %v394 = vadd.f32 %v358, %v386
        %v395 = vadd.f32 %v359, %v387
        %v396 = vadd.f32 %v360, %v388
        %v397 = vadd.f32 %v361, %v389
        %v398 = vadd.f32 %v362, %v390
        %v399 = vadd.f32 %v363, %v391
        %v400 = vadd.f32 %v364, %v392
        %v401 = vld [vmem:[%s176 + $0xa0] sm:$0xff]
        %v402 = vld [vmem:[%s176 + $0xa8] sm:$0xff]
        %v403 = vld [vmem:[%s176 + $0xb0] sm:$0xff]
        %v404 = vld [vmem:[%s176 + $0xb8] sm:$0xff]
        %v405 = vunpack.c.l.bf16 %v401
        %v406 = vunpack.c.h.bf16 %v401
        %v407 = vunpack.c.l.bf16 %v402
        %v408 = vunpack.c.h.bf16 %v402
        %v409 = vunpack.c.l.bf16 %v403
        %v410 = vunpack.c.h.bf16 %v403
        %v411 = vunpack.c.l.bf16 %v404
        %v412 = vunpack.c.h.bf16 %v404
        %v413 = vlaneseq
        %v414 = vshrl.u32 %v413, 7
        %v415 = vsub.s32 5, %v414
        %v416 = vrot.slane %v205, %v415
        %v417 = vlaneseq
        %v418 = vshrl.u32 %v417, 7
        %v419 = vsub.s32 5, %v418
        %v420 = vrot.slane %v206, %v419
        %v421 = vmul.f32 %v405, %v416
        %v422 = vmul.f32 %v406, %v420
        %v423 = vmul.f32 %v407, %v416
        %v424 = vmul.f32 %v408, %v420
        %v425 = vmul.f32 %v409, %v416
        %v426 = vmul.f32 %v410, %v420
        %v427 = vmul.f32 %v411, %v416
        %v428 = vmul.f32 %v412, %v420
        %v429 = vadd.f32 %v393, %v421
        %v430 = vadd.f32 %v394, %v422
        %v431 = vadd.f32 %v395, %v423
        %v432 = vadd.f32 %v396, %v424
        %v433 = vadd.f32 %v397, %v425
        %v434 = vadd.f32 %v398, %v426
        %v435 = vadd.f32 %v399, %v427
        %v436 = vadd.f32 %v400, %v428
        %v437 = vld [vmem:[%s176 + $0xc0] sm:$0xff]
        %v438 = vld [vmem:[%s176 + $0xc8] sm:$0xff]
        %v439 = vld [vmem:[%s176 + $0xd0] sm:$0xff]
        %v440 = vld [vmem:[%s176 + $0xd8] sm:$0xff]
        %v441 = vunpack.c.l.bf16 %v437
        %v442 = vunpack.c.h.bf16 %v437
        %v443 = vunpack.c.l.bf16 %v438
        %v444 = vunpack.c.h.bf16 %v438
        %v445 = vunpack.c.l.bf16 %v439
        %v446 = vunpack.c.h.bf16 %v439
        %v447 = vunpack.c.l.bf16 %v440
        %v448 = vunpack.c.h.bf16 %v440
        %v449 = vlaneseq
        %v450 = vshrl.u32 %v449, 7
        %v451 = vsub.s32 6, %v450
        %v452 = vrot.slane %v205, %v451
        %v453 = vlaneseq
        %v454 = vshrl.u32 %v453, 7
        %v455 = vsub.s32 6, %v454
        %v456 = vrot.slane %v206, %v455
        %v457 = vmul.f32 %v441, %v452
        %v458 = vmul.f32 %v442, %v456
        %v459 = vmul.f32 %v443, %v452
        %v460 = vmul.f32 %v444, %v456
        %v461 = vmul.f32 %v445, %v452
        %v462 = vmul.f32 %v446, %v456
        %v463 = vmul.f32 %v447, %v452
        %v464 = vmul.f32 %v448, %v456
        %v465 = vadd.f32 %v429, %v457
        %v466 = vadd.f32 %v430, %v458
        %v467 = vadd.f32 %v431, %v459
        %v468 = vadd.f32 %v432, %v460
        %v469 = vadd.f32 %v433, %v461
        %v470 = vadd.f32 %v434, %v462
        %v471 = vadd.f32 %v435, %v463
        %v472 = vadd.f32 %v436, %v464
        %v473 = vld [vmem:[%s176 + $0xe0] sm:$0xff]
        %v474 = vld [vmem:[%s176 + $0xe8] sm:$0xff]
        %v475 = vld [vmem:[%s176 + $0xf0] sm:$0xff]
        %v476 = vld [vmem:[%s176 + $0xf8] sm:$0xff]
        %v477 = vunpack.c.l.bf16 %v473
        %v478 = vunpack.c.h.bf16 %v473
        %v479 = vunpack.c.l.bf16 %v474
        %v480 = vunpack.c.h.bf16 %v474
        %v481 = vunpack.c.l.bf16 %v475
        %v482 = vunpack.c.h.bf16 %v475
        %v483 = vunpack.c.l.bf16 %v476
        %v484 = vunpack.c.h.bf16 %v476
        %v485 = vlaneseq
        %v486 = vshrl.u32 %v485, 7
        %v487 = vsub.s32 7, %v486
        %v488 = vrot.slane %v205, %v487
        %v489 = vlaneseq
        %v490 = vshrl.u32 %v489, 7
        %v491 = vsub.s32 7, %v490
        %v492 = vrot.slane %v206, %v491
        %v493 = vmul.f32 %v477, %v488
        %v494 = vmul.f32 %v478, %v492
        %v495 = vmul.f32 %v479, %v488
        %v496 = vmul.f32 %v480, %v492
        %v497 = vmul.f32 %v481, %v488
        %v498 = vmul.f32 %v482, %v492
        %v499 = vmul.f32 %v483, %v488
        %v500 = vmul.f32 %v484, %v492
        %v501 = vadd.f32 %v465, %v493
        %v502 = vadd.f32 %v466, %v494
        %v503 = vadd.f32 %v467, %v495
        %v504 = vadd.f32 %v468, %v496
        %v505 = vadd.f32 %v469, %v497
        %v506 = vadd.f32 %v470, %v498
        %v507 = vadd.f32 %v471, %v499
        %v508 = vadd.f32 %v472, %v500
        %v509 = vld [vmem:[%s176 + $0x100] sm:$0xff]
        %v510 = vld [vmem:[%s176 + $0x108] sm:$0xff]
        %v511 = vld [vmem:[%s176 + $0x110] sm:$0xff]
        %v512 = vld [vmem:[%s176 + $0x118] sm:$0xff]
        %v513 = vunpack.c.l.bf16 %v509
        %v514 = vunpack.c.h.bf16 %v509
        %v515 = vunpack.c.l.bf16 %v510
        %v516 = vunpack.c.h.bf16 %v510
        %v517 = vunpack.c.l.bf16 %v511
        %v518 = vunpack.c.h.bf16 %v511
        %v519 = vunpack.c.l.bf16 %v512
        %v520 = vunpack.c.h.bf16 %v512
        %v521 = vlaneseq
        %v522 = vshrl.u32 %v521, 7
        %v523 = vsub.s32 0, %v522
        %v524 = vrot.slane %v207, %v523
        %v525 = vlaneseq
        %v526 = vshrl.u32 %v525, 7
        %v527 = vsub.s32 0, %v526
        %v528 = vrot.slane %v208, %v527
        %v529 = vmul.f32 %v513, %v524
        %v530 = vmul.f32 %v514, %v528
        %v531 = vmul.f32 %v515, %v524
        %v532 = vmul.f32 %v516, %v528
        %v533 = vmul.f32 %v517, %v524
        %v534 = vmul.f32 %v518, %v528
        %v535 = vmul.f32 %v519, %v524
        %v536 = vmul.f32 %v520, %v528
        %v537 = vadd.f32 %v501, %v529
        %v538 = vadd.f32 %v502, %v530
        %v539 = vadd.f32 %v503, %v531
        %v540 = vadd.f32 %v504, %v532
        %v541 = vadd.f32 %v505, %v533
        %v542 = vadd.f32 %v506, %v534
        %v543 = vadd.f32 %v507, %v535
        %v544 = vadd.f32 %v508, %v536
        %v545 = vld [vmem:[%s176 + $0x120] sm:$0xff]
        %v546 = vld [vmem:[%s176 + $0x128] sm:$0xff]
        %v547 = vld [vmem:[%s176 + $0x130] sm:$0xff]
        %v548 = vld [vmem:[%s176 + $0x138] sm:$0xff]
        %v549 = vunpack.c.l.bf16 %v545
        %v550 = vunpack.c.h.bf16 %v545
        %v551 = vunpack.c.l.bf16 %v546
        %v552 = vunpack.c.h.bf16 %v546
        %v553 = vunpack.c.l.bf16 %v547
        %v554 = vunpack.c.h.bf16 %v547
        %v555 = vunpack.c.l.bf16 %v548
        %v556 = vunpack.c.h.bf16 %v548
        %v557 = vlaneseq
        %v558 = vshrl.u32 %v557, 7
        %v559 = vsub.s32 1, %v558
        %v560 = vrot.slane %v207, %v559
        %v561 = vlaneseq
        %v562 = vshrl.u32 %v561, 7
        %v563 = vsub.s32 1, %v562
        %v564 = vrot.slane %v208, %v563
        %v565 = vmul.f32 %v549, %v560
        %v566 = vmul.f32 %v550, %v564
        %v567 = vmul.f32 %v551, %v560
        %v568 = vmul.f32 %v552, %v564
        %v569 = vmul.f32 %v553, %v560
        %v570 = vmul.f32 %v554, %v564
        %v571 = vmul.f32 %v555, %v560
        %v572 = vmul.f32 %v556, %v564
        %v573 = vadd.f32 %v537, %v565
        %v574 = vadd.f32 %v538, %v566
        %v575 = vadd.f32 %v539, %v567
        %v576 = vadd.f32 %v540, %v568
        %v577 = vadd.f32 %v541, %v569
        %v578 = vadd.f32 %v542, %v570
        %v579 = vadd.f32 %v543, %v571
        %v580 = vadd.f32 %v544, %v572
        %v581 = vld [vmem:[%s176 + $0x140] sm:$0xff]
        %v582 = vld [vmem:[%s176 + $0x148] sm:$0xff]
        %v583 = vld [vmem:[%s176 + $0x150] sm:$0xff]
        %v584 = vld [vmem:[%s176 + $0x158] sm:$0xff]
        %v585 = vunpack.c.l.bf16 %v581
        %v586 = vunpack.c.h.bf16 %v581
        %v587 = vunpack.c.l.bf16 %v582
        %v588 = vunpack.c.h.bf16 %v582
        %v589 = vunpack.c.l.bf16 %v583
        %v590 = vunpack.c.h.bf16 %v583
        %v591 = vunpack.c.l.bf16 %v584
        %v592 = vunpack.c.h.bf16 %v584
        %v593 = vlaneseq
        %v594 = vshrl.u32 %v593, 7
        %v595 = vsub.s32 2, %v594
        %v596 = vrot.slane %v207, %v595
        %v597 = vlaneseq
        %v598 = vshrl.u32 %v597, 7
        %v599 = vsub.s32 2, %v598
        %v600 = vrot.slane %v208, %v599
        %v601 = vmul.f32 %v585, %v596
        %v602 = vmul.f32 %v586, %v600
        %v603 = vmul.f32 %v587, %v596
        %v604 = vmul.f32 %v588, %v600
        %v605 = vmul.f32 %v589, %v596
        %v606 = vmul.f32 %v590, %v600
        %v607 = vmul.f32 %v591, %v596
        %v608 = vmul.f32 %v592, %v600
        %v609 = vadd.f32 %v573, %v601
        %v610 = vadd.f32 %v574, %v602
        %v611 = vadd.f32 %v575, %v603
        %v612 = vadd.f32 %v576, %v604
        %v613 = vadd.f32 %v577, %v605
        %v614 = vadd.f32 %v578, %v606
        %v615 = vadd.f32 %v579, %v607
        %v616 = vadd.f32 %v580, %v608
        %v617 = vld [vmem:[%s176 + $0x160] sm:$0xff]
        %v618 = vld [vmem:[%s176 + $0x168] sm:$0xff]
        %v619 = vld [vmem:[%s176 + $0x170] sm:$0xff]
        %v620 = vld [vmem:[%s176 + $0x178] sm:$0xff]
        %v621 = vunpack.c.l.bf16 %v617
        %v622 = vunpack.c.h.bf16 %v617
        %v623 = vunpack.c.l.bf16 %v618
        %v624 = vunpack.c.h.bf16 %v618
        %v625 = vunpack.c.l.bf16 %v619
        %v626 = vunpack.c.h.bf16 %v619
        %v627 = vunpack.c.l.bf16 %v620
        %v628 = vunpack.c.h.bf16 %v620
        %v629 = vlaneseq
        %v630 = vshrl.u32 %v629, 7
        %v631 = vsub.s32 3, %v630
        %v632 = vrot.slane %v207, %v631
        %v633 = vlaneseq
        %v634 = vshrl.u32 %v633, 7
        %v635 = vsub.s32 3, %v634
        %v636 = vrot.slane %v208, %v635
        %v637 = vmul.f32 %v621, %v632
        %v638 = vmul.f32 %v622, %v636
        %v639 = vmul.f32 %v623, %v632
        %v640 = vmul.f32 %v624, %v636
        %v641 = vmul.f32 %v625, %v632
        %v642 = vmul.f32 %v626, %v636
        %v643 = vmul.f32 %v627, %v632
        %v644 = vmul.f32 %v628, %v636
        %v645 = vadd.f32 %v609, %v637
        %v646 = vadd.f32 %v610, %v638
        %v647 = vadd.f32 %v611, %v639
        %v648 = vadd.f32 %v612, %v640
        %v649 = vadd.f32 %v613, %v641
        %v650 = vadd.f32 %v614, %v642
        %v651 = vadd.f32 %v615, %v643
        %v652 = vadd.f32 %v616, %v644
        %v653 = vld [vmem:[%s176 + $0x180] sm:$0xff]
        %v654 = vld [vmem:[%s176 + $0x188] sm:$0xff]
        %v655 = vld [vmem:[%s176 + $0x190] sm:$0xff]
        %v656 = vld [vmem:[%s176 + $0x198] sm:$0xff]
        %v657 = vunpack.c.l.bf16 %v653
        %v658 = vunpack.c.h.bf16 %v653
        %v659 = vunpack.c.l.bf16 %v654
        %v660 = vunpack.c.h.bf16 %v654
        %v661 = vunpack.c.l.bf16 %v655
        %v662 = vunpack.c.h.bf16 %v655
        %v663 = vunpack.c.l.bf16 %v656
        %v664 = vunpack.c.h.bf16 %v656
        %v665 = vlaneseq
        %v666 = vshrl.u32 %v665, 7
        %v667 = vsub.s32 4, %v666
        %v668 = vrot.slane %v207, %v667
        %v669 = vlaneseq
        %v670 = vshrl.u32 %v669, 7
        %v671 = vsub.s32 4, %v670
        %v672 = vrot.slane %v208, %v671
        %v673 = vmul.f32 %v657, %v668
        %v674 = vmul.f32 %v658, %v672
        %v675 = vmul.f32 %v659, %v668
        %v676 = vmul.f32 %v660, %v672
        %v677 = vmul.f32 %v661, %v668
        %v678 = vmul.f32 %v662, %v672
        %v679 = vmul.f32 %v663, %v668
        %v680 = vmul.f32 %v664, %v672
        %v681 = vadd.f32 %v645, %v673
        %v682 = vadd.f32 %v646, %v674
        %v683 = vadd.f32 %v647, %v675
        %v684 = vadd.f32 %v648, %v676
        %v685 = vadd.f32 %v649, %v677
        %v686 = vadd.f32 %v650, %v678
        %v687 = vadd.f32 %v651, %v679
        %v688 = vadd.f32 %v652, %v680
        %v689 = vld [vmem:[%s176 + $0x1a0] sm:$0xff]
        %v690 = vld [vmem:[%s176 + $0x1a8] sm:$0xff]
        %v691 = vld [vmem:[%s176 + $0x1b0] sm:$0xff]
        %v692 = vld [vmem:[%s176 + $0x1b8] sm:$0xff]
        %v693 = vunpack.c.l.bf16 %v689
        %v694 = vunpack.c.h.bf16 %v689
        %v695 = vunpack.c.l.bf16 %v690
        %v696 = vunpack.c.h.bf16 %v690
        %v697 = vunpack.c.l.bf16 %v691
        %v698 = vunpack.c.h.bf16 %v691
        %v699 = vunpack.c.l.bf16 %v692
        %v700 = vunpack.c.h.bf16 %v692
        %v701 = vlaneseq
        %v702 = vshrl.u32 %v701, 7
        %v703 = vsub.s32 5, %v702
        %v704 = vrot.slane %v207, %v703
        %v705 = vlaneseq
        %v706 = vshrl.u32 %v705, 7
        %v707 = vsub.s32 5, %v706
        %v708 = vrot.slane %v208, %v707
        %v709 = vmul.f32 %v693, %v704
        %v710 = vmul.f32 %v694, %v708
        %v711 = vmul.f32 %v695, %v704
        %v712 = vmul.f32 %v696, %v708
        %v713 = vmul.f32 %v697, %v704
        %v714 = vmul.f32 %v698, %v708
        %v715 = vmul.f32 %v699, %v704
        %v716 = vmul.f32 %v700, %v708
        %v717 = vadd.f32 %v681, %v709
        %v718 = vadd.f32 %v682, %v710
        %v719 = vadd.f32 %v683, %v711
        %v720 = vadd.f32 %v684, %v712
        %v721 = vadd.f32 %v685, %v713
        %v722 = vadd.f32 %v686, %v714
        %v723 = vadd.f32 %v687, %v715
        %v724 = vadd.f32 %v688, %v716
        %v725 = vld [vmem:[%s176 + $0x1c0] sm:$0xff]
        %v726 = vld [vmem:[%s176 + $0x1c8] sm:$0xff]
        %v727 = vld [vmem:[%s176 + $0x1d0] sm:$0xff]
        %v728 = vld [vmem:[%s176 + $0x1d8] sm:$0xff]
        %v729 = vunpack.c.l.bf16 %v725
        %v730 = vunpack.c.h.bf16 %v725
        %v731 = vunpack.c.l.bf16 %v726
        %v732 = vunpack.c.h.bf16 %v726
        %v733 = vunpack.c.l.bf16 %v727
        %v734 = vunpack.c.h.bf16 %v727
        %v735 = vunpack.c.l.bf16 %v728
        %v736 = vunpack.c.h.bf16 %v728
        %v737 = vlaneseq
        %v738 = vshrl.u32 %v737, 7
        %v739 = vsub.s32 6, %v738
        %v740 = vrot.slane %v207, %v739
        %v741 = vlaneseq
        %v742 = vshrl.u32 %v741, 7
        %v743 = vsub.s32 6, %v742
        %v744 = vrot.slane %v208, %v743
        %v745 = vmul.f32 %v729, %v740
        %v746 = vmul.f32 %v730, %v744
        %v747 = vmul.f32 %v731, %v740
        %v748 = vmul.f32 %v732, %v744
        %v749 = vmul.f32 %v733, %v740
        %v750 = vmul.f32 %v734, %v744
        %v751 = vmul.f32 %v735, %v740
        %v752 = vmul.f32 %v736, %v744
        %v753 = vadd.f32 %v717, %v745
        %v754 = vadd.f32 %v718, %v746
        %v755 = vadd.f32 %v719, %v747
        %v756 = vadd.f32 %v720, %v748
        %v757 = vadd.f32 %v721, %v749
        %v758 = vadd.f32 %v722, %v750
        %v759 = vadd.f32 %v723, %v751
        %v760 = vadd.f32 %v724, %v752
        %v761 = vld [vmem:[%s176 + $0x1e0] sm:$0xff]
        %v762 = vld [vmem:[%s176 + $0x1e8] sm:$0xff]
        %v763 = vld [vmem:[%s176 + $0x1f0] sm:$0xff]
        %v764 = vld [vmem:[%s176 + $0x1f8] sm:$0xff]
        %v765 = vunpack.c.l.bf16 %v761
        %v766 = vunpack.c.h.bf16 %v761
        %v767 = vunpack.c.l.bf16 %v762
        %v768 = vunpack.c.h.bf16 %v762
        %v769 = vunpack.c.l.bf16 %v763
        %v770 = vunpack.c.h.bf16 %v763
        %v771 = vunpack.c.l.bf16 %v764
        %v772 = vunpack.c.h.bf16 %v764
        %v773 = vlaneseq
        %v774 = vshrl.u32 %v773, 7
        %v775 = vsub.s32 7, %v774
        %v776 = vrot.slane %v207, %v775
        %v777 = vlaneseq
        %v778 = vshrl.u32 %v777, 7
        %v779 = vsub.s32 7, %v778
        %v780 = vrot.slane %v208, %v779
        %v781 = vmul.f32 %v765, %v776
        %v782 = vmul.f32 %v766, %v780
        %v783 = vmul.f32 %v767, %v776
        %v784 = vmul.f32 %v768, %v780
        %v785 = vmul.f32 %v769, %v776
        %v786 = vmul.f32 %v770, %v780
        %v787 = vmul.f32 %v771, %v776
        %v788 = vmul.f32 %v772, %v780
        %v789 = vadd.f32 %v753, %v781
        %v790 = vadd.f32 %v754, %v782
        %v791 = vadd.f32 %v755, %v783
        %v792 = vadd.f32 %v756, %v784
        %v793 = vadd.f32 %v757, %v785
        %v794 = vadd.f32 %v758, %v786
        %v795 = vadd.f32 %v759, %v787
        %v796 = vadd.f32 %v760, %v788
        %v797 = vtanh.pop %v789
        %v798 = vtanh.pop %v790
        %v799 = vtanh.pop %v791
        %v800 = vtanh.pop %v792
        %v801 = vtanh.pop %v793
        %v802 = vtanh.pop %v794
        %v803 = vtanh.pop %v795
        %v804 = vtanh.pop %v796
        %v805 = vld [vmem:[%s176 + $0x620] sm:$0xff]
        %v806 = vld [vmem:[%s176 + $0x628] sm:$0xff]
        %v807 = vld [vmem:[%s176 + $0x630] sm:$0xff]
        %v808 = vld [vmem:[%s176 + $0x638] sm:$0xff]
        %v809 = vunpack.c.l.bf16 %v805
        %v810 = vunpack.c.h.bf16 %v805
        %v811 = vunpack.c.l.bf16 %v806
        %v812 = vunpack.c.h.bf16 %v806
        %v813 = vunpack.c.l.bf16 %v807
        %v814 = vunpack.c.h.bf16 %v807
        %v815 = vunpack.c.l.bf16 %v808
        %v816 = vunpack.c.h.bf16 %v808
        %v817 = vld [vmem:[%s176 + $0x220] sm:$0xff]
        %v818 = vld [vmem:[%s176 + $0x228] sm:$0xff]
        %v819 = vld [vmem:[%s176 + $0x230] sm:$0xff]
        %v820 = vld [vmem:[%s176 + $0x238] sm:$0xff]
        %v821 = vunpack.c.l.bf16 %v817
        %v822 = vunpack.c.h.bf16 %v817
        %v823 = vunpack.c.l.bf16 %v818
        %v824 = vunpack.c.h.bf16 %v818
        %v825 = vunpack.c.l.bf16 %v819
        %v826 = vunpack.c.h.bf16 %v819
        %v827 = vunpack.c.l.bf16 %v820
        %v828 = vunpack.c.h.bf16 %v820
        %v829 = vlaneseq
        %v830 = vshrl.u32 %v829, 7
        %v831 = vsub.s32 0, %v830
        %v832 = vrot.slane %v797, %v831
        %v833 = vlaneseq
        %v834 = vshrl.u32 %v833, 7
        %v835 = vsub.s32 0, %v834
        %v836 = vrot.slane %v798, %v835
        %v837 = vmul.f32 %v821, %v832
        %v838 = vmul.f32 %v822, %v836
        %v839 = vmul.f32 %v823, %v832
        %v840 = vmul.f32 %v824, %v836
        %v841 = vmul.f32 %v825, %v832
        %v842 = vmul.f32 %v826, %v836
        %v843 = vmul.f32 %v827, %v832
        %v844 = vmul.f32 %v828, %v836
        %v845 = vadd.f32 %v809, %v837
        %v846 = vadd.f32 %v810, %v838
        %v847 = vadd.f32 %v811, %v839
        %v848 = vadd.f32 %v812, %v840
        %v849 = vadd.f32 %v813, %v841
        %v850 = vadd.f32 %v814, %v842
        %v851 = vadd.f32 %v815, %v843
        %v852 = vadd.f32 %v816, %v844
        %v853 = vld [vmem:[%s176 + $0x240] sm:$0xff]
        %v854 = vld [vmem:[%s176 + $0x248] sm:$0xff]
        %v855 = vld [vmem:[%s176 + $0x250] sm:$0xff]
        %v856 = vld [vmem:[%s176 + $0x258] sm:$0xff]
        %v857 = vunpack.c.l.bf16 %v853
        %v858 = vunpack.c.h.bf16 %v853
        %v859 = vunpack.c.l.bf16 %v854
        %v860 = vunpack.c.h.bf16 %v854
        %v861 = vunpack.c.l.bf16 %v855
        %v862 = vunpack.c.h.bf16 %v855
        %v863 = vunpack.c.l.bf16 %v856
        %v864 = vunpack.c.h.bf16 %v856
        %v865 = vlaneseq
        %v866 = vshrl.u32 %v865, 7
        %v867 = vsub.s32 1, %v866
        %v868 = vrot.slane %v797, %v867
        %v869 = vlaneseq
        %v870 = vshrl.u32 %v869, 7
        %v871 = vsub.s32 1, %v870
        %v872 = vrot.slane %v798, %v871
        %v873 = vmul.f32 %v857, %v868
        %v874 = vmul.f32 %v858, %v872
        %v875 = vmul.f32 %v859, %v868
        %v876 = vmul.f32 %v860, %v872
        %v877 = vmul.f32 %v861, %v868
        %v878 = vmul.f32 %v862, %v872
        %v879 = vmul.f32 %v863, %v868
        %v880 = vmul.f32 %v864, %v872
        %v881 = vadd.f32 %v845, %v873
        %v882 = vadd.f32 %v846, %v874
        %v883 = vadd.f32 %v847, %v875
        %v884 = vadd.f32 %v848, %v876
        %v885 = vadd.f32 %v849, %v877
        %v886 = vadd.f32 %v850, %v878
        %v887 = vadd.f32 %v851, %v879
        %v888 = vadd.f32 %v852, %v880
        %v889 = vld [vmem:[%s176 + $0x260] sm:$0xff]
        %v890 = vld [vmem:[%s176 + $0x268] sm:$0xff]
        %v891 = vld [vmem:[%s176 + $0x270] sm:$0xff]
        %v892 = vld [vmem:[%s176 + $0x278] sm:$0xff]
        %v893 = vunpack.c.l.bf16 %v889
        %v894 = vunpack.c.h.bf16 %v889
        %v895 = vunpack.c.l.bf16 %v890
        %v896 = vunpack.c.h.bf16 %v890
        %v897 = vunpack.c.l.bf16 %v891
        %v898 = vunpack.c.h.bf16 %v891
        %v899 = vunpack.c.l.bf16 %v892
        %v900 = vunpack.c.h.bf16 %v892
        %v901 = vlaneseq
        %v902 = vshrl.u32 %v901, 7
        %v903 = vsub.s32 2, %v902
        %v904 = vrot.slane %v797, %v903
        %v905 = vlaneseq
        %v906 = vshrl.u32 %v905, 7
        %v907 = vsub.s32 2, %v906
        %v908 = vrot.slane %v798, %v907
        %v909 = vmul.f32 %v893, %v904
        %v910 = vmul.f32 %v894, %v908
        %v911 = vmul.f32 %v895, %v904
        %v912 = vmul.f32 %v896, %v908
        %v913 = vmul.f32 %v897, %v904
        %v914 = vmul.f32 %v898, %v908
        %v915 = vmul.f32 %v899, %v904
        %v916 = vmul.f32 %v900, %v908
        %v917 = vadd.f32 %v881, %v909
        %v918 = vadd.f32 %v882, %v910
        %v919 = vadd.f32 %v883, %v911
        %v920 = vadd.f32 %v884, %v912
        %v921 = vadd.f32 %v885, %v913
        %v922 = vadd.f32 %v886, %v914
        %v923 = vadd.f32 %v887, %v915
        %v924 = vadd.f32 %v888, %v916
        %v925 = vld [vmem:[%s176 + $0x280] sm:$0xff]
        %v926 = vld [vmem:[%s176 + $0x288] sm:$0xff]
        %v927 = vld [vmem:[%s176 + $0x290] sm:$0xff]
        %v928 = vld [vmem:[%s176 + $0x298] sm:$0xff]
        %v929 = vunpack.c.l.bf16 %v925
        %v930 = vunpack.c.h.bf16 %v925
        %v931 = vunpack.c.l.bf16 %v926
        %v932 = vunpack.c.h.bf16 %v926
        %v933 = vunpack.c.l.bf16 %v927
        %v934 = vunpack.c.h.bf16 %v927
        %v935 = vunpack.c.l.bf16 %v928
        %v936 = vunpack.c.h.bf16 %v928
        %v937 = vlaneseq
        %v938 = vshrl.u32 %v937, 7
        %v939 = vsub.s32 3, %v938
        %v940 = vrot.slane %v797, %v939
        %v941 = vlaneseq
        %v942 = vshrl.u32 %v941, 7
        %v943 = vsub.s32 3, %v942
        %v944 = vrot.slane %v798, %v943
        %v945 = vmul.f32 %v929, %v940
        %v946 = vmul.f32 %v930, %v944
        %v947 = vmul.f32 %v931, %v940
        %v948 = vmul.f32 %v932, %v944
        %v949 = vmul.f32 %v933, %v940
        %v950 = vmul.f32 %v934, %v944
        %v951 = vmul.f32 %v935, %v940
        %v952 = vmul.f32 %v936, %v944
        %v953 = vadd.f32 %v917, %v945
        %v954 = vadd.f32 %v918, %v946
        %v955 = vadd.f32 %v919, %v947
        %v956 = vadd.f32 %v920, %v948
        %v957 = vadd.f32 %v921, %v949
        %v958 = vadd.f32 %v922, %v950
        %v959 = vadd.f32 %v923, %v951
        %v960 = vadd.f32 %v924, %v952
        %v961 = vld [vmem:[%s176 + $0x2a0] sm:$0xff]
        %v962 = vld [vmem:[%s176 + $0x2a8] sm:$0xff]
        %v963 = vld [vmem:[%s176 + $0x2b0] sm:$0xff]
        %v964 = vld [vmem:[%s176 + $0x2b8] sm:$0xff]
        %v965 = vunpack.c.l.bf16 %v961
        %v966 = vunpack.c.h.bf16 %v961
        %v967 = vunpack.c.l.bf16 %v962
        %v968 = vunpack.c.h.bf16 %v962
        %v969 = vunpack.c.l.bf16 %v963
        %v970 = vunpack.c.h.bf16 %v963
        %v971 = vunpack.c.l.bf16 %v964
        %v972 = vunpack.c.h.bf16 %v964
        %v973 = vlaneseq
        %v974 = vshrl.u32 %v973, 7
        %v975 = vsub.s32 4, %v974
        %v976 = vrot.slane %v797, %v975
        %v977 = vlaneseq
        %v978 = vshrl.u32 %v977, 7
        %v979 = vsub.s32 4, %v978
        %v980 = vrot.slane %v798, %v979
        %v981 = vmul.f32 %v965, %v976
        %v982 = vmul.f32 %v966, %v980
        %v983 = vmul.f32 %v967, %v976
        %v984 = vmul.f32 %v968, %v980
        %v985 = vmul.f32 %v969, %v976
        %v986 = vmul.f32 %v970, %v980
        %v987 = vmul.f32 %v971, %v976
        %v988 = vmul.f32 %v972, %v980
        %v989 = vadd.f32 %v953, %v981
        %v990 = vadd.f32 %v954, %v982
        %v991 = vadd.f32 %v955, %v983
        %v992 = vadd.f32 %v956, %v984
        %v993 = vadd.f32 %v957, %v985
        %v994 = vadd.f32 %v958, %v986
        %v995 = vadd.f32 %v959, %v987
        %v996 = vadd.f32 %v960, %v988
        %v997 = vld [vmem:[%s176 + $0x2c0] sm:$0xff]
        %v998 = vld [vmem:[%s176 + $0x2c8] sm:$0xff]
        %v999 = vld [vmem:[%s176 + $0x2d0] sm:$0xff]
        %v1000 = vld [vmem:[%s176 + $0x2d8] sm:$0xff]
        %v1001 = vunpack.c.l.bf16 %v997
        %v1002 = vunpack.c.h.bf16 %v997
        %v1003 = vunpack.c.l.bf16 %v998
        %v1004 = vunpack.c.h.bf16 %v998
        %v1005 = vunpack.c.l.bf16 %v999
        %v1006 = vunpack.c.h.bf16 %v999
        %v1007 = vunpack.c.l.bf16 %v1000
        %v1008 = vunpack.c.h.bf16 %v1000
        %v1009 = vlaneseq
        %v1010 = vshrl.u32 %v1009, 7
        %v1011 = vsub.s32 5, %v1010
        %v1012 = vrot.slane %v797, %v1011
        %v1013 = vlaneseq
        %v1014 = vshrl.u32 %v1013, 7
        %v1015 = vsub.s32 5, %v1014
        %v1016 = vrot.slane %v798, %v1015
        %v1017 = vmul.f32 %v1001, %v1012
        %v1018 = vmul.f32 %v1002, %v1016
        %v1019 = vmul.f32 %v1003, %v1012
        %v1020 = vmul.f32 %v1004, %v1016
        %v1021 = vmul.f32 %v1005, %v1012
        %v1022 = vmul.f32 %v1006, %v1016
        %v1023 = vmul.f32 %v1007, %v1012
        %v1024 = vmul.f32 %v1008, %v1016
        %v1025 = vadd.f32 %v989, %v1017
        %v1026 = vadd.f32 %v990, %v1018
        %v1027 = vadd.f32 %v991, %v1019
        %v1028 = vadd.f32 %v992, %v1020
        %v1029 = vadd.f32 %v993, %v1021
        %v1030 = vadd.f32 %v994, %v1022
        %v1031 = vadd.f32 %v995, %v1023
        %v1032 = vadd.f32 %v996, %v1024
        %v1033 = vld [vmem:[%s176 + $0x2e0] sm:$0xff]
        %v1034 = vld [vmem:[%s176 + $0x2e8] sm:$0xff]
        %v1035 = vld [vmem:[%s176 + $0x2f0] sm:$0xff]
        %v1036 = vld [vmem:[%s176 + $0x2f8] sm:$0xff]
        %v1037 = vunpack.c.l.bf16 %v1033
        %v1038 = vunpack.c.h.bf16 %v1033
        %v1039 = vunpack.c.l.bf16 %v1034
        %v1040 = vunpack.c.h.bf16 %v1034
        %v1041 = vunpack.c.l.bf16 %v1035
        %v1042 = vunpack.c.h.bf16 %v1035
        %v1043 = vunpack.c.l.bf16 %v1036
        %v1044 = vunpack.c.h.bf16 %v1036
        %v1045 = vlaneseq
        %v1046 = vshrl.u32 %v1045, 7
        %v1047 = vsub.s32 6, %v1046
        %v1048 = vrot.slane %v797, %v1047
        %v1049 = vlaneseq
        %v1050 = vshrl.u32 %v1049, 7
        %v1051 = vsub.s32 6, %v1050
        %v1052 = vrot.slane %v798, %v1051
        %v1053 = vmul.f32 %v1037, %v1048
        %v1054 = vmul.f32 %v1038, %v1052
        %v1055 = vmul.f32 %v1039, %v1048
        %v1056 = vmul.f32 %v1040, %v1052
        %v1057 = vmul.f32 %v1041, %v1048
        %v1058 = vmul.f32 %v1042, %v1052
        %v1059 = vmul.f32 %v1043, %v1048
        %v1060 = vmul.f32 %v1044, %v1052
        %v1061 = vadd.f32 %v1025, %v1053
        %v1062 = vadd.f32 %v1026, %v1054
        %v1063 = vadd.f32 %v1027, %v1055
        %v1064 = vadd.f32 %v1028, %v1056
        %v1065 = vadd.f32 %v1029, %v1057
        %v1066 = vadd.f32 %v1030, %v1058
        %v1067 = vadd.f32 %v1031, %v1059
        %v1068 = vadd.f32 %v1032, %v1060
        %v1069 = vld [vmem:[%s176 + $0x300] sm:$0xff]
        %v1070 = vld [vmem:[%s176 + $0x308] sm:$0xff]
        %v1071 = vld [vmem:[%s176 + $0x310] sm:$0xff]
        %v1072 = vld [vmem:[%s176 + $0x318] sm:$0xff]
        %v1073 = vunpack.c.l.bf16 %v1069
        %v1074 = vunpack.c.h.bf16 %v1069
        %v1075 = vunpack.c.l.bf16 %v1070
        %v1076 = vunpack.c.h.bf16 %v1070
        %v1077 = vunpack.c.l.bf16 %v1071
        %v1078 = vunpack.c.h.bf16 %v1071
        %v1079 = vunpack.c.l.bf16 %v1072
        %v1080 = vunpack.c.h.bf16 %v1072
        %v1081 = vlaneseq
        %v1082 = vshrl.u32 %v1081, 7
        %v1083 = vsub.s32 7, %v1082
        %v1084 = vrot.slane %v797, %v1083
        %v1085 = vlaneseq
        %v1086 = vshrl.u32 %v1085, 7
        %v1087 = vsub.s32 7, %v1086
        %v1088 = vrot.slane %v798, %v1087
        %v1089 = vmul.f32 %v1073, %v1084
        %v1090 = vmul.f32 %v1074, %v1088
        %v1091 = vmul.f32 %v1075, %v1084
        %v1092 = vmul.f32 %v1076, %v1088
        %v1093 = vmul.f32 %v1077, %v1084
        %v1094 = vmul.f32 %v1078, %v1088
        %v1095 = vmul.f32 %v1079, %v1084
        %v1096 = vmul.f32 %v1080, %v1088
        %v1097 = vadd.f32 %v1061, %v1089
        %v1098 = vadd.f32 %v1062, %v1090
        %v1099 = vadd.f32 %v1063, %v1091
        %v1100 = vadd.f32 %v1064, %v1092
        %v1101 = vadd.f32 %v1065, %v1093
        %v1102 = vadd.f32 %v1066, %v1094
        %v1103 = vadd.f32 %v1067, %v1095
        %v1104 = vadd.f32 %v1068, %v1096
        %v1105 = vld [vmem:[%s176 + $0x320] sm:$0xff]
        %v1106 = vld [vmem:[%s176 + $0x328] sm:$0xff]
        %v1107 = vld [vmem:[%s176 + $0x330] sm:$0xff]
        %v1108 = vld [vmem:[%s176 + $0x338] sm:$0xff]
        %v1109 = vunpack.c.l.bf16 %v1105
        %v1110 = vunpack.c.h.bf16 %v1105
        %v1111 = vunpack.c.l.bf16 %v1106
        %v1112 = vunpack.c.h.bf16 %v1106
        %v1113 = vunpack.c.l.bf16 %v1107
        %v1114 = vunpack.c.h.bf16 %v1107
        %v1115 = vunpack.c.l.bf16 %v1108
        %v1116 = vunpack.c.h.bf16 %v1108
        %v1117 = vlaneseq
        %v1118 = vshrl.u32 %v1117, 7
        %v1119 = vsub.s32 0, %v1118
        %v1120 = vrot.slane %v799, %v1119
        %v1121 = vlaneseq
        %v1122 = vshrl.u32 %v1121, 7
        %v1123 = vsub.s32 0, %v1122
        %v1124 = vrot.slane %v800, %v1123
        %v1125 = vmul.f32 %v1109, %v1120
        %v1126 = vmul.f32 %v1110, %v1124
        %v1127 = vmul.f32 %v1111, %v1120
        %v1128 = vmul.f32 %v1112, %v1124
        %v1129 = vmul.f32 %v1113, %v1120
        %v1130 = vmul.f32 %v1114, %v1124
        %v1131 = vmul.f32 %v1115, %v1120
        %v1132 = vmul.f32 %v1116, %v1124
        %v1133 = vadd.f32 %v1097, %v1125
        %v1134 = vadd.f32 %v1098, %v1126
        %v1135 = vadd.f32 %v1099, %v1127
        %v1136 = vadd.f32 %v1100, %v1128
        %v1137 = vadd.f32 %v1101, %v1129
        %v1138 = vadd.f32 %v1102, %v1130
        %v1139 = vadd.f32 %v1103, %v1131
        %v1140 = vadd.f32 %v1104, %v1132
        %v1141 = vld [vmem:[%s176 + $0x340] sm:$0xff]
        %v1142 = vld [vmem:[%s176 + $0x348] sm:$0xff]
        %v1143 = vld [vmem:[%s176 + $0x350] sm:$0xff]
        %v1144 = vld [vmem:[%s176 + $0x358] sm:$0xff]
        %v1145 = vunpack.c.l.bf16 %v1141
        %v1146 = vunpack.c.h.bf16 %v1141
        %v1147 = vunpack.c.l.bf16 %v1142
        %v1148 = vunpack.c.h.bf16 %v1142
        %v1149 = vunpack.c.l.bf16 %v1143
        %v1150 = vunpack.c.h.bf16 %v1143
        %v1151 = vunpack.c.l.bf16 %v1144
        %v1152 = vunpack.c.h.bf16 %v1144
        %v1153 = vlaneseq
        %v1154 = vshrl.u32 %v1153, 7
        %v1155 = vsub.s32 1, %v1154
        %v1156 = vrot.slane %v799, %v1155
        %v1157 = vlaneseq
        %v1158 = vshrl.u32 %v1157, 7
        %v1159 = vsub.s32 1, %v1158
        %v1160 = vrot.slane %v800, %v1159
        %v1161 = vmul.f32 %v1145, %v1156
        %v1162 = vmul.f32 %v1146, %v1160
        %v1163 = vmul.f32 %v1147, %v1156
        %v1164 = vmul.f32 %v1148, %v1160
        %v1165 = vmul.f32 %v1149, %v1156
        %v1166 = vmul.f32 %v1150, %v1160
        %v1167 = vmul.f32 %v1151, %v1156
        %v1168 = vmul.f32 %v1152, %v1160
        %v1169 = vadd.f32 %v1133, %v1161
        %v1170 = vadd.f32 %v1134, %v1162
        %v1171 = vadd.f32 %v1135, %v1163
        %v1172 = vadd.f32 %v1136, %v1164
        %v1173 = vadd.f32 %v1137, %v1165
        %v1174 = vadd.f32 %v1138, %v1166
        %v1175 = vadd.f32 %v1139, %v1167
        %v1176 = vadd.f32 %v1140, %v1168
        %v1177 = vld [vmem:[%s176 + $0x360] sm:$0xff]
        %v1178 = vld [vmem:[%s176 + $0x368] sm:$0xff]
        %v1179 = vld [vmem:[%s176 + $0x370] sm:$0xff]
        %v1180 = vld [vmem:[%s176 + $0x378] sm:$0xff]
        %v1181 = vunpack.c.l.bf16 %v1177
        %v1182 = vunpack.c.h.bf16 %v1177
        %v1183 = vunpack.c.l.bf16 %v1178
        %v1184 = vunpack.c.h.bf16 %v1178
        %v1185 = vunpack.c.l.bf16 %v1179
        %v1186 = vunpack.c.h.bf16 %v1179
        %v1187 = vunpack.c.l.bf16 %v1180
        %v1188 = vunpack.c.h.bf16 %v1180
        %v1189 = vlaneseq
        %v1190 = vshrl.u32 %v1189, 7
        %v1191 = vsub.s32 2, %v1190
        %v1192 = vrot.slane %v799, %v1191
        %v1193 = vlaneseq
        %v1194 = vshrl.u32 %v1193, 7
        %v1195 = vsub.s32 2, %v1194
        %v1196 = vrot.slane %v800, %v1195
        %v1197 = vmul.f32 %v1181, %v1192
        %v1198 = vmul.f32 %v1182, %v1196
        %v1199 = vmul.f32 %v1183, %v1192
        %v1200 = vmul.f32 %v1184, %v1196
        %v1201 = vmul.f32 %v1185, %v1192
        %v1202 = vmul.f32 %v1186, %v1196
        %v1203 = vmul.f32 %v1187, %v1192
        %v1204 = vmul.f32 %v1188, %v1196
        %v1205 = vadd.f32 %v1169, %v1197
        %v1206 = vadd.f32 %v1170, %v1198
        %v1207 = vadd.f32 %v1171, %v1199
        %v1208 = vadd.f32 %v1172, %v1200
        %v1209 = vadd.f32 %v1173, %v1201
        %v1210 = vadd.f32 %v1174, %v1202
        %v1211 = vadd.f32 %v1175, %v1203
        %v1212 = vadd.f32 %v1176, %v1204
        %v1213 = vld [vmem:[%s176 + $0x380] sm:$0xff]
        %v1214 = vld [vmem:[%s176 + $0x388] sm:$0xff]
        %v1215 = vld [vmem:[%s176 + $0x390] sm:$0xff]
        %v1216 = vld [vmem:[%s176 + $0x398] sm:$0xff]
        %v1217 = vunpack.c.l.bf16 %v1213
        %v1218 = vunpack.c.h.bf16 %v1213
        %v1219 = vunpack.c.l.bf16 %v1214
        %v1220 = vunpack.c.h.bf16 %v1214
        %v1221 = vunpack.c.l.bf16 %v1215
        %v1222 = vunpack.c.h.bf16 %v1215
        %v1223 = vunpack.c.l.bf16 %v1216
        %v1224 = vunpack.c.h.bf16 %v1216
        %v1225 = vlaneseq
        %v1226 = vshrl.u32 %v1225, 7
        %v1227 = vsub.s32 3, %v1226
        %v1228 = vrot.slane %v799, %v1227
        %v1229 = vlaneseq
        %v1230 = vshrl.u32 %v1229, 7
        %v1231 = vsub.s32 3, %v1230
        %v1232 = vrot.slane %v800, %v1231
        %v1233 = vmul.f32 %v1217, %v1228
        %v1234 = vmul.f32 %v1218, %v1232
        %v1235 = vmul.f32 %v1219, %v1228
        %v1236 = vmul.f32 %v1220, %v1232
        %v1237 = vmul.f32 %v1221, %v1228
        %v1238 = vmul.f32 %v1222, %v1232
        %v1239 = vmul.f32 %v1223, %v1228
        %v1240 = vmul.f32 %v1224, %v1232
        %v1241 = vadd.f32 %v1205, %v1233
        %v1242 = vadd.f32 %v1206, %v1234
        %v1243 = vadd.f32 %v1207, %v1235
        %v1244 = vadd.f32 %v1208, %v1236
        %v1245 = vadd.f32 %v1209, %v1237
        %v1246 = vadd.f32 %v1210, %v1238
        %v1247 = vadd.f32 %v1211, %v1239
        %v1248 = vadd.f32 %v1212, %v1240
        %v1249 = vld [vmem:[%s176 + $0x3a0] sm:$0xff]
        %v1250 = vld [vmem:[%s176 + $0x3a8] sm:$0xff]
        %v1251 = vld [vmem:[%s176 + $0x3b0] sm:$0xff]
        %v1252 = vld [vmem:[%s176 + $0x3b8] sm:$0xff]
        %v1253 = vunpack.c.l.bf16 %v1249
        %v1254 = vunpack.c.h.bf16 %v1249
        %v1255 = vunpack.c.l.bf16 %v1250
        %v1256 = vunpack.c.h.bf16 %v1250
        %v1257 = vunpack.c.l.bf16 %v1251
        %v1258 = vunpack.c.h.bf16 %v1251
        %v1259 = vunpack.c.l.bf16 %v1252
        %v1260 = vunpack.c.h.bf16 %v1252
        %v1261 = vlaneseq
        %v1262 = vshrl.u32 %v1261, 7
        %v1263 = vsub.s32 4, %v1262
        %v1264 = vrot.slane %v799, %v1263
        %v1265 = vlaneseq
        %v1266 = vshrl.u32 %v1265, 7
        %v1267 = vsub.s32 4, %v1266
        %v1268 = vrot.slane %v800, %v1267
        %v1269 = vmul.f32 %v1253, %v1264
        %v1270 = vmul.f32 %v1254, %v1268
        %v1271 = vmul.f32 %v1255, %v1264
        %v1272 = vmul.f32 %v1256, %v1268
        %v1273 = vmul.f32 %v1257, %v1264
        %v1274 = vmul.f32 %v1258, %v1268
        %v1275 = vmul.f32 %v1259, %v1264
        %v1276 = vmul.f32 %v1260, %v1268
        %v1277 = vadd.f32 %v1241, %v1269
        %v1278 = vadd.f32 %v1242, %v1270
        %v1279 = vadd.f32 %v1243, %v1271
        %v1280 = vadd.f32 %v1244, %v1272
        %v1281 = vadd.f32 %v1245, %v1273
        %v1282 = vadd.f32 %v1246, %v1274
        %v1283 = vadd.f32 %v1247, %v1275
        %v1284 = vadd.f32 %v1248, %v1276
        %v1285 = vld [vmem:[%s176 + $0x3c0] sm:$0xff]
        %v1286 = vld [vmem:[%s176 + $0x3c8] sm:$0xff]
        %v1287 = vld [vmem:[%s176 + $0x3d0] sm:$0xff]
        %v1288 = vld [vmem:[%s176 + $0x3d8] sm:$0xff]
        %v1289 = vunpack.c.l.bf16 %v1285
        %v1290 = vunpack.c.h.bf16 %v1285
        %v1291 = vunpack.c.l.bf16 %v1286
        %v1292 = vunpack.c.h.bf16 %v1286
        %v1293 = vunpack.c.l.bf16 %v1287
        %v1294 = vunpack.c.h.bf16 %v1287
        %v1295 = vunpack.c.l.bf16 %v1288
        %v1296 = vunpack.c.h.bf16 %v1288
        %v1297 = vlaneseq
        %v1298 = vshrl.u32 %v1297, 7
        %v1299 = vsub.s32 5, %v1298
        %v1300 = vrot.slane %v799, %v1299
        %v1301 = vlaneseq
        %v1302 = vshrl.u32 %v1301, 7
        %v1303 = vsub.s32 5, %v1302
        %v1304 = vrot.slane %v800, %v1303
        %v1305 = vmul.f32 %v1289, %v1300
        %v1306 = vmul.f32 %v1290, %v1304
        %v1307 = vmul.f32 %v1291, %v1300
        %v1308 = vmul.f32 %v1292, %v1304
        %v1309 = vmul.f32 %v1293, %v1300
        %v1310 = vmul.f32 %v1294, %v1304
        %v1311 = vmul.f32 %v1295, %v1300
        %v1312 = vmul.f32 %v1296, %v1304
        %v1313 = vadd.f32 %v1277, %v1305
        %v1314 = vadd.f32 %v1278, %v1306
        %v1315 = vadd.f32 %v1279, %v1307
        %v1316 = vadd.f32 %v1280, %v1308
        %v1317 = vadd.f32 %v1281, %v1309
        %v1318 = vadd.f32 %v1282, %v1310
        %v1319 = vadd.f32 %v1283, %v1311
        %v1320 = vadd.f32 %v1284, %v1312
        %v1321 = vld [vmem:[%s176 + $0x3e0] sm:$0xff]
        %v1322 = vld [vmem:[%s176 + $0x3e8] sm:$0xff]
        %v1323 = vld [vmem:[%s176 + $0x3f0] sm:$0xff]
        %v1324 = vld [vmem:[%s176 + $0x3f8] sm:$0xff]
        %v1325 = vunpack.c.l.bf16 %v1321
        %v1326 = vunpack.c.h.bf16 %v1321
        %v1327 = vunpack.c.l.bf16 %v1322
        %v1328 = vunpack.c.h.bf16 %v1322
        %v1329 = vunpack.c.l.bf16 %v1323
        %v1330 = vunpack.c.h.bf16 %v1323
        %v1331 = vunpack.c.l.bf16 %v1324
        %v1332 = vunpack.c.h.bf16 %v1324
        %v1333 = vlaneseq
        %v1334 = vshrl.u32 %v1333, 7
        %v1335 = vsub.s32 6, %v1334
        %v1336 = vrot.slane %v799, %v1335
        %v1337 = vlaneseq
        %v1338 = vshrl.u32 %v1337, 7
        %v1339 = vsub.s32 6, %v1338
        %v1340 = vrot.slane %v800, %v1339
        %v1341 = vmul.f32 %v1325, %v1336
        %v1342 = vmul.f32 %v1326, %v1340
        %v1343 = vmul.f32 %v1327, %v1336
        %v1344 = vmul.f32 %v1328, %v1340
        %v1345 = vmul.f32 %v1329, %v1336
        %v1346 = vmul.f32 %v1330, %v1340
        %v1347 = vmul.f32 %v1331, %v1336
        %v1348 = vmul.f32 %v1332, %v1340
        %v1349 = vadd.f32 %v1313, %v1341
        %v1350 = vadd.f32 %v1314, %v1342
        %v1351 = vadd.f32 %v1315, %v1343
        %v1352 = vadd.f32 %v1316, %v1344
        %v1353 = vadd.f32 %v1317, %v1345
        %v1354 = vadd.f32 %v1318, %v1346
        %v1355 = vadd.f32 %v1319, %v1347
        %v1356 = vadd.f32 %v1320, %v1348
        %v1357 = vld [vmem:[%s176 + $0x400] sm:$0xff]
        %v1358 = vld [vmem:[%s176 + $0x408] sm:$0xff]
        %v1359 = vld [vmem:[%s176 + $0x410] sm:$0xff]
        %v1360 = vld [vmem:[%s176 + $0x418] sm:$0xff]
        %v1361 = vunpack.c.l.bf16 %v1357
        %v1362 = vunpack.c.h.bf16 %v1357
        %v1363 = vunpack.c.l.bf16 %v1358
        %v1364 = vunpack.c.h.bf16 %v1358
        %v1365 = vunpack.c.l.bf16 %v1359
        %v1366 = vunpack.c.h.bf16 %v1359
        %v1367 = vunpack.c.l.bf16 %v1360
        %v1368 = vunpack.c.h.bf16 %v1360
        %v1369 = vlaneseq
        %v1370 = vshrl.u32 %v1369, 7
        %v1371 = vsub.s32 7, %v1370
        %v1372 = vrot.slane %v799, %v1371
        %v1373 = vlaneseq
        %v1374 = vshrl.u32 %v1373, 7
        %v1375 = vsub.s32 7, %v1374
        %v1376 = vrot.slane %v800, %v1375
        %v1377 = vmul.f32 %v1361, %v1372
        %v1378 = vmul.f32 %v1362, %v1376
        %v1379 = vmul.f32 %v1363, %v1372
        %v1380 = vmul.f32 %v1364, %v1376
        %v1381 = vmul.f32 %v1365, %v1372
        %v1382 = vmul.f32 %v1366, %v1376
        %v1383 = vmul.f32 %v1367, %v1372
        %v1384 = vmul.f32 %v1368, %v1376
        %v1385 = vadd.f32 %v1349, %v1377
        %v1386 = vadd.f32 %v1350, %v1378
        %v1387 = vadd.f32 %v1351, %v1379
        %v1388 = vadd.f32 %v1352, %v1380
        %v1389 = vadd.f32 %v1353, %v1381
        %v1390 = vadd.f32 %v1354, %v1382
        %v1391 = vadd.f32 %v1355, %v1383
        %v1392 = vadd.f32 %v1356, %v1384
        %v1393 = vld [vmem:[%s176 + $0x420] sm:$0xff]
        %v1394 = vld [vmem:[%s176 + $0x428] sm:$0xff]
        %v1395 = vld [vmem:[%s176 + $0x430] sm:$0xff]
        %v1396 = vld [vmem:[%s176 + $0x438] sm:$0xff]
        %v1397 = vunpack.c.l.bf16 %v1393
        %v1398 = vunpack.c.h.bf16 %v1393
        %v1399 = vunpack.c.l.bf16 %v1394
        %v1400 = vunpack.c.h.bf16 %v1394
        %v1401 = vunpack.c.l.bf16 %v1395
        %v1402 = vunpack.c.h.bf16 %v1395
        %v1403 = vunpack.c.l.bf16 %v1396
        %v1404 = vunpack.c.h.bf16 %v1396
        %v1405 = vlaneseq
        %v1406 = vshrl.u32 %v1405, 7
        %v1407 = vsub.s32 0, %v1406
        %v1408 = vrot.slane %v801, %v1407
        %v1409 = vlaneseq
        %v1410 = vshrl.u32 %v1409, 7
        %v1411 = vsub.s32 0, %v1410
        %v1412 = vrot.slane %v802, %v1411
        %v1413 = vmul.f32 %v1397, %v1408
        %v1414 = vmul.f32 %v1398, %v1412
        %v1415 = vmul.f32 %v1399, %v1408
        %v1416 = vmul.f32 %v1400, %v1412
        %v1417 = vmul.f32 %v1401, %v1408
        %v1418 = vmul.f32 %v1402, %v1412
        %v1419 = vmul.f32 %v1403, %v1408
        %v1420 = vmul.f32 %v1404, %v1412
        %v1421 = vadd.f32 %v1385, %v1413
        %v1422 = vadd.f32 %v1386, %v1414
        %v1423 = vadd.f32 %v1387, %v1415
        %v1424 = vadd.f32 %v1388, %v1416
        %v1425 = vadd.f32 %v1389, %v1417
        %v1426 = vadd.f32 %v1390, %v1418
        %v1427 = vadd.f32 %v1391, %v1419
        %v1428 = vadd.f32 %v1392, %v1420
        %v1429 = vld [vmem:[%s176 + $0x440] sm:$0xff]
        %v1430 = vld [vmem:[%s176 + $0x448] sm:$0xff]
        %v1431 = vld [vmem:[%s176 + $0x450] sm:$0xff]
        %v1432 = vld [vmem:[%s176 + $0x458] sm:$0xff]
        %v1433 = vunpack.c.l.bf16 %v1429
        %v1434 = vunpack.c.h.bf16 %v1429
        %v1435 = vunpack.c.l.bf16 %v1430
        %v1436 = vunpack.c.h.bf16 %v1430
        %v1437 = vunpack.c.l.bf16 %v1431
        %v1438 = vunpack.c.h.bf16 %v1431
        %v1439 = vunpack.c.l.bf16 %v1432
        %v1440 = vunpack.c.h.bf16 %v1432
        %v1441 = vlaneseq
        %v1442 = vshrl.u32 %v1441, 7
        %v1443 = vsub.s32 1, %v1442
        %v1444 = vrot.slane %v801, %v1443
        %v1445 = vlaneseq
        %v1446 = vshrl.u32 %v1445, 7
        %v1447 = vsub.s32 1, %v1446
        %v1448 = vrot.slane %v802, %v1447
        %v1449 = vmul.f32 %v1433, %v1444
        %v1450 = vmul.f32 %v1434, %v1448
        %v1451 = vmul.f32 %v1435, %v1444
        %v1452 = vmul.f32 %v1436, %v1448
        %v1453 = vmul.f32 %v1437, %v1444
        %v1454 = vmul.f32 %v1438, %v1448
        %v1455 = vmul.f32 %v1439, %v1444
        %v1456 = vmul.f32 %v1440, %v1448
        %v1457 = vadd.f32 %v1421, %v1449
        %v1458 = vadd.f32 %v1422, %v1450
        %v1459 = vadd.f32 %v1423, %v1451
        %v1460 = vadd.f32 %v1424, %v1452
        %v1461 = vadd.f32 %v1425, %v1453
        %v1462 = vadd.f32 %v1426, %v1454
        %v1463 = vadd.f32 %v1427, %v1455
        %v1464 = vadd.f32 %v1428, %v1456
        %v1465 = vld [vmem:[%s176 + $0x460] sm:$0xff]
        %v1466 = vld [vmem:[%s176 + $0x468] sm:$0xff]
        %v1467 = vld [vmem:[%s176 + $0x470] sm:$0xff]
        %v1468 = vld [vmem:[%s176 + $0x478] sm:$0xff]
        %v1469 = vunpack.c.l.bf16 %v1465
        %v1470 = vunpack.c.h.bf16 %v1465
        %v1471 = vunpack.c.l.bf16 %v1466
        %v1472 = vunpack.c.h.bf16 %v1466
        %v1473 = vunpack.c.l.bf16 %v1467
        %v1474 = vunpack.c.h.bf16 %v1467
        %v1475 = vunpack.c.l.bf16 %v1468
        %v1476 = vunpack.c.h.bf16 %v1468
        %v1477 = vlaneseq
        %v1478 = vshrl.u32 %v1477, 7
        %v1479 = vsub.s32 2, %v1478
        %v1480 = vrot.slane %v801, %v1479
        %v1481 = vlaneseq
        %v1482 = vshrl.u32 %v1481, 7
        %v1483 = vsub.s32 2, %v1482
        %v1484 = vrot.slane %v802, %v1483
        %v1485 = vmul.f32 %v1469, %v1480
        %v1486 = vmul.f32 %v1470, %v1484
        %v1487 = vmul.f32 %v1471, %v1480
        %v1488 = vmul.f32 %v1472, %v1484
        %v1489 = vmul.f32 %v1473, %v1480
        %v1490 = vmul.f32 %v1474, %v1484
        %v1491 = vmul.f32 %v1475, %v1480
        %v1492 = vmul.f32 %v1476, %v1484
        %v1493 = vadd.f32 %v1457, %v1485
        %v1494 = vadd.f32 %v1458, %v1486
        %v1495 = vadd.f32 %v1459, %v1487
        %v1496 = vadd.f32 %v1460, %v1488
        %v1497 = vadd.f32 %v1461, %v1489
        %v1498 = vadd.f32 %v1462, %v1490
        %v1499 = vadd.f32 %v1463, %v1491
        %v1500 = vadd.f32 %v1464, %v1492
        %v1501 = vld [vmem:[%s176 + $0x480] sm:$0xff]
        %v1502 = vld [vmem:[%s176 + $0x488] sm:$0xff]
        %v1503 = vld [vmem:[%s176 + $0x490] sm:$0xff]
        %v1504 = vld [vmem:[%s176 + $0x498] sm:$0xff]
        %v1505 = vunpack.c.l.bf16 %v1501
        %v1506 = vunpack.c.h.bf16 %v1501
        %v1507 = vunpack.c.l.bf16 %v1502
        %v1508 = vunpack.c.h.bf16 %v1502
        %v1509 = vunpack.c.l.bf16 %v1503
        %v1510 = vunpack.c.h.bf16 %v1503
        %v1511 = vunpack.c.l.bf16 %v1504
        %v1512 = vunpack.c.h.bf16 %v1504
        %v1513 = vlaneseq
        %v1514 = vshrl.u32 %v1513, 7
        %v1515 = vsub.s32 3, %v1514
        %v1516 = vrot.slane %v801, %v1515
        %v1517 = vlaneseq
        %v1518 = vshrl.u32 %v1517, 7
        %v1519 = vsub.s32 3, %v1518
        %v1520 = vrot.slane %v802, %v1519
        %v1521 = vmul.f32 %v1505, %v1516
        %v1522 = vmul.f32 %v1506, %v1520
        %v1523 = vmul.f32 %v1507, %v1516
        %v1524 = vmul.f32 %v1508, %v1520
        %v1525 = vmul.f32 %v1509, %v1516
        %v1526 = vmul.f32 %v1510, %v1520
        %v1527 = vmul.f32 %v1511, %v1516
        %v1528 = vmul.f32 %v1512, %v1520
        %v1529 = vadd.f32 %v1493, %v1521
        %v1530 = vadd.f32 %v1494, %v1522
        %v1531 = vadd.f32 %v1495, %v1523
        %v1532 = vadd.f32 %v1496, %v1524
        %v1533 = vadd.f32 %v1497, %v1525
        %v1534 = vadd.f32 %v1498, %v1526
        %v1535 = vadd.f32 %v1499, %v1527
        %v1536 = vadd.f32 %v1500, %v1528
        %v1537 = vld [vmem:[%s176 + $0x4a0] sm:$0xff]
        %v1538 = vld [vmem:[%s176 + $0x4a8] sm:$0xff]
        %v1539 = vld [vmem:[%s176 + $0x4b0] sm:$0xff]
        %v1540 = vld [vmem:[%s176 + $0x4b8] sm:$0xff]
        %v1541 = vunpack.c.l.bf16 %v1537
        %v1542 = vunpack.c.h.bf16 %v1537
        %v1543 = vunpack.c.l.bf16 %v1538
        %v1544 = vunpack.c.h.bf16 %v1538
        %v1545 = vunpack.c.l.bf16 %v1539
        %v1546 = vunpack.c.h.bf16 %v1539
        %v1547 = vunpack.c.l.bf16 %v1540
        %v1548 = vunpack.c.h.bf16 %v1540
        %v1549 = vlaneseq
        %v1550 = vshrl.u32 %v1549, 7
        %v1551 = vsub.s32 4, %v1550
        %v1552 = vrot.slane %v801, %v1551
        %v1553 = vlaneseq
        %v1554 = vshrl.u32 %v1553, 7
        %v1555 = vsub.s32 4, %v1554
        %v1556 = vrot.slane %v802, %v1555
        %v1557 = vmul.f32 %v1541, %v1552
        %v1558 = vmul.f32 %v1542, %v1556
        %v1559 = vmul.f32 %v1543, %v1552
        %v1560 = vmul.f32 %v1544, %v1556
        %v1561 = vmul.f32 %v1545, %v1552
        %v1562 = vmul.f32 %v1546, %v1556
        %v1563 = vmul.f32 %v1547, %v1552
        %v1564 = vmul.f32 %v1548, %v1556
        %v1565 = vadd.f32 %v1529, %v1557
        %v1566 = vadd.f32 %v1530, %v1558
        %v1567 = vadd.f32 %v1531, %v1559
        %v1568 = vadd.f32 %v1532, %v1560
        %v1569 = vadd.f32 %v1533, %v1561
        %v1570 = vadd.f32 %v1534, %v1562
        %v1571 = vadd.f32 %v1535, %v1563
        %v1572 = vadd.f32 %v1536, %v1564
        %v1573 = vld [vmem:[%s176 + $0x4c0] sm:$0xff]
        %v1574 = vld [vmem:[%s176 + $0x4c8] sm:$0xff]
        %v1575 = vld [vmem:[%s176 + $0x4d0] sm:$0xff]
        %v1576 = vld [vmem:[%s176 + $0x4d8] sm:$0xff]
        %v1577 = vunpack.c.l.bf16 %v1573
        %v1578 = vunpack.c.h.bf16 %v1573
        %v1579 = vunpack.c.l.bf16 %v1574
        %v1580 = vunpack.c.h.bf16 %v1574
        %v1581 = vunpack.c.l.bf16 %v1575
        %v1582 = vunpack.c.h.bf16 %v1575
        %v1583 = vunpack.c.l.bf16 %v1576
        %v1584 = vunpack.c.h.bf16 %v1576
        %v1585 = vlaneseq
        %v1586 = vshrl.u32 %v1585, 7
        %v1587 = vsub.s32 5, %v1586
        %v1588 = vrot.slane %v801, %v1587
        %v1589 = vlaneseq
        %v1590 = vshrl.u32 %v1589, 7
        %v1591 = vsub.s32 5, %v1590
        %v1592 = vrot.slane %v802, %v1591
        %v1593 = vmul.f32 %v1577, %v1588
        %v1594 = vmul.f32 %v1578, %v1592
        %v1595 = vmul.f32 %v1579, %v1588
        %v1596 = vmul.f32 %v1580, %v1592
        %v1597 = vmul.f32 %v1581, %v1588
        %v1598 = vmul.f32 %v1582, %v1592
        %v1599 = vmul.f32 %v1583, %v1588
        %v1600 = vmul.f32 %v1584, %v1592
        %v1601 = vadd.f32 %v1565, %v1593
        %v1602 = vadd.f32 %v1566, %v1594
        %v1603 = vadd.f32 %v1567, %v1595
        %v1604 = vadd.f32 %v1568, %v1596
        %v1605 = vadd.f32 %v1569, %v1597
        %v1606 = vadd.f32 %v1570, %v1598
        %v1607 = vadd.f32 %v1571, %v1599
        %v1608 = vadd.f32 %v1572, %v1600
        %v1609 = vld [vmem:[%s176 + $0x4e0] sm:$0xff]
        %v1610 = vld [vmem:[%s176 + $0x4e8] sm:$0xff]
        %v1611 = vld [vmem:[%s176 + $0x4f0] sm:$0xff]
        %v1612 = vld [vmem:[%s176 + $0x4f8] sm:$0xff]
        %v1613 = vunpack.c.l.bf16 %v1609
        %v1614 = vunpack.c.h.bf16 %v1609
        %v1615 = vunpack.c.l.bf16 %v1610
        %v1616 = vunpack.c.h.bf16 %v1610
        %v1617 = vunpack.c.l.bf16 %v1611
        %v1618 = vunpack.c.h.bf16 %v1611
        %v1619 = vunpack.c.l.bf16 %v1612
        %v1620 = vunpack.c.h.bf16 %v1612
        %v1621 = vlaneseq
        %v1622 = vshrl.u32 %v1621, 7
        %v1623 = vsub.s32 6, %v1622
        %v1624 = vrot.slane %v801, %v1623
        %v1625 = vlaneseq
        %v1626 = vshrl.u32 %v1625, 7
        %v1627 = vsub.s32 6, %v1626
        %v1628 = vrot.slane %v802, %v1627
        %v1629 = vmul.f32 %v1613, %v1624
        %v1630 = vmul.f32 %v1614, %v1628
        %v1631 = vmul.f32 %v1615, %v1624
        %v1632 = vmul.f32 %v1616, %v1628
        %v1633 = vmul.f32 %v1617, %v1624
        %v1634 = vmul.f32 %v1618, %v1628
        %v1635 = vmul.f32 %v1619, %v1624
        %v1636 = vmul.f32 %v1620, %v1628
        %v1637 = vadd.f32 %v1601, %v1629
        %v1638 = vadd.f32 %v1602, %v1630
        %v1639 = vadd.f32 %v1603, %v1631
        %v1640 = vadd.f32 %v1604, %v1632
        %v1641 = vadd.f32 %v1605, %v1633
        %v1642 = vadd.f32 %v1606, %v1634
        %v1643 = vadd.f32 %v1607, %v1635
        %v1644 = vadd.f32 %v1608, %v1636
        %v1645 = vld [vmem:[%s176 + $0x500] sm:$0xff]
        %v1646 = vld [vmem:[%s176 + $0x508] sm:$0xff]
        %v1647 = vld [vmem:[%s176 + $0x510] sm:$0xff]
        %v1648 = vld [vmem:[%s176 + $0x518] sm:$0xff]
        %v1649 = vunpack.c.l.bf16 %v1645
        %v1650 = vunpack.c.h.bf16 %v1645
        %v1651 = vunpack.c.l.bf16 %v1646
        %v1652 = vunpack.c.h.bf16 %v1646
        %v1653 = vunpack.c.l.bf16 %v1647
        %v1654 = vunpack.c.h.bf16 %v1647
        %v1655 = vunpack.c.l.bf16 %v1648
        %v1656 = vunpack.c.h.bf16 %v1648
        %v1657 = vlaneseq
        %v1658 = vshrl.u32 %v1657, 7
        %v1659 = vsub.s32 7, %v1658
        %v1660 = vrot.slane %v801, %v1659
        %v1661 = vlaneseq
        %v1662 = vshrl.u32 %v1661, 7
        %v1663 = vsub.s32 7, %v1662
        %v1664 = vrot.slane %v802, %v1663
        %v1665 = vmul.f32 %v1649, %v1660
        %v1666 = vmul.f32 %v1650, %v1664
        %v1667 = vmul.f32 %v1651, %v1660
        %v1668 = vmul.f32 %v1652, %v1664
        %v1669 = vmul.f32 %v1653, %v1660
        %v1670 = vmul.f32 %v1654, %v1664
        %v1671 = vmul.f32 %v1655, %v1660
        %v1672 = vmul.f32 %v1656, %v1664
        %v1673 = vadd.f32 %v1637, %v1665
        %v1674 = vadd.f32 %v1638, %v1666
        %v1675 = vadd.f32 %v1639, %v1667
        %v1676 = vadd.f32 %v1640, %v1668
        %v1677 = vadd.f32 %v1641, %v1669
        %v1678 = vadd.f32 %v1642, %v1670
        %v1679 = vadd.f32 %v1643, %v1671
        %v1680 = vadd.f32 %v1644, %v1672
        %v1681 = vld [vmem:[%s176 + $0x520] sm:$0xff]
        %v1682 = vld [vmem:[%s176 + $0x528] sm:$0xff]
        %v1683 = vld [vmem:[%s176 + $0x530] sm:$0xff]
        %v1684 = vld [vmem:[%s176 + $0x538] sm:$0xff]
        %v1685 = vunpack.c.l.bf16 %v1681
        %v1686 = vunpack.c.h.bf16 %v1681
        %v1687 = vunpack.c.l.bf16 %v1682
        %v1688 = vunpack.c.h.bf16 %v1682
        %v1689 = vunpack.c.l.bf16 %v1683
        %v1690 = vunpack.c.h.bf16 %v1683
        %v1691 = vunpack.c.l.bf16 %v1684
        %v1692 = vunpack.c.h.bf16 %v1684
        %v1693 = vlaneseq
        %v1694 = vshrl.u32 %v1693, 7
        %v1695 = vsub.s32 0, %v1694
        %v1696 = vrot.slane %v803, %v1695
        %v1697 = vlaneseq
        %v1698 = vshrl.u32 %v1697, 7
        %v1699 = vsub.s32 0, %v1698
        %v1700 = vrot.slane %v804, %v1699
        %v1701 = vmul.f32 %v1685, %v1696
        %v1702 = vmul.f32 %v1686, %v1700
        %v1703 = vmul.f32 %v1687, %v1696
        %v1704 = vmul.f32 %v1688, %v1700
        %v1705 = vmul.f32 %v1689, %v1696
        %v1706 = vmul.f32 %v1690, %v1700
        %v1707 = vmul.f32 %v1691, %v1696
        %v1708 = vmul.f32 %v1692, %v1700
        %v1709 = vadd.f32 %v1673, %v1701
        %v1710 = vadd.f32 %v1674, %v1702
        %v1711 = vadd.f32 %v1675, %v1703
        %v1712 = vadd.f32 %v1676, %v1704
        %v1713 = vadd.f32 %v1677, %v1705
        %v1714 = vadd.f32 %v1678, %v1706
        %v1715 = vadd.f32 %v1679, %v1707
        %v1716 = vadd.f32 %v1680, %v1708
        %v1717 = vld [vmem:[%s176 + $0x540] sm:$0xff]
        %v1718 = vld [vmem:[%s176 + $0x548] sm:$0xff]
        %v1719 = vld [vmem:[%s176 + $0x550] sm:$0xff]
        %v1720 = vld [vmem:[%s176 + $0x558] sm:$0xff]
        %v1721 = vunpack.c.l.bf16 %v1717
        %v1722 = vunpack.c.h.bf16 %v1717
        %v1723 = vunpack.c.l.bf16 %v1718
        %v1724 = vunpack.c.h.bf16 %v1718
        %v1725 = vunpack.c.l.bf16 %v1719
        %v1726 = vunpack.c.h.bf16 %v1719
        %v1727 = vunpack.c.l.bf16 %v1720
        %v1728 = vunpack.c.h.bf16 %v1720
        %v1729 = vlaneseq
        %v1730 = vshrl.u32 %v1729, 7
        %v1731 = vsub.s32 1, %v1730
        %v1732 = vrot.slane %v803, %v1731
        %v1733 = vlaneseq
        %v1734 = vshrl.u32 %v1733, 7
        %v1735 = vsub.s32 1, %v1734
        %v1736 = vrot.slane %v804, %v1735
        %v1737 = vmul.f32 %v1721, %v1732
        %v1738 = vmul.f32 %v1722, %v1736
        %v1739 = vmul.f32 %v1723, %v1732
        %v1740 = vmul.f32 %v1724, %v1736
        %v1741 = vmul.f32 %v1725, %v1732
        %v1742 = vmul.f32 %v1726, %v1736
        %v1743 = vmul.f32 %v1727, %v1732
        %v1744 = vmul.f32 %v1728, %v1736
        %v1745 = vadd.f32 %v1709, %v1737
        %v1746 = vadd.f32 %v1710, %v1738
        %v1747 = vadd.f32 %v1711, %v1739
        %v1748 = vadd.f32 %v1712, %v1740
        %v1749 = vadd.f32 %v1713, %v1741
        %v1750 = vadd.f32 %v1714, %v1742
        %v1751 = vadd.f32 %v1715, %v1743
        %v1752 = vadd.f32 %v1716, %v1744
        %v1753 = vld [vmem:[%s176 + $0x560] sm:$0xff]
        %v1754 = vld [vmem:[%s176 + $0x568] sm:$0xff]
        %v1755 = vld [vmem:[%s176 + $0x570] sm:$0xff]
        %v1756 = vld [vmem:[%s176 + $0x578] sm:$0xff]
        %v1757 = vunpack.c.l.bf16 %v1753
        %v1758 = vunpack.c.h.bf16 %v1753
        %v1759 = vunpack.c.l.bf16 %v1754
        %v1760 = vunpack.c.h.bf16 %v1754
        %v1761 = vunpack.c.l.bf16 %v1755
        %v1762 = vunpack.c.h.bf16 %v1755
        %v1763 = vunpack.c.l.bf16 %v1756
        %v1764 = vunpack.c.h.bf16 %v1756
        %v1765 = vlaneseq
        %v1766 = vshrl.u32 %v1765, 7
        %v1767 = vsub.s32 2, %v1766
        %v1768 = vrot.slane %v803, %v1767
        %v1769 = vlaneseq
        %v1770 = vshrl.u32 %v1769, 7
        %v1771 = vsub.s32 2, %v1770
        %v1772 = vrot.slane %v804, %v1771
        %v1773 = vmul.f32 %v1757, %v1768
        %v1774 = vmul.f32 %v1758, %v1772
        %v1775 = vmul.f32 %v1759, %v1768
        %v1776 = vmul.f32 %v1760, %v1772
        %v1777 = vmul.f32 %v1761, %v1768
        %v1778 = vmul.f32 %v1762, %v1772
        %v1779 = vmul.f32 %v1763, %v1768
        %v1780 = vmul.f32 %v1764, %v1772
        %v1781 = vadd.f32 %v1745, %v1773
        %v1782 = vadd.f32 %v1746, %v1774
        %v1783 = vadd.f32 %v1747, %v1775
        %v1784 = vadd.f32 %v1748, %v1776
        %v1785 = vadd.f32 %v1749, %v1777
        %v1786 = vadd.f32 %v1750, %v1778
        %v1787 = vadd.f32 %v1751, %v1779
        %v1788 = vadd.f32 %v1752, %v1780
        %v1789 = vld [vmem:[%s176 + $0x580] sm:$0xff]
        %v1790 = vld [vmem:[%s176 + $0x588] sm:$0xff]
        %v1791 = vld [vmem:[%s176 + $0x590] sm:$0xff]
        %v1792 = vld [vmem:[%s176 + $0x598] sm:$0xff]
        %v1793 = vunpack.c.l.bf16 %v1789
        %v1794 = vunpack.c.h.bf16 %v1789
        %v1795 = vunpack.c.l.bf16 %v1790
        %v1796 = vunpack.c.h.bf16 %v1790
        %v1797 = vunpack.c.l.bf16 %v1791
        %v1798 = vunpack.c.h.bf16 %v1791
        %v1799 = vunpack.c.l.bf16 %v1792
        %v1800 = vunpack.c.h.bf16 %v1792
        %v1801 = vlaneseq
        %v1802 = vshrl.u32 %v1801, 7
        %v1803 = vsub.s32 3, %v1802
        %v1804 = vrot.slane %v803, %v1803
        %v1805 = vlaneseq
        %v1806 = vshrl.u32 %v1805, 7
        %v1807 = vsub.s32 3, %v1806
        %v1808 = vrot.slane %v804, %v1807
        %v1809 = vmul.f32 %v1793, %v1804
        %v1810 = vmul.f32 %v1794, %v1808
        %v1811 = vmul.f32 %v1795, %v1804
        %v1812 = vmul.f32 %v1796, %v1808
        %v1813 = vmul.f32 %v1797, %v1804
        %v1814 = vmul.f32 %v1798, %v1808
        %v1815 = vmul.f32 %v1799, %v1804
        %v1816 = vmul.f32 %v1800, %v1808
        %v1817 = vadd.f32 %v1781, %v1809
        %v1818 = vadd.f32 %v1782, %v1810
        %v1819 = vadd.f32 %v1783, %v1811
        %v1820 = vadd.f32 %v1784, %v1812
        %v1821 = vadd.f32 %v1785, %v1813
        %v1822 = vadd.f32 %v1786, %v1814
        %v1823 = vadd.f32 %v1787, %v1815
        %v1824 = vadd.f32 %v1788, %v1816
        %v1825 = vld [vmem:[%s176 + $0x5a0] sm:$0xff]
        %v1826 = vld [vmem:[%s176 + $0x5a8] sm:$0xff]
        %v1827 = vld [vmem:[%s176 + $0x5b0] sm:$0xff]
        %v1828 = vld [vmem:[%s176 + $0x5b8] sm:$0xff]
        %v1829 = vunpack.c.l.bf16 %v1825
        %v1830 = vunpack.c.h.bf16 %v1825
        %v1831 = vunpack.c.l.bf16 %v1826
        %v1832 = vunpack.c.h.bf16 %v1826
        %v1833 = vunpack.c.l.bf16 %v1827
        %v1834 = vunpack.c.h.bf16 %v1827
        %v1835 = vunpack.c.l.bf16 %v1828
        %v1836 = vunpack.c.h.bf16 %v1828
        %v1837 = vlaneseq
        %v1838 = vshrl.u32 %v1837, 7
        %v1839 = vsub.s32 4, %v1838
        %v1840 = vrot.slane %v803, %v1839
        %v1841 = vlaneseq
        %v1842 = vshrl.u32 %v1841, 7
        %v1843 = vsub.s32 4, %v1842
        %v1844 = vrot.slane %v804, %v1843
        %v1845 = vmul.f32 %v1829, %v1840
        %v1846 = vmul.f32 %v1830, %v1844
        %v1847 = vmul.f32 %v1831, %v1840
        %v1848 = vmul.f32 %v1832, %v1844
        %v1849 = vmul.f32 %v1833, %v1840
        %v1850 = vmul.f32 %v1834, %v1844
        %v1851 = vmul.f32 %v1835, %v1840
        %v1852 = vmul.f32 %v1836, %v1844
        %v1853 = vadd.f32 %v1817, %v1845
        %v1854 = vadd.f32 %v1818, %v1846
        %v1855 = vadd.f32 %v1819, %v1847
        %v1856 = vadd.f32 %v1820, %v1848
        %v1857 = vadd.f32 %v1821, %v1849
        %v1858 = vadd.f32 %v1822, %v1850
        %v1859 = vadd.f32 %v1823, %v1851
        %v1860 = vadd.f32 %v1824, %v1852
        %v1861 = vld [vmem:[%s176 + $0x5c0] sm:$0xff]
        %v1862 = vld [vmem:[%s176 + $0x5c8] sm:$0xff]
        %v1863 = vld [vmem:[%s176 + $0x5d0] sm:$0xff]
        %v1864 = vld [vmem:[%s176 + $0x5d8] sm:$0xff]
        %v1865 = vunpack.c.l.bf16 %v1861
        %v1866 = vunpack.c.h.bf16 %v1861
        %v1867 = vunpack.c.l.bf16 %v1862
        %v1868 = vunpack.c.h.bf16 %v1862
        %v1869 = vunpack.c.l.bf16 %v1863
        %v1870 = vunpack.c.h.bf16 %v1863
        %v1871 = vunpack.c.l.bf16 %v1864
        %v1872 = vunpack.c.h.bf16 %v1864
        %v1873 = vlaneseq
        %v1874 = vshrl.u32 %v1873, 7
        %v1875 = vsub.s32 5, %v1874
        %v1876 = vrot.slane %v803, %v1875
        %v1877 = vlaneseq
        %v1878 = vshrl.u32 %v1877, 7
        %v1879 = vsub.s32 5, %v1878
        %v1880 = vrot.slane %v804, %v1879
        %v1881 = vmul.f32 %v1865, %v1876
        %v1882 = vmul.f32 %v1866, %v1880
        %v1883 = vmul.f32 %v1867, %v1876
        %v1884 = vmul.f32 %v1868, %v1880
        %v1885 = vmul.f32 %v1869, %v1876
        %v1886 = vmul.f32 %v1870, %v1880
        %v1887 = vmul.f32 %v1871, %v1876
        %v1888 = vmul.f32 %v1872, %v1880
        %v1889 = vadd.f32 %v1853, %v1881
        %v1890 = vadd.f32 %v1854, %v1882
        %v1891 = vadd.f32 %v1855, %v1883
        %v1892 = vadd.f32 %v1856, %v1884
        %v1893 = vadd.f32 %v1857, %v1885
        %v1894 = vadd.f32 %v1858, %v1886
        %v1895 = vadd.f32 %v1859, %v1887
        %v1896 = vadd.f32 %v1860, %v1888
        %v1897 = vld [vmem:[%s176 + $0x5e0] sm:$0xff]
        %v1898 = vld [vmem:[%s176 + $0x5e8] sm:$0xff]
        %v1899 = vld [vmem:[%s176 + $0x5f0] sm:$0xff]
        %v1900 = vld [vmem:[%s176 + $0x5f8] sm:$0xff]
        %v1901 = vunpack.c.l.bf16 %v1897
        %v1902 = vunpack.c.h.bf16 %v1897
        %v1903 = vunpack.c.l.bf16 %v1898
        %v1904 = vunpack.c.h.bf16 %v1898
        %v1905 = vunpack.c.l.bf16 %v1899
        %v1906 = vunpack.c.h.bf16 %v1899
        %v1907 = vunpack.c.l.bf16 %v1900
        %v1908 = vunpack.c.h.bf16 %v1900
        %v1909 = vlaneseq
        %v1910 = vshrl.u32 %v1909, 7
        %v1911 = vsub.s32 6, %v1910
        %v1912 = vrot.slane %v803, %v1911
        %v1913 = vlaneseq
        %v1914 = vshrl.u32 %v1913, 7
        %v1915 = vsub.s32 6, %v1914
        %v1916 = vrot.slane %v804, %v1915
        %v1917 = vmul.f32 %v1901, %v1912
        %v1918 = vmul.f32 %v1902, %v1916
        %v1919 = vmul.f32 %v1903, %v1912
        %v1920 = vmul.f32 %v1904, %v1916
        %v1921 = vmul.f32 %v1905, %v1912
        %v1922 = vmul.f32 %v1906, %v1916
        %v1923 = vmul.f32 %v1907, %v1912
        %v1924 = vmul.f32 %v1908, %v1916
        %v1925 = vadd.f32 %v1889, %v1917
        %v1926 = vadd.f32 %v1890, %v1918
        %v1927 = vadd.f32 %v1891, %v1919
        %v1928 = vadd.f32 %v1892, %v1920
        %v1929 = vadd.f32 %v1893, %v1921
        %v1930 = vadd.f32 %v1894, %v1922
        %v1931 = vadd.f32 %v1895, %v1923
        %v1932 = vadd.f32 %v1896, %v1924
        %v1933 = vld [vmem:[%s176 + $0x600] sm:$0xff]
        %v1934 = vld [vmem:[%s176 + $0x608] sm:$0xff]
        %v1935 = vld [vmem:[%s176 + $0x610] sm:$0xff]
        %v1936 = vld [vmem:[%s176 + $0x618] sm:$0xff]
        %v1937 = vunpack.c.l.bf16 %v1933
        %v1938 = vunpack.c.h.bf16 %v1933
        %v1939 = vunpack.c.l.bf16 %v1934
        %v1940 = vunpack.c.h.bf16 %v1934
        %v1941 = vunpack.c.l.bf16 %v1935
        %v1942 = vunpack.c.h.bf16 %v1935
        %v1943 = vunpack.c.l.bf16 %v1936
        %v1944 = vunpack.c.h.bf16 %v1936
        %v1945 = vlaneseq
        %v1946 = vshrl.u32 %v1945, 7
        %v1947 = vsub.s32 7, %v1946
        %v1948 = vrot.slane %v803, %v1947
        %v1949 = vlaneseq
        %v1950 = vshrl.u32 %v1949, 7
        %v1951 = vsub.s32 7, %v1950
        %v1952 = vrot.slane %v804, %v1951
        %v1953 = vmul.f32 %v1937, %v1948
        %v1954 = vmul.f32 %v1938, %v1952
        %v1955 = vmul.f32 %v1939, %v1948
        %v1956 = vmul.f32 %v1940, %v1952
        %v1957 = vmul.f32 %v1941, %v1948
        %v1958 = vmul.f32 %v1942, %v1952
        %v1959 = vmul.f32 %v1943, %v1948
        %v1960 = vmul.f32 %v1944, %v1952
        %v1961 = vadd.f32 %v1925, %v1953
        %v1962 = vadd.f32 %v1926, %v1954
        %v1963 = vadd.f32 %v1927, %v1955
        %v1964 = vadd.f32 %v1928, %v1956
        %v1965 = vadd.f32 %v1929, %v1957
        %v1966 = vadd.f32 %v1930, %v1958
        %v1967 = vadd.f32 %v1931, %v1959
        %v1968 = vadd.f32 %v1932, %v1960
        %v1969 = vtanh.pop %v1961
        %v1970 = vtanh.pop %v1962
        %v1971 = vtanh.pop %v1963
        %v1972 = vtanh.pop %v1964
        %v1973 = vtanh.pop %v1965
        %v1974 = vtanh.pop %v1966
        %v1975 = vtanh.pop %v1967
        %v1976 = vtanh.pop %v1968
        %v1977 = vld [vmem:[%s176 + $0x840] sm:$0xff]
        %v1978 = vld [vmem:[%s176 + $0x848] sm:$0xff]
        %v1979 = vunpack.c.l.bf16 %v1977
        %v1980 = vunpack.c.h.bf16 %v1977
        %v1981 = vunpack.c.l.bf16 %v1978
        %v1982 = vunpack.c.h.bf16 %v1978
        %v1983 = vld [vmem:[%s176 + $0x640] sm:$0xff]
        %v1984 = vld [vmem:[%s176 + $0x648] sm:$0xff]
        %v1985 = vunpack.c.l.bf16 %v1983
        %v1986 = vunpack.c.h.bf16 %v1983
        %v1987 = vunpack.c.l.bf16 %v1984
        %v1988 = vunpack.c.h.bf16 %v1984
        %v1989 = vlaneseq
        %v1990 = vshrl.u32 %v1989, 7
        %v1991 = vsub.s32 0, %v1990
        %v1992 = vrot.slane %v1969, %v1991
        %v1993 = vlaneseq
        %v1994 = vshrl.u32 %v1993, 7
        %v1995 = vsub.s32 0, %v1994
        %v1996 = vrot.slane %v1970, %v1995
        %v1997 = vmul.f32 %v1985, %v1992
        %v1998 = vmul.f32 %v1986, %v1996
        %v1999 = vmul.f32 %v1987, %v1992
        %v2000 = vmul.f32 %v1988, %v1996
        %v2001 = vadd.f32 %v1979, %v1997
        %v2002 = vadd.f32 %v1980, %v1998
        %v2003 = vadd.f32 %v1981, %v1999
        %v2004 = vadd.f32 %v1982, %v2000
        %v2005 = vld [vmem:[%s176 + $0x650] sm:$0xff]
        %v2006 = vld [vmem:[%s176 + $0x658] sm:$0xff]
        %v2007 = vunpack.c.l.bf16 %v2005
        %v2008 = vunpack.c.h.bf16 %v2005
        %v2009 = vunpack.c.l.bf16 %v2006
        %v2010 = vunpack.c.h.bf16 %v2006
        %v2011 = vlaneseq
        %v2012 = vshrl.u32 %v2011, 7
        %v2013 = vsub.s32 1, %v2012
        %v2014 = vrot.slane %v1969, %v2013
        %v2015 = vlaneseq
        %v2016 = vshrl.u32 %v2015, 7
        %v2017 = vsub.s32 1, %v2016
        %v2018 = vrot.slane %v1970, %v2017
        %v2019 = vmul.f32 %v2007, %v2014
        %v2020 = vmul.f32 %v2008, %v2018
        %v2021 = vmul.f32 %v2009, %v2014
        %v2022 = vmul.f32 %v2010, %v2018
        %v2023 = vadd.f32 %v2001, %v2019
        %v2024 = vadd.f32 %v2002, %v2020
        %v2025 = vadd.f32 %v2003, %v2021
        %v2026 = vadd.f32 %v2004, %v2022
        %v2027 = vld [vmem:[%s176 + $0x660] sm:$0xff]
        %v2028 = vld [vmem:[%s176 + $0x668] sm:$0xff]
        %v2029 = vunpack.c.l.bf16 %v2027
        %v2030 = vunpack.c.h.bf16 %v2027
        %v2031 = vunpack.c.l.bf16 %v2028
        %v2032 = vunpack.c.h.bf16 %v2028
        %v2033 = vlaneseq
        %v2034 = vshrl.u32 %v2033, 7
        %v2035 = vsub.s32 2, %v2034
        %v2036 = vrot.slane %v1969, %v2035
        %v2037 = vlaneseq
        %v2038 = vshrl.u32 %v2037, 7
        %v2039 = vsub.s32 2, %v2038
        %v2040 = vrot.slane %v1970, %v2039
        %v2041 = vmul.f32 %v2029, %v2036
        %v2042 = vmul.f32 %v2030, %v2040
        %v2043 = vmul.f32 %v2031, %v2036
        %v2044 = vmul.f32 %v2032, %v2040
        %v2045 = vadd.f32 %v2023, %v2041
        %v2046 = vadd.f32 %v2024, %v2042
        %v2047 = vadd.f32 %v2025, %v2043
        %v2048 = vadd.f32 %v2026, %v2044
        %v2049 = vld [vmem:[%s176 + $0x670] sm:$0xff]
        %v2050 = vld [vmem:[%s176 + $0x678] sm:$0xff]
        %v2051 = vunpack.c.l.bf16 %v2049
        %v2052 = vunpack.c.h.bf16 %v2049
        %v2053 = vunpack.c.l.bf16 %v2050
        %v2054 = vunpack.c.h.bf16 %v2050
        %v2055 = vlaneseq
        %v2056 = vshrl.u32 %v2055, 7
        %v2057 = vsub.s32 3, %v2056
        %v2058 = vrot.slane %v1969, %v2057
        %v2059 = vlaneseq
        %v2060 = vshrl.u32 %v2059, 7
        %v2061 = vsub.s32 3, %v2060
        %v2062 = vrot.slane %v1970, %v2061
        %v2063 = vmul.f32 %v2051, %v2058
        %v2064 = vmul.f32 %v2052, %v2062
        %v2065 = vmul.f32 %v2053, %v2058
        %v2066 = vmul.f32 %v2054, %v2062
        %v2067 = vadd.f32 %v2045, %v2063
        %v2068 = vadd.f32 %v2046, %v2064
        %v2069 = vadd.f32 %v2047, %v2065
        %v2070 = vadd.f32 %v2048, %v2066
        %v2071 = vld [vmem:[%s176 + $0x680] sm:$0xff]
        %v2072 = vld [vmem:[%s176 + $0x688] sm:$0xff]
        %v2073 = vunpack.c.l.bf16 %v2071
        %v2074 = vunpack.c.h.bf16 %v2071
        %v2075 = vunpack.c.l.bf16 %v2072
        %v2076 = vunpack.c.h.bf16 %v2072
        %v2077 = vlaneseq
        %v2078 = vshrl.u32 %v2077, 7
        %v2079 = vsub.s32 4, %v2078
        %v2080 = vrot.slane %v1969, %v2079
        %v2081 = vlaneseq
        %v2082 = vshrl.u32 %v2081, 7
        %v2083 = vsub.s32 4, %v2082
        %v2084 = vrot.slane %v1970, %v2083
        %v2085 = vmul.f32 %v2073, %v2080
        %v2086 = vmul.f32 %v2074, %v2084
        %v2087 = vmul.f32 %v2075, %v2080
        %v2088 = vmul.f32 %v2076, %v2084
        %v2089 = vadd.f32 %v2067, %v2085
        %v2090 = vadd.f32 %v2068, %v2086
        %v2091 = vadd.f32 %v2069, %v2087
        %v2092 = vadd.f32 %v2070, %v2088
        %v2093 = vld [vmem:[%s176 + $0x690] sm:$0xff]
        %v2094 = vld [vmem:[%s176 + $0x698] sm:$0xff]
        %v2095 = vunpack.c.l.bf16 %v2093
        %v2096 = vunpack.c.h.bf16 %v2093
        %v2097 = vunpack.c.l.bf16 %v2094
        %v2098 = vunpack.c.h.bf16 %v2094
        %v2099 = vlaneseq
        %v2100 = vshrl.u32 %v2099, 7
        %v2101 = vsub.s32 5, %v2100
        %v2102 = vrot.slane %v1969, %v2101
        %v2103 = vlaneseq
        %v2104 = vshrl.u32 %v2103, 7
        %v2105 = vsub.s32 5, %v2104
        %v2106 = vrot.slane %v1970, %v2105
        %v2107 = vmul.f32 %v2095, %v2102
        %v2108 = vmul.f32 %v2096, %v2106
        %v2109 = vmul.f32 %v2097, %v2102
        %v2110 = vmul.f32 %v2098, %v2106
        %v2111 = vadd.f32 %v2089, %v2107
        %v2112 = vadd.f32 %v2090, %v2108
        %v2113 = vadd.f32 %v2091, %v2109
        %v2114 = vadd.f32 %v2092, %v2110
        %v2115 = vld [vmem:[%s176 + $0x6a0] sm:$0xff]
        %v2116 = vld [vmem:[%s176 + $0x6a8] sm:$0xff]
        %v2117 = vunpack.c.l.bf16 %v2115
        %v2118 = vunpack.c.h.bf16 %v2115
        %v2119 = vunpack.c.l.bf16 %v2116
        %v2120 = vunpack.c.h.bf16 %v2116
        %v2121 = vlaneseq
        %v2122 = vshrl.u32 %v2121, 7
        %v2123 = vsub.s32 6, %v2122
        %v2124 = vrot.slane %v1969, %v2123
        %v2125 = vlaneseq
        %v2126 = vshrl.u32 %v2125, 7
        %v2127 = vsub.s32 6, %v2126
        %v2128 = vrot.slane %v1970, %v2127
        %v2129 = vmul.f32 %v2117, %v2124
        %v2130 = vmul.f32 %v2118, %v2128
        %v2131 = vmul.f32 %v2119, %v2124
        %v2132 = vmul.f32 %v2120, %v2128
        %v2133 = vadd.f32 %v2111, %v2129
        %v2134 = vadd.f32 %v2112, %v2130
        %v2135 = vadd.f32 %v2113, %v2131
        %v2136 = vadd.f32 %v2114, %v2132
        %v2137 = vld [vmem:[%s176 + $0x6b0] sm:$0xff]
        %v2138 = vld [vmem:[%s176 + $0x6b8] sm:$0xff]
        %v2139 = vunpack.c.l.bf16 %v2137
        %v2140 = vunpack.c.h.bf16 %v2137
        %v2141 = vunpack.c.l.bf16 %v2138
        %v2142 = vunpack.c.h.bf16 %v2138
        %v2143 = vlaneseq
        %v2144 = vshrl.u32 %v2143, 7
        %v2145 = vsub.s32 7, %v2144
        %v2146 = vrot.slane %v1969, %v2145
        %v2147 = vlaneseq
        %v2148 = vshrl.u32 %v2147, 7
        %v2149 = vsub.s32 7, %v2148
        %v2150 = vrot.slane %v1970, %v2149
        %v2151 = vmul.f32 %v2139, %v2146
        %v2152 = vmul.f32 %v2140, %v2150
        %v2153 = vmul.f32 %v2141, %v2146
        %v2154 = vmul.f32 %v2142, %v2150
        %v2155 = vadd.f32 %v2133, %v2151
        %v2156 = vadd.f32 %v2134, %v2152
        %v2157 = vadd.f32 %v2135, %v2153
        %v2158 = vadd.f32 %v2136, %v2154
        %v2159 = vld [vmem:[%s176 + $0x6c0] sm:$0xff]
        %v2160 = vld [vmem:[%s176 + $0x6c8] sm:$0xff]
        %v2161 = vunpack.c.l.bf16 %v2159
        %v2162 = vunpack.c.h.bf16 %v2159
        %v2163 = vunpack.c.l.bf16 %v2160
        %v2164 = vunpack.c.h.bf16 %v2160
        %v2165 = vlaneseq
        %v2166 = vshrl.u32 %v2165, 7
        %v2167 = vsub.s32 0, %v2166
        %v2168 = vrot.slane %v1971, %v2167
        %v2169 = vlaneseq
        %v2170 = vshrl.u32 %v2169, 7
        %v2171 = vsub.s32 0, %v2170
        %v2172 = vrot.slane %v1972, %v2171
        %v2173 = vmul.f32 %v2161, %v2168
        %v2174 = vmul.f32 %v2162, %v2172
        %v2175 = vmul.f32 %v2163, %v2168
        %v2176 = vmul.f32 %v2164, %v2172
        %v2177 = vadd.f32 %v2155, %v2173
        %v2178 = vadd.f32 %v2156, %v2174
        %v2179 = vadd.f32 %v2157, %v2175
        %v2180 = vadd.f32 %v2158, %v2176
        %v2181 = vld [vmem:[%s176 + $0x6d0] sm:$0xff]
        %v2182 = vld [vmem:[%s176 + $0x6d8] sm:$0xff]
        %v2183 = vunpack.c.l.bf16 %v2181
        %v2184 = vunpack.c.h.bf16 %v2181
        %v2185 = vunpack.c.l.bf16 %v2182
        %v2186 = vunpack.c.h.bf16 %v2182
        %v2187 = vlaneseq
        %v2188 = vshrl.u32 %v2187, 7
        %v2189 = vsub.s32 1, %v2188
        %v2190 = vrot.slane %v1971, %v2189
        %v2191 = vlaneseq
        %v2192 = vshrl.u32 %v2191, 7
        %v2193 = vsub.s32 1, %v2192
        %v2194 = vrot.slane %v1972, %v2193
        %v2195 = vmul.f32 %v2183, %v2190
        %v2196 = vmul.f32 %v2184, %v2194
        %v2197 = vmul.f32 %v2185, %v2190
        %v2198 = vmul.f32 %v2186, %v2194
        %v2199 = vadd.f32 %v2177, %v2195
        %v2200 = vadd.f32 %v2178, %v2196
        %v2201 = vadd.f32 %v2179, %v2197
        %v2202 = vadd.f32 %v2180, %v2198
        %v2203 = vld [vmem:[%s176 + $0x6e0] sm:$0xff]
        %v2204 = vld [vmem:[%s176 + $0x6e8] sm:$0xff]
        %v2205 = vunpack.c.l.bf16 %v2203
        %v2206 = vunpack.c.h.bf16 %v2203
        %v2207 = vunpack.c.l.bf16 %v2204
        %v2208 = vunpack.c.h.bf16 %v2204
        %v2209 = vlaneseq
        %v2210 = vshrl.u32 %v2209, 7
        %v2211 = vsub.s32 2, %v2210
        %v2212 = vrot.slane %v1971, %v2211
        %v2213 = vlaneseq
        %v2214 = vshrl.u32 %v2213, 7
        %v2215 = vsub.s32 2, %v2214
        %v2216 = vrot.slane %v1972, %v2215
        %v2217 = vmul.f32 %v2205, %v2212
        %v2218 = vmul.f32 %v2206, %v2216
        %v2219 = vmul.f32 %v2207, %v2212
        %v2220 = vmul.f32 %v2208, %v2216
        %v2221 = vadd.f32 %v2199, %v2217
        %v2222 = vadd.f32 %v2200, %v2218
        %v2223 = vadd.f32 %v2201, %v2219
        %v2224 = vadd.f32 %v2202, %v2220
        %v2225 = vld [vmem:[%s176 + $0x6f0] sm:$0xff]
        %v2226 = vld [vmem:[%s176 + $0x6f8] sm:$0xff]
        %v2227 = vunpack.c.l.bf16 %v2225
        %v2228 = vunpack.c.h.bf16 %v2225
        %v2229 = vunpack.c.l.bf16 %v2226
        %v2230 = vunpack.c.h.bf16 %v2226
        %v2231 = vlaneseq
        %v2232 = vshrl.u32 %v2231, 7
        %v2233 = vsub.s32 3, %v2232
        %v2234 = vrot.slane %v1971, %v2233
        %v2235 = vlaneseq
        %v2236 = vshrl.u32 %v2235, 7
        %v2237 = vsub.s32 3, %v2236
        %v2238 = vrot.slane %v1972, %v2237
        %v2239 = vmul.f32 %v2227, %v2234
        %v2240 = vmul.f32 %v2228, %v2238
        %v2241 = vmul.f32 %v2229, %v2234
        %v2242 = vmul.f32 %v2230, %v2238
        %v2243 = vadd.f32 %v2221, %v2239
        %v2244 = vadd.f32 %v2222, %v2240
        %v2245 = vadd.f32 %v2223, %v2241
        %v2246 = vadd.f32 %v2224, %v2242
        %v2247 = vld [vmem:[%s176 + $0x700] sm:$0xff]
        %v2248 = vld [vmem:[%s176 + $0x708] sm:$0xff]
        %v2249 = vunpack.c.l.bf16 %v2247
        %v2250 = vunpack.c.h.bf16 %v2247
        %v2251 = vunpack.c.l.bf16 %v2248
        %v2252 = vunpack.c.h.bf16 %v2248
        %v2253 = vlaneseq
        %v2254 = vshrl.u32 %v2253, 7
        %v2255 = vsub.s32 4, %v2254
        %v2256 = vrot.slane %v1971, %v2255
        %v2257 = vlaneseq
        %v2258 = vshrl.u32 %v2257, 7
        %v2259 = vsub.s32 4, %v2258
        %v2260 = vrot.slane %v1972, %v2259
        %v2261 = vmul.f32 %v2249, %v2256
        %v2262 = vmul.f32 %v2250, %v2260
        %v2263 = vmul.f32 %v2251, %v2256
        %v2264 = vmul.f32 %v2252, %v2260
        %v2265 = vadd.f32 %v2243, %v2261
        %v2266 = vadd.f32 %v2244, %v2262
        %v2267 = vadd.f32 %v2245, %v2263
        %v2268 = vadd.f32 %v2246, %v2264
        %v2269 = vld [vmem:[%s176 + $0x710] sm:$0xff]
        %v2270 = vld [vmem:[%s176 + $0x718] sm:$0xff]
        %v2271 = vunpack.c.l.bf16 %v2269
        %v2272 = vunpack.c.h.bf16 %v2269
        %v2273 = vunpack.c.l.bf16 %v2270
        %v2274 = vunpack.c.h.bf16 %v2270
        %v2275 = vlaneseq
        %v2276 = vshrl.u32 %v2275, 7
        %v2277 = vsub.s32 5, %v2276
        %v2278 = vrot.slane %v1971, %v2277
        %v2279 = vlaneseq
        %v2280 = vshrl.u32 %v2279, 7
        %v2281 = vsub.s32 5, %v2280
        %v2282 = vrot.slane %v1972, %v2281
        %v2283 = vmul.f32 %v2271, %v2278
        %v2284 = vmul.f32 %v2272, %v2282
        %v2285 = vmul.f32 %v2273, %v2278
        %v2286 = vmul.f32 %v2274, %v2282
        %v2287 = vadd.f32 %v2265, %v2283
        %v2288 = vadd.f32 %v2266, %v2284
        %v2289 = vadd.f32 %v2267, %v2285
        %v2290 = vadd.f32 %v2268, %v2286
        %v2291 = vld [vmem:[%s176 + $0x720] sm:$0xff]
        %v2292 = vld [vmem:[%s176 + $0x728] sm:$0xff]
        %v2293 = vunpack.c.l.bf16 %v2291
        %v2294 = vunpack.c.h.bf16 %v2291
        %v2295 = vunpack.c.l.bf16 %v2292
        %v2296 = vunpack.c.h.bf16 %v2292
        %v2297 = vlaneseq
        %v2298 = vshrl.u32 %v2297, 7
        %v2299 = vsub.s32 6, %v2298
        %v2300 = vrot.slane %v1971, %v2299
        %v2301 = vlaneseq
        %v2302 = vshrl.u32 %v2301, 7
        %v2303 = vsub.s32 6, %v2302
        %v2304 = vrot.slane %v1972, %v2303
        %v2305 = vmul.f32 %v2293, %v2300
        %v2306 = vmul.f32 %v2294, %v2304
        %v2307 = vmul.f32 %v2295, %v2300
        %v2308 = vmul.f32 %v2296, %v2304
        %v2309 = vadd.f32 %v2287, %v2305
        %v2310 = vadd.f32 %v2288, %v2306
        %v2311 = vadd.f32 %v2289, %v2307
        %v2312 = vadd.f32 %v2290, %v2308
        %v2313 = vld [vmem:[%s176 + $0x730] sm:$0xff]
        %v2314 = vld [vmem:[%s176 + $0x738] sm:$0xff]
        %v2315 = vunpack.c.l.bf16 %v2313
        %v2316 = vunpack.c.h.bf16 %v2313
        %v2317 = vunpack.c.l.bf16 %v2314
        %v2318 = vunpack.c.h.bf16 %v2314
        %v2319 = vlaneseq
        %v2320 = vshrl.u32 %v2319, 7
        %v2321 = vsub.s32 7, %v2320
        %v2322 = vrot.slane %v1971, %v2321
        %v2323 = vlaneseq
        %v2324 = vshrl.u32 %v2323, 7
        %v2325 = vsub.s32 7, %v2324
        %v2326 = vrot.slane %v1972, %v2325
        %v2327 = vmul.f32 %v2315, %v2322
        %v2328 = vmul.f32 %v2316, %v2326
        %v2329 = vmul.f32 %v2317, %v2322
        %v2330 = vmul.f32 %v2318, %v2326
        %v2331 = vadd.f32 %v2309, %v2327
        %v2332 = vadd.f32 %v2310, %v2328
        %v2333 = vadd.f32 %v2311, %v2329
        %v2334 = vadd.f32 %v2312, %v2330
        %v2335 = vld [vmem:[%s176 + $0x740] sm:$0xff]
        %v2336 = vld [vmem:[%s176 + $0x748] sm:$0xff]
        %v2337 = vunpack.c.l.bf16 %v2335
        %v2338 = vunpack.c.h.bf16 %v2335
        %v2339 = vunpack.c.l.bf16 %v2336
        %v2340 = vunpack.c.h.bf16 %v2336
        %v2341 = vlaneseq
        %v2342 = vshrl.u32 %v2341, 7
        %v2343 = vsub.s32 0, %v2342
        %v2344 = vrot.slane %v1973, %v2343
        %v2345 = vlaneseq
        %v2346 = vshrl.u32 %v2345, 7
        %v2347 = vsub.s32 0, %v2346
        %v2348 = vrot.slane %v1974, %v2347
        %v2349 = vmul.f32 %v2337, %v2344
        %v2350 = vmul.f32 %v2338, %v2348
        %v2351 = vmul.f32 %v2339, %v2344
        %v2352 = vmul.f32 %v2340, %v2348
        %v2353 = vadd.f32 %v2331, %v2349
        %v2354 = vadd.f32 %v2332, %v2350
        %v2355 = vadd.f32 %v2333, %v2351
        %v2356 = vadd.f32 %v2334, %v2352
        %v2357 = vld [vmem:[%s176 + $0x750] sm:$0xff]
        %v2358 = vld [vmem:[%s176 + $0x758] sm:$0xff]
        %v2359 = vunpack.c.l.bf16 %v2357
        %v2360 = vunpack.c.h.bf16 %v2357
        %v2361 = vunpack.c.l.bf16 %v2358
        %v2362 = vunpack.c.h.bf16 %v2358
        %v2363 = vlaneseq
        %v2364 = vshrl.u32 %v2363, 7
        %v2365 = vsub.s32 1, %v2364
        %v2366 = vrot.slane %v1973, %v2365
        %v2367 = vlaneseq
        %v2368 = vshrl.u32 %v2367, 7
        %v2369 = vsub.s32 1, %v2368
        %v2370 = vrot.slane %v1974, %v2369
        %v2371 = vmul.f32 %v2359, %v2366
        %v2372 = vmul.f32 %v2360, %v2370
        %v2373 = vmul.f32 %v2361, %v2366
        %v2374 = vmul.f32 %v2362, %v2370
        %v2375 = vadd.f32 %v2353, %v2371
        %v2376 = vadd.f32 %v2354, %v2372
        %v2377 = vadd.f32 %v2355, %v2373
        %v2378 = vadd.f32 %v2356, %v2374
        %v2379 = vld [vmem:[%s176 + $0x760] sm:$0xff]
        %v2380 = vld [vmem:[%s176 + $0x768] sm:$0xff]
        %v2381 = vunpack.c.l.bf16 %v2379
        %v2382 = vunpack.c.h.bf16 %v2379
        %v2383 = vunpack.c.l.bf16 %v2380
        %v2384 = vunpack.c.h.bf16 %v2380
        %v2385 = vlaneseq
        %v2386 = vshrl.u32 %v2385, 7
        %v2387 = vsub.s32 2, %v2386
        %v2388 = vrot.slane %v1973, %v2387
        %v2389 = vlaneseq
        %v2390 = vshrl.u32 %v2389, 7
        %v2391 = vsub.s32 2, %v2390
        %v2392 = vrot.slane %v1974, %v2391
        %v2393 = vmul.f32 %v2381, %v2388
        %v2394 = vmul.f32 %v2382, %v2392
        %v2395 = vmul.f32 %v2383, %v2388
        %v2396 = vmul.f32 %v2384, %v2392
        %v2397 = vadd.f32 %v2375, %v2393
        %v2398 = vadd.f32 %v2376, %v2394
        %v2399 = vadd.f32 %v2377, %v2395
        %v2400 = vadd.f32 %v2378, %v2396
        %v2401 = vld [vmem:[%s176 + $0x770] sm:$0xff]
        %v2402 = vld [vmem:[%s176 + $0x778] sm:$0xff]
        %v2403 = vunpack.c.l.bf16 %v2401
        %v2404 = vunpack.c.h.bf16 %v2401
        %v2405 = vunpack.c.l.bf16 %v2402
        %v2406 = vunpack.c.h.bf16 %v2402
        %v2407 = vlaneseq
        %v2408 = vshrl.u32 %v2407, 7
        %v2409 = vsub.s32 3, %v2408
        %v2410 = vrot.slane %v1973, %v2409
        %v2411 = vlaneseq
        %v2412 = vshrl.u32 %v2411, 7
        %v2413 = vsub.s32 3, %v2412
        %v2414 = vrot.slane %v1974, %v2413
        %v2415 = vmul.f32 %v2403, %v2410
        %v2416 = vmul.f32 %v2404, %v2414
        %v2417 = vmul.f32 %v2405, %v2410
        %v2418 = vmul.f32 %v2406, %v2414
        %v2419 = vadd.f32 %v2397, %v2415
        %v2420 = vadd.f32 %v2398, %v2416
        %v2421 = vadd.f32 %v2399, %v2417
        %v2422 = vadd.f32 %v2400, %v2418
        %v2423 = vld [vmem:[%s176 + $0x780] sm:$0xff]
        %v2424 = vld [vmem:[%s176 + $0x788] sm:$0xff]
        %v2425 = vunpack.c.l.bf16 %v2423
        %v2426 = vunpack.c.h.bf16 %v2423
        %v2427 = vunpack.c.l.bf16 %v2424
        %v2428 = vunpack.c.h.bf16 %v2424
        %v2429 = vlaneseq
        %v2430 = vshrl.u32 %v2429, 7
        %v2431 = vsub.s32 4, %v2430
        %v2432 = vrot.slane %v1973, %v2431
        %v2433 = vlaneseq
        %v2434 = vshrl.u32 %v2433, 7
        %v2435 = vsub.s32 4, %v2434
        %v2436 = vrot.slane %v1974, %v2435
        %v2437 = vmul.f32 %v2425, %v2432
        %v2438 = vmul.f32 %v2426, %v2436
        %v2439 = vmul.f32 %v2427, %v2432
        %v2440 = vmul.f32 %v2428, %v2436
        %v2441 = vadd.f32 %v2419, %v2437
        %v2442 = vadd.f32 %v2420, %v2438
        %v2443 = vadd.f32 %v2421, %v2439
        %v2444 = vadd.f32 %v2422, %v2440
        %v2445 = vld [vmem:[%s176 + $0x790] sm:$0xff]
        %v2446 = vld [vmem:[%s176 + $0x798] sm:$0xff]
        %v2447 = vunpack.c.l.bf16 %v2445
        %v2448 = vunpack.c.h.bf16 %v2445
        %v2449 = vunpack.c.l.bf16 %v2446
        %v2450 = vunpack.c.h.bf16 %v2446
        %v2451 = vlaneseq
        %v2452 = vshrl.u32 %v2451, 7
        %v2453 = vsub.s32 5, %v2452
        %v2454 = vrot.slane %v1973, %v2453
        %v2455 = vlaneseq
        %v2456 = vshrl.u32 %v2455, 7
        %v2457 = vsub.s32 5, %v2456
        %v2458 = vrot.slane %v1974, %v2457
        %v2459 = vmul.f32 %v2447, %v2454
        %v2460 = vmul.f32 %v2448, %v2458
        %v2461 = vmul.f32 %v2449, %v2454
        %v2462 = vmul.f32 %v2450, %v2458
        %v2463 = vadd.f32 %v2441, %v2459
        %v2464 = vadd.f32 %v2442, %v2460
        %v2465 = vadd.f32 %v2443, %v2461
        %v2466 = vadd.f32 %v2444, %v2462
        %v2467 = vld [vmem:[%s176 + $0x7a0] sm:$0xff]
        %v2468 = vld [vmem:[%s176 + $0x7a8] sm:$0xff]
        %v2469 = vunpack.c.l.bf16 %v2467
        %v2470 = vunpack.c.h.bf16 %v2467
        %v2471 = vunpack.c.l.bf16 %v2468
        %v2472 = vunpack.c.h.bf16 %v2468
        %v2473 = vlaneseq
        %v2474 = vshrl.u32 %v2473, 7
        %v2475 = vsub.s32 6, %v2474
        %v2476 = vrot.slane %v1973, %v2475
        %v2477 = vlaneseq
        %v2478 = vshrl.u32 %v2477, 7
        %v2479 = vsub.s32 6, %v2478
        %v2480 = vrot.slane %v1974, %v2479
        %v2481 = vmul.f32 %v2469, %v2476
        %v2482 = vmul.f32 %v2470, %v2480
        %v2483 = vmul.f32 %v2471, %v2476
        %v2484 = vmul.f32 %v2472, %v2480
        %v2485 = vadd.f32 %v2463, %v2481
        %v2486 = vadd.f32 %v2464, %v2482
        %v2487 = vadd.f32 %v2465, %v2483
        %v2488 = vadd.f32 %v2466, %v2484
        %v2489 = vld [vmem:[%s176 + $0x7b0] sm:$0xff]
        %v2490 = vld [vmem:[%s176 + $0x7b8] sm:$0xff]
        %v2491 = vunpack.c.l.bf16 %v2489
        %v2492 = vunpack.c.h.bf16 %v2489
        %v2493 = vunpack.c.l.bf16 %v2490
        %v2494 = vunpack.c.h.bf16 %v2490
        %v2495 = vlaneseq
        %v2496 = vshrl.u32 %v2495, 7
        %v2497 = vsub.s32 7, %v2496
        %v2498 = vrot.slane %v1973, %v2497
        %v2499 = vlaneseq
        %v2500 = vshrl.u32 %v2499, 7
        %v2501 = vsub.s32 7, %v2500
        %v2502 = vrot.slane %v1974, %v2501
        %v2503 = vmul.f32 %v2491, %v2498
        %v2504 = vmul.f32 %v2492, %v2502
        %v2505 = vmul.f32 %v2493, %v2498
        %v2506 = vmul.f32 %v2494, %v2502
        %v2507 = vadd.f32 %v2485, %v2503
        %v2508 = vadd.f32 %v2486, %v2504
        %v2509 = vadd.f32 %v2487, %v2505
        %v2510 = vadd.f32 %v2488, %v2506
        %v2511 = vld [vmem:[%s176 + $0x7c0] sm:$0xff]
        %v2512 = vld [vmem:[%s176 + $0x7c8] sm:$0xff]
        %v2513 = vunpack.c.l.bf16 %v2511
        %v2514 = vunpack.c.h.bf16 %v2511
        %v2515 = vunpack.c.l.bf16 %v2512
        %v2516 = vunpack.c.h.bf16 %v2512
        %v2517 = vlaneseq
        %v2518 = vshrl.u32 %v2517, 7
        %v2519 = vsub.s32 0, %v2518
        %v2520 = vrot.slane %v1975, %v2519
        %v2521 = vlaneseq
        %v2522 = vshrl.u32 %v2521, 7
        %v2523 = vsub.s32 0, %v2522
        %v2524 = vrot.slane %v1976, %v2523
        %v2525 = vmul.f32 %v2513, %v2520
        %v2526 = vmul.f32 %v2514, %v2524
        %v2527 = vmul.f32 %v2515, %v2520
        %v2528 = vmul.f32 %v2516, %v2524
        %v2529 = vadd.f32 %v2507, %v2525
        %v2530 = vadd.f32 %v2508, %v2526
        %v2531 = vadd.f32 %v2509, %v2527
        %v2532 = vadd.f32 %v2510, %v2528
        %v2533 = vld [vmem:[%s176 + $0x7d0] sm:$0xff]
        %v2534 = vld [vmem:[%s176 + $0x7d8] sm:$0xff]
        %v2535 = vunpack.c.l.bf16 %v2533
        %v2536 = vunpack.c.h.bf16 %v2533
        %v2537 = vunpack.c.l.bf16 %v2534
        %v2538 = vunpack.c.h.bf16 %v2534
        %v2539 = vlaneseq
        %v2540 = vshrl.u32 %v2539, 7
        %v2541 = vsub.s32 1, %v2540
        %v2542 = vrot.slane %v1975, %v2541
        %v2543 = vlaneseq
        %v2544 = vshrl.u32 %v2543, 7
        %v2545 = vsub.s32 1, %v2544
        %v2546 = vrot.slane %v1976, %v2545
        %v2547 = vmul.f32 %v2535, %v2542
        %v2548 = vmul.f32 %v2536, %v2546
        %v2549 = vmul.f32 %v2537, %v2542
        %v2550 = vmul.f32 %v2538, %v2546
        %v2551 = vadd.f32 %v2529, %v2547
        %v2552 = vadd.f32 %v2530, %v2548
        %v2553 = vadd.f32 %v2531, %v2549
        %v2554 = vadd.f32 %v2532, %v2550
        %v2555 = vld [vmem:[%s176 + $0x7e0] sm:$0xff]
        %v2556 = vld [vmem:[%s176 + $0x7e8] sm:$0xff]
        %v2557 = vunpack.c.l.bf16 %v2555
        %v2558 = vunpack.c.h.bf16 %v2555
        %v2559 = vunpack.c.l.bf16 %v2556
        %v2560 = vunpack.c.h.bf16 %v2556
        %v2561 = vlaneseq
        %v2562 = vshrl.u32 %v2561, 7
        %v2563 = vsub.s32 2, %v2562
        %v2564 = vrot.slane %v1975, %v2563
        %v2565 = vlaneseq
        %v2566 = vshrl.u32 %v2565, 7
        %v2567 = vsub.s32 2, %v2566
        %v2568 = vrot.slane %v1976, %v2567
        %v2569 = vmul.f32 %v2557, %v2564
        %v2570 = vmul.f32 %v2558, %v2568
        %v2571 = vmul.f32 %v2559, %v2564
        %v2572 = vmul.f32 %v2560, %v2568
        %v2573 = vadd.f32 %v2551, %v2569
        %v2574 = vadd.f32 %v2552, %v2570
        %v2575 = vadd.f32 %v2553, %v2571
        %v2576 = vadd.f32 %v2554, %v2572
        %v2577 = vld [vmem:[%s176 + $0x7f0] sm:$0xff]
        %v2578 = vld [vmem:[%s176 + $0x7f8] sm:$0xff]
        %v2579 = vunpack.c.l.bf16 %v2577
        %v2580 = vunpack.c.h.bf16 %v2577
        %v2581 = vunpack.c.l.bf16 %v2578
        %v2582 = vunpack.c.h.bf16 %v2578
        %v2583 = vlaneseq
        %v2584 = vshrl.u32 %v2583, 7
        %v2585 = vsub.s32 3, %v2584
        %v2586 = vrot.slane %v1975, %v2585
        %v2587 = vlaneseq
        %v2588 = vshrl.u32 %v2587, 7
        %v2589 = vsub.s32 3, %v2588
        %v2590 = vrot.slane %v1976, %v2589
        %v2591 = vmul.f32 %v2579, %v2586
        %v2592 = vmul.f32 %v2580, %v2590
        %v2593 = vmul.f32 %v2581, %v2586
        %v2594 = vmul.f32 %v2582, %v2590
        %v2595 = vadd.f32 %v2573, %v2591
        %v2596 = vadd.f32 %v2574, %v2592
        %v2597 = vadd.f32 %v2575, %v2593
        %v2598 = vadd.f32 %v2576, %v2594
        %v2599 = vld [vmem:[%s176 + $0x800] sm:$0xff]
        %v2600 = vld [vmem:[%s176 + $0x808] sm:$0xff]
        %v2601 = vunpack.c.l.bf16 %v2599
        %v2602 = vunpack.c.h.bf16 %v2599
        %v2603 = vunpack.c.l.bf16 %v2600
        %v2604 = vunpack.c.h.bf16 %v2600
        %v2605 = vlaneseq
        %v2606 = vshrl.u32 %v2605, 7
        %v2607 = vsub.s32 4, %v2606
        %v2608 = vrot.slane %v1975, %v2607
        %v2609 = vlaneseq
        %v2610 = vshrl.u32 %v2609, 7
        %v2611 = vsub.s32 4, %v2610
        %v2612 = vrot.slane %v1976, %v2611
        %v2613 = vmul.f32 %v2601, %v2608
        %v2614 = vmul.f32 %v2602, %v2612
        %v2615 = vmul.f32 %v2603, %v2608
        %v2616 = vmul.f32 %v2604, %v2612
        %v2617 = vadd.f32 %v2595, %v2613
        %v2618 = vadd.f32 %v2596, %v2614
        %v2619 = vadd.f32 %v2597, %v2615
        %v2620 = vadd.f32 %v2598, %v2616
        %v2621 = vld [vmem:[%s176 + $0x810] sm:$0xff]
        %v2622 = vld [vmem:[%s176 + $0x818] sm:$0xff]
        %v2623 = vunpack.c.l.bf16 %v2621
        %v2624 = vunpack.c.h.bf16 %v2621
        %v2625 = vunpack.c.l.bf16 %v2622
        %v2626 = vunpack.c.h.bf16 %v2622
        %v2627 = vlaneseq
        %v2628 = vshrl.u32 %v2627, 7
        %v2629 = vsub.s32 5, %v2628
        %v2630 = vrot.slane %v1975, %v2629
        %v2631 = vlaneseq
        %v2632 = vshrl.u32 %v2631, 7
        %v2633 = vsub.s32 5, %v2632
        %v2634 = vrot.slane %v1976, %v2633
        %v2635 = vmul.f32 %v2623, %v2630
        %v2636 = vmul.f32 %v2624, %v2634
        %v2637 = vmul.f32 %v2625, %v2630
        %v2638 = vmul.f32 %v2626, %v2634
        %v2639 = vadd.f32 %v2617, %v2635
        %v2640 = vadd.f32 %v2618, %v2636
        %v2641 = vadd.f32 %v2619, %v2637
        %v2642 = vadd.f32 %v2620, %v2638
        %v2643 = vld [vmem:[%s176 + $0x820] sm:$0xff]
        %v2644 = vld [vmem:[%s176 + $0x828] sm:$0xff]
        %v2645 = vunpack.c.l.bf16 %v2643
        %v2646 = vunpack.c.h.bf16 %v2643
        %v2647 = vunpack.c.l.bf16 %v2644
        %v2648 = vunpack.c.h.bf16 %v2644
        %v2649 = vlaneseq
        %v2650 = vshrl.u32 %v2649, 7
        %v2651 = vsub.s32 6, %v2650
        %v2652 = vrot.slane %v1975, %v2651
        %v2653 = vlaneseq
        %v2654 = vshrl.u32 %v2653, 7
        %v2655 = vsub.s32 6, %v2654
        %v2656 = vrot.slane %v1976, %v2655
        %v2657 = vmul.f32 %v2645, %v2652
        %v2658 = vmul.f32 %v2646, %v2656
        %v2659 = vmul.f32 %v2647, %v2652
        %v2660 = vmul.f32 %v2648, %v2656
        %v2661 = vadd.f32 %v2639, %v2657
        %v2662 = vadd.f32 %v2640, %v2658
        %v2663 = vadd.f32 %v2641, %v2659
        %v2664 = vadd.f32 %v2642, %v2660
        %v2665 = vld [vmem:[%s176 + $0x830] sm:$0xff]
        %v2666 = vld [vmem:[%s176 + $0x838] sm:$0xff]
        %v2667 = vunpack.c.l.bf16 %v2665
        %v2668 = vunpack.c.h.bf16 %v2665
        %v2669 = vunpack.c.l.bf16 %v2666
        %v2670 = vunpack.c.h.bf16 %v2666
        %v2671 = vlaneseq
        %v2672 = vshrl.u32 %v2671, 7
        %v2673 = vsub.s32 7, %v2672
        %v2674 = vrot.slane %v1975, %v2673
        %v2675 = vlaneseq
        %v2676 = vshrl.u32 %v2675, 7
        %v2677 = vsub.s32 7, %v2676
        %v2678 = vrot.slane %v1976, %v2677
        %v2679 = vmul.f32 %v2667, %v2674
        %v2680 = vmul.f32 %v2668, %v2678
        %v2681 = vmul.f32 %v2669, %v2674
        %v2682 = vmul.f32 %v2670, %v2678
        %v2683 = vadd.f32 %v2661, %v2679
        %v2684 = vadd.f32 %v2662, %v2680
        %v2685 = vadd.f32 %v2663, %v2681
        %v2686 = vadd.f32 %v2664, %v2682
        %2687 = vst [vmem:[%s201] sm:$0xff] %v2683
        %2688 = vst [vmem:[%s201 + $0x8] sm:$0xff] %v2684
        %2689 = vst [vmem:[%s201 + $0x10] sm:$0xff] %v2685
        %2690 = vst [vmem:[%s201 + $0x18] sm:$0xff] %v2686
        %s2691 = sand.u32 %s82, 1
        %s2692 = scalar_lea.sflag [#allocation4], %s2691
        %s2693 = sand.u32 %s82, 1
        %s2694 = smul.addr %s2693, 32
        %s2695 = scalar_lea.vmem [#allocation7], %s2694
        // Predicated region
        $region37: #{tpu_custom_call.1} parent=27 // pred_check
          %p2696 = pneg %p92
        $region38: #{tpu_custom_call.1} parent=27 // pred_check_branch
          %2698 = sbr.rel (%p2696) target = $region40
        $region39: #{tpu_custom_call.1} parent=27 // pred_region
          %s2699 = smul.u32 2, %s22
          %s2701 = ssub.s32 512, 512
          %2702 = vsyncadd %s2692, %s2701
          %s2703 = smul.addr %s2699, 128
          %s2704 = scalar_lea.hbm %s2, %s2703
          %s2705 = sshll.u32 %s2695, 4
          %s2706 = int_to_ptr.vmem [resolvable:$true] %s2705
          %2711 = dma.vmem_to_hbm [thread:$0]  %s2706, 512, %s2704, %s2692, 256, 512, 16
        $region40: #{tpu_custom_call.1} parent=27 // pred_fallthru
          _
      $region28: #{tpu_custom_call.1} parent=5 // pred_fallthru
        _
      %p2712 = scmp.le.s32.totalorder 2, %s17
      // Predicated region
      $region41: #{tpu_custom_call.1} parent=5 // pred_check
        %p2713 = pneg %p2712
      $region42: #{tpu_custom_call.1} parent=5 // pred_check_branch
        %2715 = sbr.rel (%p2713) target = $region44
      $region43: #{tpu_custom_call.1} parent=5 // pred_region
        %s2716 = ssub.s32 %s17, 2
        // Predicated region
        $region45: #{tpu_custom_call.1} parent=43 // pred_check
          %p2717 = pneg %p98
        $region46: #{tpu_custom_call.1} parent=43 // pred_check_branch
          %2719 = sbr.rel (%p2717) target = $region48
        $region47: #{tpu_custom_call.1} parent=43 // pred_region
          %s2720 = sand.u32 %s83, 1
          %s2721 = scalar_lea.sflag [#allocation4], %s2720
          %s2722 = sand.u32 %s83, 1
          %s2723 = smul.addr %s2722, 32
          %s2724 = scalar_lea.vmem [#allocation7], %s2723
          %2725 = dma.done %s2721, 512
        $region48: #{tpu_custom_call.1} parent=43 // pred_fallthru
          _
      $region44: #{tpu_custom_call.1} parent=5 // pred_fallthru
        _
    $region6: #{tpu_custom_call.1} parent=1 // loop_footer
      %s21 = sadd.s32 1, %s17
    $region7: #{tpu_custom_call.1} parent=1 // loop_footer_branch
      %16 = sbr.rel target = $region3
    $region8: #{tpu_custom_call.1} parent=1 // loop_exit
      _
    %2726 = vsyncpa [#allocation3], 1
    %s2727 = scalar_lea.sflag [#allocation3], 1
    %2728 = vsyncpa %s2727, 1
    %2729 = vsyncpa [#allocation6], 1
    %s2730 = scalar_lea.sflag [#allocation6], 1
    %2731 = vsyncpa %s2730, 1
    %2732 = vsyncpa [#allocation4], 1
    %s2733 = scalar_lea.sflag [#allocation4], 1
    %2734 = vsyncpa %s2733, 1

</llo_original>
